<compile_context>
chip_gen: v5e
topology: v5e:2x2
jax: 0.10.0
libtpu: 0.0.40
codegen_flags: <defaults>
</compile_context>

<pallas_src>
import math

import jax
import jax.numpy as jnp
from jax.experimental import pallas as pl
from jax.experimental.pallas import tpu as pltpu


def _round_up(x, m):
    return (x + m - 1) // m * m


def _cdiv(a, b):
    return -(-a // b)


# ---------------------------------------------------------------------------
# one-time probe: does pltpu.roll follow the jnp.roll convention on this build?
# (if not, or if it fails to lower, the kernel falls back to a slice+concat shift)
# ---------------------------------------------------------------------------
_ROLL_OK = None


def _pltpu_roll_ok():
    global _ROLL_OK
    if _ROLL_OK is None:
        def probe(x_ref, o_ref):
            o_ref[...] = pltpu.roll(x_ref[...], 29, 0)

        x = (jnp.arange(64 * 128) % 251).astype(jnp.bfloat16).reshape(64, 128)
        try:
            y = pl.pallas_call(
                probe, out_shape=jax.ShapeDtypeStruct((64, 128), jnp.bfloat16))(x)
            _ROLL_OK = bool(jnp.array_equal(y, jnp.roll(x, 29, axis=0)))
        except Exception:
            _ROLL_OK = False
    return _ROLL_OK


# ---------------------------------------------------------------------------
# fused Conv2d + folded-BN + ReLU kernel
#   one grid step = (one cout tile, one batch element, one output-H strip):
#     acc_ref += X_slab(kh, shifted by kw) @ W[kh, kw]   (bf16 x bf16 -> f32, MXU)
#     out      = relu(acc + bias)                        (f32 epilogue)
# ---------------------------------------------------------------------------
def _make_conv_bn_relu_kernel(k, dil, stride, th_out, wp_al, use_roll):
    m_rows = th_out * wp_al

    def shift_up(a, off):
        # Rows shifted towards index 0 by `off`; the trailing rows only feed output columns
        # >= w1 that the wrapper discards, so wrap-around / zero fill is harmless.
        if off == 0:
            return a
        if use_roll:
            return pltpu.roll(a, m_rows - off, 0)                # XLU rotate (sublane axis)
        pad = jnp.zeros((off,) + a.shape[1:], a.dtype)
        return jnp.concatenate([a[off:], pad], axis=0)           # fallback: slice + concat

    def kernel(x_ref, w_ref, b_ref, o_ref, acc_ref):
        cp = x_ref.shape[-1]
        tco = o_ref.shape[-1]
        first = True
        for kh in range(k):
            if stride == 1:
                slab = x_ref[0, kh * dil: kh * dil + th_out, :, :]
            else:
                # strided output rows selected directly from the halo'd input strip
                slab = x_ref[0, pl.ds(kh * dil, th_out, stride=stride), :, :]
            slab = slab.reshape(m_rows, cp)                      # layout no-op (wp_al % 16 == 0)
            for kw in range(k):
                win = shift_up(slab, kw * dil)
                contrib = jnp.dot(win, w_ref[kh, kw],
                                  preferred_element_type=jnp.float32)
                if first:
                    acc_ref[...] = contrib                       # init from first tap
                    first = False
                else:
                    acc_ref[...] += contrib                      # f32 VMEM accumulator
        y = jnp.maximum(acc_ref[...] + b_ref[...], 0.0)          # folded-BN bias + ReLU
        o_ref[...] = y.reshape(1, th_out, wp_al, tco).astype(o_ref.dtype)

    return kernel


def basic_conv2d(x_nchw, p, *, out_dtype=jnp.float32):
    """Fused Conv2d(bias=False)+BatchNorm2d(eval)+ReLU.  (N, Cin, H, W) -> (N, Cout, H', W').

    out_dtype=jnp.bfloat16 halves output VMEM/HBM traffic if the consumer accepts bf16.
    """
    k, stride, pad, dil = p["k"], p["stride"], p["pad"], p["dil"]
    cin, cout, cp, coutp = p["cin"], p["cout"], p["cp"], p["coutp"]
    n, _, h, w = x_nchw.shape

    hp, wp = h + 2 * pad, w + 2 * pad
    h1, w1 = hp - dil * (k - 1), wp - dil * (k - 1)      # stride-1 output extents
    assert h1 > 0 and w1 > 0
    h_conv = (h1 - 1) // stride + 1                      # strided output extents
    w_conv = (w1 - 1) // stride + 1
    wp_al = _round_up(wp, 16)                            # bf16 sublane packing
    halo = dil * (k - 1)

    tcout = 256 if coutp % 256 == 0 else 128             # fill 256x256 MXUs on v6e/v7x
    n_ct = coutp // tcout

    # Output-H strip size: keep per-step blocks bounded (~2 MiB f32 out / ~4 MiB bf16 in),
    # then rebalance so strips are even.
    t1 = max(8, (2 << 20) // (wp_al * tcout * 4))
    t2 = max(8, ((4 << 20) // (wp_al * cp * 2) - halo) // max(stride, 1))
    th = max(1, min(64, t1, t2, h_conv))
    n_strips = _cdiv(h_conv, th)
    th = _cdiv(h_conv, n_strips)
    th_in = (th - 1) * stride + halo + 1
    h_total = (n_strips - 1) * th * stride + th_in

    # NCHW -> NHWC bf16; one pad covers spatial halo + lane/sublane/channel alignment.
    # TODO(synk): keep activations NHWC + channel-padded between layers and fold this zero-pad
    #             into the kernel (halo DMA / masked edge taps) to drop the extra HBM pass.
    x = jnp.transpose(x_nchw, (0, 2, 3, 1)).astype(jnp.bfloat16)
    xp = jnp.pad(x, ((0, 0),
                     (pad, max(pad, h_total - h - pad)),
                     (pad, wp_al - w - pad),
                     (0, cp - cin)))[:, :h_total]
    if n_strips > 1:
        rows = (jnp.arange(n_strips) * (th * stride))[:, None] + jnp.arange(th_in)[None, :]
        xs = xp[:, rows].reshape(n * n_strips, th_in, wp_al, cp)   # halo'd strips
    else:
        xs = xp                                                     # (n, th_in, wp_al, cp)

    # Grid order: keep the larger of {weights, activations} resident across the inner axes.
    x_bytes = xs.size * 2
    w_bytes = p["w"].size * 2
    j_outer = (n_ct - 1) * x_bytes <= (n * n_strips - 1) * w_bytes
    if j_outer:
        grid = (n_ct, n, n_strips)
        xmap = lambda j, b, s: (b * n_strips + s, 0, 0, 0)
        wmap = lambda j, b, s: (0, 0, 0, j)
        bmap = lambda j, b, s: (0, j)
        omap = lambda j, b, s: (b, s, 0, j)
    else:
        grid = (n, n_strips, n_ct)
        xmap = lambda b, s, j: (b * n_strips + s, 0, 0, 0)
        wmap = lambda b, s, j: (0, 0, 0, j)
        bmap = lambda b, s, j: (0, j)
        omap = lambda b, s, j: (b, s, 0, j)

    out_itemsize = jnp.dtype(out_dtype).itemsize
    in_block = th_in * wp_al * cp * 2
    w_block = k * k * cp * tcout * 2
    out_block = th * wp_al * tcout * out_itemsize
    acc_bytes = th * wp_al * tcout * 4
    vmem_need = 2 * (in_block + w_block + out_block + tcout * 4) + acc_bytes
    vmem_limit = None
    if vmem_need > 12 * 1024 * 1024:                      # above the conservative v5e default
        vmem_limit = int(min(vmem_need + (4 << 20), 64 << 20))

    cost = pl.CostEstimate(
        flops=int(2 * n * n_strips * th * wp_al * k * k * cp * coutp),
        transcendentals=0,
        bytes_accessed=int(x_bytes + w_bytes
                           + n * n_strips * th * wp_al * coutp * out_itemsize))

    def run(use_roll):
        return pl.pallas_call(
            _make_conv_bn_relu_kernel(k, dil, stride, th, wp_al, use_roll),
            out_shape=jax.ShapeDtypeStruct((n, n_strips * th, wp_al, coutp), out_dtype),
            grid=grid,
            in_specs=[
                pl.BlockSpec((1, th_in, wp_al, cp), xmap),       # halo'd activation strip
                pl.BlockSpec((k, k, cp, tcout), wmap),           # all taps of cout tile j
                pl.BlockSpec((1, tcout), bmap),                  # folded-BN bias
            ],
            out_specs=pl.BlockSpec((1, th, wp_al, tcout), omap),
            scratch_shapes=[pltpu.VMEM((th * wp_al, tcout), jnp.float32)],
            compiler_params=pltpu.CompilerParams(
                dimension_semantics=("parallel", "parallel", "parallel"),
                vmem_limit_bytes=vmem_limit),
            cost_estimate=cost,
        )(xs, p["w"], p["b"])

    use_roll = _pltpu_roll_ok()
    try:
        out = run(use_roll)
    except Exception:
        if not use_roll:
            raise
        out = run(False)                                  # safe fallback (no pltpu.roll)

    # H is already strided inside the kernel; W is computed at stride 1 and subsampled here.
    # TODO(synk): strided-W window selection in-kernel to drop the stride-1 W over-compute.
    out = out[:, :h_conv, 0:w1:stride, :cout]
    return jnp.transpose(out, (0, 3, 1, 2)).astype(jnp.float32)   # NHWC -> NCHW


# ---------------------------------------------------------------------------
# deterministic parameter construction (PyTorch layouts; BN folded in eval mode)
# ---------------------------------------------------------------------------
def make_basic_conv2d_params(key, cin, cout, k, stride=1, padding=0, dilation=1, eps=1e-5):
    k1, k2, k3, k4, k5 = jax.random.split(key, 5)
    bound = 1.0 / math.sqrt(cin * k * k)
    w_oihw = jax.random.uniform(k1, (cout, cin, k, k), jnp.float32, -bound, bound)  # Conv2d weight
    gamma = jax.random.uniform(k2, (cout,), jnp.float32, 0.8, 1.2)
    beta = 0.05 * jax.random.normal(k3, (cout,), jnp.float32)
    rmean = 0.05 * jax.random.normal(k4, (cout,), jnp.float32)
    rvar = jax.random.uniform(k5, (cout,), jnp.float32, 0.8, 1.2)

    scale = gamma / jnp.sqrt(rvar + eps)          # BN folded (eval mode, running stats)
    bias = beta - rmean * scale

    # OIHW -> HWIO, fold scale into output columns, pad once, cast to bf16 once.
    w_hwio = jnp.transpose(w_oihw, (2, 3, 1, 0)) * scale[None, None, None, :]
    cp = _round_up(cin, 128)
    # TODO(synk): small-cin stem layers should pack the k*k taps (space-to-depth) into the
    #             contraction instead of zero-padding cin to 128 lanes.
    coutp = _round_up(cout, 128)
    w_pad = (jnp.zeros((k, k, cp, coutp), jnp.float32)
             .at[:, :, :cin, :cout].set(w_hwio).astype(jnp.bfloat16))
    b_pad = jnp.zeros((1, coutp), jnp.float32).at[0, :cout].set(bias)

    return dict(w=w_pad, b=b_pad, k=k, stride=stride, pad=padding, dil=dilation,
                cin=cin, cout=cout, cp=cp, coutp=coutp)


# ---------------------------------------------------------------------------
# pure-JAX reference (numerics matched to the kernel: bf16-quantized operands, f32 math)
# ---------------------------------------------------------------------------
def basic_conv2d_reference(x_nchw, p):
    k, stride, pad, dil = p["k"], p["stride"], p["pad"], p["dil"]
    x = jnp.transpose(x_nchw, (0, 2, 3, 1)).astype(jnp.bfloat16).astype(jnp.float32)
    w = p["w"][:, :, :p["cin"], :p["cout"]].astype(jnp.float32)     # scale already folded
    y = jax.lax.conv_general_dilated(
        x, w,
        window_strides=(stride, stride),
        padding=((pad, pad), (pad, pad)),
        rhs_dilation=(dil, dil),
        dimension_numbers=("NHWC", "HWIO", "NHWC"),
        precision=jax.lax.Precision.HIGHEST)
    y = jnp.maximum(y + p["b"][0, :p["cout"]], 0.0)
    return jnp.transpose(y, (0, 3, 1, 2))


# ---------------------------------------------------------------------------
if __name__ == "__main__":
    N, C_IN, H, W = 2, 4, 16, 16
    C_OUT, K, STRIDE, PAD, DIL = 32, 3, 1, 1, 1

    key = jax.random.PRNGKey(0)
    kx, kp = jax.random.split(key)
    x = jax.random.normal(kx, (N, C_IN, H, W), jnp.float32)
    params = make_basic_conv2d_params(kp, C_IN, C_OUT, K, stride=STRIDE, padding=PAD, dilation=DIL)

    y = basic_conv2d(x, params)
    y = jax.block_until_ready(y)

    h_out = (H + 2 * PAD - DIL * (K - 1) - 1) // STRIDE + 1
    w_out = (W + 2 * PAD - DIL * (K - 1) - 1) // STRIDE + 1
    assert y.shape == (N, C_OUT, h_out, w_out), y.shape
    assert bool(jnp.all(jnp.isfinite(y)))

    y_ref = jax.block_until_ready(basic_conv2d_reference(x, params))
    err = float(jnp.max(jnp.abs(y - y_ref)))
    assert err < 5e-2, f"max abs error vs reference: {err}"

    print("KERNEL_OK")
</pallas_src>

<mosaic_0001>
module attributes {stable_mosaic.version = 11 : i64} {
  func.func @probe(%arg0: memref<64x128xbf16, #tpu.memory_space<vmem>>, %arg1: memref<64x128xbf16, #tpu.memory_space<vmem>>) attributes {dimension_semantics = [], scalar_prefetch = 0 : i64, scratch_operands = 0 : i64, tpu.core_type = #tpu.core_type<tc>} {
    %c0 = arith.constant 0 : index
    %c0_0 = arith.constant 0 : index
    %0 = vector.load %arg0[%c0, %c0_0] : memref<64x128xbf16, #tpu.memory_space<vmem>>, vector<64x128xbf16>
    %c29_i32 = arith.constant 29 : i32
    %1 = tpu.dynamic_rotate %0 by %c29_i32 dim 0 : vector<64x128xbf16>, i32 -> vector<64x128xbf16>
    %c0_1 = arith.constant 0 : index
    %c0_2 = arith.constant 0 : index
    %2 = vector.load %arg1[%c0_1, %c0_2] : memref<64x128xbf16, #tpu.memory_space<vmem>>, vector<64x128xbf16>
    tpu.vector_store %arg1[%c0_1, %c0_2], %1 {strides = array<i32>} : memref<64x128xbf16, #tpu.memory_space<vmem>>, vector<64x128xbf16>,
    return
  }
}

module attributes {stable_mosaic.version = 11 : i64} {
  func.func @kernel(%arg0: i32, %arg1: i32, %arg2: i32, %arg3: memref<1x18x32x128xbf16, #tpu.memory_space<vmem>>, %arg4: memref<3x3x128x128xbf16, #tpu.memory_space<vmem>>, %arg5: memref<1x128xf32, #tpu.memory_space<vmem>>, %arg6: memref<1x16x32x128xf32, #tpu.memory_space<vmem>>, %arg7: memref<512x128xf32, #tpu.memory_space<vmem>>) attributes {dimension_semantics = [#tpu.dimension_semantics<parallel>, #tpu.dimension_semantics<parallel>, #tpu.dimension_semantics<parallel>], iteration_bounds = array<i64: 1, 2, 1>, scalar_prefetch = 0 : i64, scratch_operands = 1 : i64, tpu.core_type = #tpu.core_type<tc>, window_params = [{transform_indices = @transform_0, window_bounds = array<i64: 1, 18, 32, 128>}, {transform_indices = @transform_1, window_bounds = array<i64: 3, 3, 128, 128>}, {transform_indices = @transform_2, window_bounds = array<i64: 1, 128>}, {transform_indices = @transform_3, window_bounds = array<i64: 1, 16, 32, 128>}]} {
    %c0 = arith.constant 0 : index
    %c0_0 = arith.constant 0 : index
    %c0_1 = arith.constant 0 : index
    %c0_2 = arith.constant 0 : index
    %0 = vector.load %arg3[%c0, %c0_0, %c0_1, %c0_2] : memref<1x18x32x128xbf16, #tpu.memory_space<vmem>>, vector<1x16x32x128xbf16>
    %1 = vector.shape_cast %0 : vector<1x16x32x128xbf16> to vector<16x32x128xbf16>
    %2 = vector.shape_cast %1 : vector<16x32x128xbf16> to vector<512x128xbf16>
    %c0_3 = arith.constant 0 : index
    %c0_4 = arith.constant 0 : index
    %c0_5 = arith.constant 0 : index
    %c0_6 = arith.constant 0 : index
    %3 = vector.load %arg4[%c0_3, %c0_4, %c0_5, %c0_6] : memref<3x3x128x128xbf16, #tpu.memory_space<vmem>>, vector<1x1x128x128xbf16>
    %4 = vector.shape_cast %3 : vector<1x1x128x128xbf16> to vector<128x128xbf16>
    %cst = arith.constant dense<0.000000e+00> : vector<512x128xf32>
    %5 = tpu.matmul %2, %4, %cst {dimension_numbers = #tpu.dot_dimension_numbers<[1], [0], [0], [1], [0, 0, 1, 1], [], []>} : vector<512x128xbf16>, vector<128x128xbf16>, vector<512x128xf32> -> vector<512x128xf32>
    %c0_7 = arith.constant 0 : index
    %c0_8 = arith.constant 0 : index
    %6 = vector.load %arg7[%c0_7, %c0_8] : memref<512x128xf32, #tpu.memory_space<vmem>>, vector<512x128xf32>
    tpu.vector_store %arg7[%c0_7, %c0_8], %5 {strides = array<i32>} : memref<512x128xf32, #tpu.memory_space<vmem>>, vector<512x128xf32>,
    %cst_9 = arith.constant 0.000000e+00 : bf16
    %7 = vector.broadcast %cst_9 : bf16 to vector<1x128xbf16>
    %8 = vector.extract_strided_slice %2 {offsets = [1, 0], sizes = [511, 128], strides = [1, 1]} : vector<512x128xbf16> to vector<511x128xbf16>
    %9 = tpu.concatenate %8, %7 in 0 : vector<511x128xbf16>, vector<1x128xbf16> -> vector<512x128xbf16>
    %c0_10 = arith.constant 0 : index
    %c1 = arith.constant 1 : index
    %c0_11 = arith.constant 0 : index
    %c0_12 = arith.constant 0 : index
    %10 = vector.load %arg4[%c0_10, %c1, %c0_11, %c0_12] : memref<3x3x128x128xbf16, #tpu.memory_space<vmem>>, vector<1x1x128x128xbf16>
    %11 = vector.shape_cast %10 : vector<1x1x128x128xbf16> to vector<128x128xbf16>
    %cst_13 = arith.constant dense<0.000000e+00> : vector<512x128xf32>
    %12 = tpu.matmul %9, %11, %cst_13 {dimension_numbers = #tpu.dot_dimension_numbers<[1], [0], [0], [1], [0, 0, 1, 1], [], []>} : vector<512x128xbf16>, vector<128x128xbf16>, vector<512x128xf32> -> vector<512x128xf32>
    %c0_14 = arith.constant 0 : index
    %c0_15 = arith.constant 0 : index
    %13 = vector.load %arg7[%c0_14, %c0_15] : memref<512x128xf32, #tpu.memory_space<vmem>>, vector<512x128xf32>
    %14 = arith.addf %13, %12 : vector<512x128xf32>
    %c0_16 = arith.constant 0 : index
    %c0_17 = arith.constant 0 : index
    %15 = vector.load %arg7[%c0_16, %c0_17] : memref<512x128xf32, #tpu.memory_space<vmem>>, vector<512x128xf32>
    tpu.vector_store %arg7[%c0_16, %c0_17], %14 {strides = array<i32>} : memref<512x128xf32, #tpu.memory_space<vmem>>, vector<512x128xf32>,
    %cst_18 = arith.constant 0.000000e+00 : bf16
    %16 = vector.broadcast %cst_18 : bf16 to vector<2x128xbf16>
    %17 = vector.extract_strided_slice %2 {offsets = [2, 0], sizes = [510, 128], strides = [1, 1]} : vector<512x128xbf16> to vector<510x128xbf16>
    %18 = tpu.concatenate %17, %16 in 0 : vector<510x128xbf16>, vector<2x128xbf16> -> vector<512x128xbf16>
    %c0_19 = arith.constant 0 : index
    %c2 = arith.constant 2 : index
    %c0_20 = arith.constant 0 : index
    %c0_21 = arith.constant 0 : index
    %19 = vector.load %arg4[%c0_19, %c2, %c0_20, %c0_21] : memref<3x3x128x128xbf16, #tpu.memory_space<vmem>>, vector<1x1x128x128xbf16>
    %20 = vector.shape_cast %19 : vector<1x1x128x128xbf16> to vector<128x128xbf16>
    %cst_22 = arith.constant dense<0.000000e+00> : vector<512x128xf32>
    %21 = tpu.matmul %18, %20, %cst_22 {dimension_numbers = #tpu.dot_dimension_numbers<[1], [0], [0], [1], [0, 0, 1, 1], [], []>} : vector<512x128xbf16>, vector<128x128xbf16>, vector<512x128xf32> -> vector<512x128xf32>
    %c0_23 = arith.constant 0 : index
    %c0_24 = arith.constant 0 : index
    %22 = vector.load %arg7[%c0_23, %c0_24] : memref<512x128xf32, #tpu.memory_space<vmem>>, vector<512x128xf32>
    %23 = arith.addf %22, %21 : vector<512x128xf32>
    %c0_25 = arith.constant 0 : index
    %c0_26 = arith.constant 0 : index
    %24 = vector.load %arg7[%c0_25, %c0_26] : memref<512x128xf32, #tpu.memory_space<vmem>>, vector<512x128xf32>
    tpu.vector_store %arg7[%c0_25, %c0_26], %23 {strides = array<i32>} : memref<512x128xf32, #tpu.memory_space<vmem>>, vector<512x128xf32>,
    %c0_27 = arith.constant 0 : index
    %c1_28 = arith.constant 1 : index
    %c0_29 = arith.constant 0 : index
    %c0_30 = arith.constant 0 : index
    %25 = vector.load %arg3[%c0_27, %c1_28, %c0_29, %c0_30] : memref<1x18x32x128xbf16, #tpu.memory_space<vmem>>, vector<1x16x32x128xbf16>
    %26 = vector.shape_cast %25 : vector<1x16x32x128xbf16> to vector<16x32x128xbf16>
    %27 = vector.shape_cast %26 : vector<16x32x128xbf16> to vector<512x128xbf16>
    %c1_31 = arith.constant 1 : index
    %c0_32 = arith.constant 0 : index
    %c0_33 = arith.constant 0 : index
    %c0_34 = arith.constant 0 : index
    %28 = vector.load %arg4[%c1_31, %c0_32, %c0_33, %c0_34] : memref<3x3x128x128xbf16, #tpu.memory_space<vmem>>, vector<1x1x128x128xbf16>
    %29 = vector.shape_cast %28 : vector<1x1x128x128xbf16> to vector<128x128xbf16>
    %cst_35 = arith.constant dense<0.000000e+00> : vector<512x128xf32>
    %30 = tpu.matmul %27, %29, %cst_35 {dimension_numbers = #tpu.dot_dimension_numbers<[1], [0], [0], [1], [0, 0, 1, 1], [], []>} : vector<512x128xbf16>, vector<128x128xbf16>, vector<512x128xf32> -> vector<512x128xf32>
    %c0_36 = arith.constant 0 : index
    %c0_37 = arith.constant 0 : index
    %31 = vector.load %arg7[%c0_36, %c0_37] : memref<512x128xf32, #tpu.memory_space<vmem>>, vector<512x128xf32>
    %32 = arith.addf %31, %30 : vector<512x128xf32>
    %c0_38 = arith.constant 0 : index
    %c0_39 = arith.constant 0 : index
    %33 = vector.load %arg7[%c0_38, %c0_39] : memref<512x128xf32, #tpu.memory_space<vmem>>, vector<512x128xf32>
    tpu.vector_store %arg7[%c0_38, %c0_39], %32 {strides = array<i32>} : memref<512x128xf32, #tpu.memory_space<vmem>>, vector<512x128xf32>,
    %cst_40 = arith.constant 0.000000e+00 : bf16
    %34 = vector.broadcast %cst_40 : bf16 to vector<1x128xbf16>
    %35 = vector.extract_strided_slice %27 {offsets = [1, 0], sizes = [511, 128], strides = [1, 1]} : vector<512x128xbf16> to vector<511x128xbf16>
    %36 = tpu.concatenate %35, %34 in 0 : vector<511x128xbf16>, vector<1x128xbf16> -> vector<512x128xbf16>
    %c1_41 = arith.constant 1 : index
    %c1_42 = arith.constant 1 : index
    %c0_43 = arith.constant 0 : index
    %c0_44 = arith.constant 0 : index
    %37 = vector.load %arg4[%c1_41, %c1_42, %c0_43, %c0_44] : memref<3x3x128x128xbf16, #tpu.memory_space<vmem>>, vector<1x1x128x128xbf16>
    %38 = vector.shape_cast %37 : vector<1x1x128x128xbf16> to vector<128x128xbf16>
    %cst_45 = arith.constant dense<0.000000e+00> : vector<512x128xf32>
    %39 = tpu.matmul %36, %38, %cst_45 {dimension_numbers = #tpu.dot_dimension_numbers<[1], [0], [0], [1], [0, 0, 1, 1], [], []>} : vector<512x128xbf16>, vector<128x128xbf16>, vector<512x128xf32> -> vector<512x128xf32>
    %c0_46 = arith.constant 0 : index
    %c0_47 = arith.constant 0 : index
    %40 = vector.load %arg7[%c0_46, %c0_47] : memref<512x128xf32, #tpu.memory_space<vmem>>, vector<512x128xf32>
    %41 = arith.addf %40, %39 : vector<512x128xf32>
    %c0_48 = arith.constant 0 : index
    %c0_49 = arith.constant 0 : index
    %42 = vector.load %arg7[%c0_48, %c0_49] : memref<512x128xf32, #tpu.memory_space<vmem>>, vector<512x128xf32>
    tpu.vector_store %arg7[%c0_48, %c0_49], %41 {strides = array<i32>} : memref<512x128xf32, #tpu.memory_space<vmem>>, vector<512x128xf32>,
    %cst_50 = arith.constant 0.000000e+00 : bf16
    %43 = vector.broadcast %cst_50 : bf16 to vector<2x128xbf16>
    %44 = vector.extract_strided_slice %27 {offsets = [2, 0], sizes = [510, 128], strides = [1, 1]} : vector<512x128xbf16> to vector<510x128xbf16>
    %45 = tpu.concatenate %44, %43 in 0 : vector<510x128xbf16>, vector<2x128xbf16> -> vector<512x128xbf16>
    %c1_51 = arith.constant 1 : index
    %c2_52 = arith.constant 2 : index
    %c0_53 = arith.constant 0 : index
    %c0_54 = arith.constant 0 : index
    %46 = vector.load %arg4[%c1_51, %c2_52, %c0_53, %c0_54] : memref<3x3x128x128xbf16, #tpu.memory_space<vmem>>, vector<1x1x128x128xbf16>
    %47 = vector.shape_cast %46 : vector<1x1x128x128xbf16> to vector<128x128xbf16>
    %cst_55 = arith.constant dense<0.000000e+00> : vector<512x128xf32>
    %48 = tpu.matmul %45, %47, %cst_55 {dimension_numbers = #tpu.dot_dimension_numbers<[1], [0], [0], [1], [0, 0, 1, 1], [], []>} : vector<512x128xbf16>, vector<128x128xbf16>, vector<512x128xf32> -> vector<512x128xf32>
    %c0_56 = arith.constant 0 : index
    %c0_57 = arith.constant 0 : index
    %49 = vector.load %arg7[%c0_56, %c0_57] : memref<512x128xf32, #tpu.memory_space<vmem>>, vector<512x128xf32>
    %50 = arith.addf %49, %48 : vector<512x128xf32>
    %c0_58 = arith.constant 0 : index
    %c0_59 = arith.constant 0 : index
    %51 = vector.load %arg7[%c0_58, %c0_59] : memref<512x128xf32, #tpu.memory_space<vmem>>, vector<512x128xf32>
    tpu.vector_store %arg7[%c0_58, %c0_59], %50 {strides = array<i32>} : memref<512x128xf32, #tpu.memory_space<vmem>>, vector<512x128xf32>,
    %c0_60 = arith.constant 0 : index
    %c2_61 = arith.constant 2 : index
    %c0_62 = arith.constant 0 : index
    %c0_63 = arith.constant 0 : index
    %52 = vector.load %arg3[%c0_60, %c2_61, %c0_62, %c0_63] : memref<1x18x32x128xbf16, #tpu.memory_space<vmem>>, vector<1x16x32x128xbf16>
    %53 = vector.shape_cast %52 : vector<1x16x32x128xbf16> to vector<16x32x128xbf16>
    %54 = vector.shape_cast %53 : vector<16x32x128xbf16> to vector<512x128xbf16>
    %c2_64 = arith.constant 2 : index
    %c0_65 = arith.constant 0 : index
    %c0_66 = arith.constant 0 : index
    %c0_67 = arith.constant 0 : index
    %55 = vector.load %arg4[%c2_64, %c0_65, %c0_66, %c0_67] : memref<3x3x128x128xbf16, #tpu.memory_space<vmem>>, vector<1x1x128x128xbf16>
    %56 = vector.shape_cast %55 : vector<1x1x128x128xbf16> to vector<128x128xbf16>
    %cst_68 = arith.constant dense<0.000000e+00> : vector<512x128xf32>
    %57 = tpu.matmul %54, %56, %cst_68 {dimension_numbers = #tpu.dot_dimension_numbers<[1], [0], [0], [1], [0, 0, 1, 1], [], []>} : vector<512x128xbf16>, vector<128x128xbf16>, vector<512x128xf32> -> vector<512x128xf32>
    %c0_69 = arith.constant 0 : index
    %c0_70 = arith.constant 0 : index
    %58 = vector.load %arg7[%c0_69, %c0_70] : memref<512x128xf32, #tpu.memory_space<vmem>>, vector<512x128xf32>
    %59 = arith.addf %58, %57 : vector<512x128xf32>
    %c0_71 = arith.constant 0 : index
    %c0_72 = arith.constant 0 : index
    %60 = vector.load %arg7[%c0_71, %c0_72] : memref<512x128xf32, #tpu.memory_space<vmem>>, vector<512x128xf32>
    tpu.vector_store %arg7[%c0_71, %c0_72], %59 {strides = array<i32>} : memref<512x128xf32, #tpu.memory_space<vmem>>, vector<512x128xf32>,
    %cst_73 = arith.constant 0.000000e+00 : bf16
    %61 = vector.broadcast %cst_73 : bf16 to vector<1x128xbf16>
    %62 = vector.extract_strided_slice %54 {offsets = [1, 0], sizes = [511, 128], strides = [1, 1]} : vector<512x128xbf16> to vector<511x128xbf16>
    %63 = tpu.concatenate %62, %61 in 0 : vector<511x128xbf16>, vector<1x128xbf16> -> vector<512x128xbf16>
    %c2_74 = arith.constant 2 : index
    %c1_75 = arith.constant 1 : index
    %c0_76 = arith.constant 0 : index
    %c0_77 = arith.constant 0 : index
    %64 = vector.load %arg4[%c2_74, %c1_75, %c0_76, %c0_77] : memref<3x3x128x128xbf16, #tpu.memory_space<vmem>>, vector<1x1x128x128xbf16>
    %65 = vector.shape_cast %64 : vector<1x1x128x128xbf16> to vector<128x128xbf16>
    %cst_78 = arith.constant dense<0.000000e+00> : vector<512x128xf32>
    %66 = tpu.matmul %63, %65, %cst_78 {dimension_numbers = #tpu.dot_dimension_numbers<[1], [0], [0], [1], [0, 0, 1, 1], [], []>} : vector<512x128xbf16>, vector<128x128xbf16>, vector<512x128xf32> -> vector<512x128xf32>
    %c0_79 = arith.constant 0 : index
    %c0_80 = arith.constant 0 : index
    %67 = vector.load %arg7[%c0_79, %c0_80] : memref<512x128xf32, #tpu.memory_space<vmem>>, vector<512x128xf32>
    %68 = arith.addf %67, %66 : vector<512x128xf32>
    %c0_81 = arith.constant 0 : index
    %c0_82 = arith.constant 0 : index
    %69 = vector.load %arg7[%c0_81, %c0_82] : memref<512x128xf32, #tpu.memory_space<vmem>>, vector<512x128xf32>
    tpu.vector_store %arg7[%c0_81, %c0_82], %68 {strides = array<i32>} : memref<512x128xf32, #tpu.memory_space<vmem>>, vector<512x128xf32>,
    %cst_83 = arith.constant 0.000000e+00 : bf16
    %70 = vector.broadcast %cst_83 : bf16 to vector<2x128xbf16>
    %71 = vector.extract_strided_slice %54 {offsets = [2, 0], sizes = [510, 128], strides = [1, 1]} : vector<512x128xbf16> to vector<510x128xbf16>
    %72 = tpu.concatenate %71, %70 in 0 : vector<510x128xbf16>, vector<2x128xbf16> -> vector<512x128xbf16>
    %c2_84 = arith.constant 2 : index
    %c2_85 = arith.constant 2 : index
    %c0_86 = arith.constant 0 : index
    %c0_87 = arith.constant 0 : index
    %73 = vector.load %arg4[%c2_84, %c2_85, %c0_86, %c0_87] : memref<3x3x128x128xbf16, #tpu.memory_space<vmem>>, vector<1x1x128x128xbf16>
    %74 = vector.shape_cast %73 : vector<1x1x128x128xbf16> to vector<128x128xbf16>
    %cst_88 = arith.constant dense<0.000000e+00> : vector<512x128xf32>
    %75 = tpu.matmul %72, %74, %cst_88 {dimension_numbers = #tpu.dot_dimension_numbers<[1], [0], [0], [1], [0, 0, 1, 1], [], []>} : vector<512x128xbf16>, vector<128x128xbf16>, vector<512x128xf32> -> vector<512x128xf32>
    %c0_89 = arith.constant 0 : index
    %c0_90 = arith.constant 0 : index
    %76 = vector.load %arg7[%c0_89, %c0_90] : memref<512x128xf32, #tpu.memory_space<vmem>>, vector<512x128xf32>
    %77 = arith.addf %76, %75 : vector<512x128xf32>
    %c0_91 = arith.constant 0 : index
    %c0_92 = arith.constant 0 : index
    %78 = vector.load %arg7[%c0_91, %c0_92] : memref<512x128xf32, #tpu.memory_space<vmem>>, vector<512x128xf32>
    tpu.vector_store %arg7[%c0_91, %c0_92], %77 {strides = array<i32>} : memref<512x128xf32, #tpu.memory_space<vmem>>, vector<512x128xf32>,
    %c0_93 = arith.constant 0 : index
    %c0_94 = arith.constant 0 : index
    %79 = vector.load %arg7[%c0_93, %c0_94] : memref<512x128xf32, #tpu.memory_space<vmem>>, vector<512x128xf32>
    %c0_95 = arith.constant 0 : index
    %c0_96 = arith.constant 0 : index
    %80 = vector.load %arg5[%c0_95, %c0_96] : memref<1x128xf32, #tpu.memory_space<vmem>>, vector<1x128xf32>
    %81 = vector.broadcast %80 : vector<1x128xf32> to vector<512x128xf32>
    %82 = arith.addf %79, %81 : vector<512x128xf32>
    %cst_97 = arith.constant 0.000000e+00 : f32
    %83 = vector.broadcast %cst_97 : f32 to vector<512x128xf32>
    %84 = arith.maximumf %82, %83 : vector<512x128xf32>
    %85 = vector.shape_cast %84 : vector<512x128xf32> to vector<1x16x32x128xf32>
    %c0_98 = arith.constant 0 : index
    %c0_99 = arith.constant 0 : index
    %c0_100 = arith.constant 0 : index
    %c0_101 = arith.constant 0 : index
    %86 = vector.load %arg6[%c0_98, %c0_99, %c0_100, %c0_101] : memref<1x16x32x128xf32, #tpu.memory_space<vmem>>, vector<1x16x32x128xf32>
    tpu.vector_store %arg6[%c0_98, %c0_99, %c0_100, %c0_101], %85 {strides = array<i32>} : memref<1x16x32x128xf32, #tpu.memory_space<vmem>>, vector<1x16x32x128xf32>,
    return
  }
  func.func @transform_0(%arg0: i32, %arg1: i32, %arg2: i32) -> (i32, i32, i32, i32) {
    %c1_i32 = arith.constant 1 : i32
    %0 = arith.muli %arg1, %c1_i32 : i32
    %1 = arith.addi %0, %arg2 : i32
    %c0_i32 = arith.constant 0 : i32
    %c0_i32_0 = arith.constant 0 : i32
    %c0_i32_1 = arith.constant 0 : i32
    %c0_i32_2 = arith.constant 0 : i32
    return %1, %c0_i32, %c0_i32_0, %c0_i32_1 : i32, i32, i32, i32
  }
  func.func @transform_1(%arg0: i32, %arg1: i32, %arg2: i32) -> (i32, i32, i32, i32) {
    %c0_i32 = arith.constant 0 : i32
    %c0_i32_0 = arith.constant 0 : i32
    %c0_i32_1 = arith.constant 0 : i32
    %c0_i32_2 = arith.constant 0 : i32
    return %c0_i32, %c0_i32_0, %c0_i32_1, %arg0 : i32, i32, i32, i32
  }
  func.func @transform_2(%arg0: i32, %arg1: i32, %arg2: i32) -> (i32, i32) {
    %c0_i32 = arith.constant 0 : i32
    %c0_i32_0 = arith.constant 0 : i32
    return %c0_i32, %arg0 : i32, i32
  }
  func.func @transform_3(%arg0: i32, %arg1: i32, %arg2: i32) -> (i32, i32, i32, i32) {
    %c0_i32 = arith.constant 0 : i32
    %c0_i32_0 = arith.constant 0 : i32
    return %arg1, %arg2, %c0_i32, %arg0 : i32, i32, i32, i32
  }
}

</mosaic_0001>

<llo_original>
// kernel: tpu_custom_call.1
$region0: #{tpu_custom_call.1}
  #allocation0 [shape = 'u32[]', space=smem, size = 0x4, offset = 0x4, fixed_abs, tag = 'smem constant byte address 0x4 - core index']
  #allocation1 [shape = 'u32[72,128]{1,0:T(1,128)}', space=vmem, size = 0x9000, scoped, tag = 'internal scratch']
  #allocation2 [shape = 'f32[512,128]{1,0:T(8,128)}', space=vmem, size = 0x40000, scoped, tag = 'scratch operand']
  %s0 = inlined_call_operand.hbm [shape: bf16[2,18,32,128], index: 0, kind: input, shape index: {}]
  %s1 = inlined_call_operand.hbm [shape: bf16[3,3,128,128], index: 1, kind: input, shape index: {}]
  %s2 = inlined_call_operand.vmem [shape: f32[1,128], index: 2, kind: input, shape index: {}]
  %s3 = inlined_call_operand.hbm [shape: f32[2,16,32,128], index: 3, kind: output, shape index: {}]
  %s4 = sld [smem:[#allocation0]]
  $region53: #{tpu_custom_call.1} parent=0
    _
  %s6 = ssub.s32 1, %s4
  %s7 = scalar_select 0, %s6, %s4
  $region1: #{tpu_custom_call.1} parent=0
    #allocation3 [shape = 'u8[294912]{0}', space=vmem, size = 0x48000, scoped, tag = 'input window, operand 0']
    #allocation4 [shape = 's32[2]{0}', space=sflag, size = 0x8, scoped, tag = 'scoped memory for tpu_custom_call.1']
    #allocation5 [shape = 's32[2]{0}', space=sflag, size = 0x8, scoped, tag = 'scoped memory for tpu_custom_call.1']
    #allocation6 [shape = 'u8[294912]{0}', space=vmem, size = 0x48000, scoped, tag = 'input window, operand 1, single buffered']
    #allocation7 [shape = 's32[1]{0}', space=sflag, size = 0x4, scoped, tag = 'scoped memory for tpu_custom_call.1']
    #allocation8 [shape = 'u8[524288]{0}', space=vmem, size = 0x80000, scoped, tag = 'output window, operand 0']
    %8 = vsyncpa [#allocation4], 0
    %s9 = scalar_lea.sflag [#allocation4], 1
    %10 = vsyncpa %s9, 0
    %11 = vsyncpa [#allocation7], 0
    %12 = vsyncpa [#allocation5], 0
    %s13 = scalar_lea.sflag [#allocation5], 1
    %14 = vsyncpa %s13, 0
    loop: start=0, step=1, limit=4
    $region2: #{tpu_custom_call.1} parent=1 // loop_pre_header
      _
    $region3: #{tpu_custom_call.1} parent=1 // loop_header
      %s16 = sphi 0, %s20
      %p17 = scmp.ge.s32.totalorder %s16, 4
      %s23 = sphi 0, %s42
      %s24 = sphi 0, %s38
      %s25 = sphi 0, %s34
      %s26 = sphi 0, %s23
      %s27 = sphi 0, %s24
      %s28 = sphi 0, %s25
      %s29 = sphi 0, %s26
      %s30 = sphi 0, %s27
      %s31 = sphi 0, %s28
      %s47 = sphi 0, %s49
      %s50 = sphi 0, %s47
      %s51 = sphi 0, %s50
      %s67 = sphi 0, %s51
      %s73 = sphi 0, %s75
      %s76 = sphi 0, %s73
      %s77 = sphi 0, %s76
      %s93 = sphi 0, %s77
      %s99 = sphi 0, %s101
      %s102 = sphi 0, %s99
      %s103 = sphi 0, %s102
      %s119 = sphi 0, %s103
      %s129 = sphi 0, %s131
      %s132 = sphi 0, %s129
      %s133 = sphi 0, %s132
      %s149 = sphi 0, %s133
    $region4: #{tpu_custom_call.1} parent=1 // loop_header_branch
      %19 = sbr.rel (%p17) target = $region8
    $region5: #{tpu_custom_call.1} parent=1 // loop_body
      %s21 = ssub.s32 %s16, 1
      %s22 = ssub.s32 %s16, 2
      %s32 = sadd.s32 1, %s25
      %p33 = scmp.ge.s32.totalorder %s32, 1
      %s34 = scalar_select %p33, 0, %s32
      %s35 = sadd.s32 1, %s24
      %s36 = scalar_select %p33, %s35, %s24
      %p37 = scmp.ge.s32.totalorder %s36, 2
      %s38 = scalar_select %p37, 0, %s36
      %s39 = sadd.s32 1, %s23
      %s40 = scalar_select %p37, %s39, %s23
      %p41 = scmp.ge.s32.totalorder %s40, 1
      %s42 = scalar_select %p41, 0, %s40
      %s43 = sadd.s32 %s24, %s25
      %s44 = sadd.s32 %s38, %s34
      %s45 = ssub.s32 %s43, %s44
      %p46 = scmp.eq.s32.totalorder %s45, 0
      %s48 = sadd.s32 %s47, 1
      %s49 = scalar_select %p46, %s47, %s48
      %p52 = pneg %p46
      %p53 = scmp.eq.s32.totalorder %s16, 1
      %p54 = por %p52, %p53
      %p55 = scmp.ne.s32.totalorder %s47, %s50
      %p56 = scmp.eq.s32.totalorder %s16, 0
      %p57 = por %p55, %p56
      %p58 = scmp.ne.s32.totalorder %s47, %s50
      %p59 = scmp.eq.s32.totalorder %s21, 1
      %p60 = por %p58, %p59
      %p61 = scmp.ne.s32.totalorder %s50, %s51
      %p62 = scmp.eq.s32.totalorder %s21, 0
      %p63 = por %p61, %p62
      %p64 = scmp.ne.s32.totalorder %s50, %s51
      %p65 = scmp.eq.s32.totalorder %s22, 1
      %p66 = por %p64, %p65
      %p68 = scmp.ne.s32.totalorder %s51, %s67
      %p69 = scmp.eq.s32.totalorder %s22, 0
      %p70 = por %p68, %p69
      %s71 = ssub.s32 %s23, %s42
      %p72 = scmp.eq.s32.totalorder %s71, 0
      %s74 = sadd.s32 %s73, 1
      %s75 = scalar_select %p72, %s73, %s74
      %p78 = pneg %p72
      %p79 = scmp.eq.s32.totalorder %s16, 1
      %p80 = por %p78, %p79
      %p81 = scmp.ne.s32.totalorder %s73, %s76
      %p82 = scmp.eq.s32.totalorder %s16, 0
      %p83 = por %p81, %p82
      %p84 = scmp.ne.s32.totalorder %s73, %s76
      %p85 = scmp.eq.s32.totalorder %s21, 1
      %p86 = por %p84, %p85
      %p87 = scmp.ne.s32.totalorder %s76, %s77
      %p88 = scmp.eq.s32.totalorder %s21, 0
      %p89 = por %p87, %p88
      %p90 = scmp.ne.s32.totalorder %s76, %s77
      %p91 = scmp.eq.s32.totalorder %s22, 1
      %p92 = por %p90, %p91
      %p94 = scmp.ne.s32.totalorder %s77, %s93
      %p95 = scmp.eq.s32.totalorder %s22, 0
      %p96 = por %p94, %p95
      %s97 = ssub.s32 %s23, %s42
      %p98 = scmp.eq.s32.totalorder %s97, 0
      %s100 = sadd.s32 %s99, 1
      %s101 = scalar_select %p98, %s99, %s100
      %p104 = pneg %p98
      %p105 = scmp.eq.s32.totalorder %s16, 1
      %p106 = por %p104, %p105
      %p107 = scmp.ne.s32.totalorder %s99, %s102
      %p108 = scmp.eq.s32.totalorder %s16, 0
      %p109 = por %p107, %p108
      %p110 = scmp.ne.s32.totalorder %s99, %s102
      %p111 = scmp.eq.s32.totalorder %s21, 1
      %p112 = por %p110, %p111
      %p113 = scmp.ne.s32.totalorder %s102, %s103
      %p114 = scmp.eq.s32.totalorder %s21, 0
      %p115 = por %p113, %p114
      %p116 = scmp.ne.s32.totalorder %s102, %s103
      %p117 = scmp.eq.s32.totalorder %s22, 1
      %p118 = por %p116, %p117
      %p120 = scmp.ne.s32.totalorder %s103, %s119
      %p121 = scmp.eq.s32.totalorder %s22, 0
      %p122 = por %p120, %p121
      %s123 = ssub.s32 %s24, %s38
      %s124 = ssub.s32 %s25, %s34
      %s125 = sor.u32 %s123, %s124
      %s126 = ssub.s32 %s23, %s42
      %s127 = sor.u32 %s125, %s126
      %p128 = scmp.eq.s32.totalorder %s127, 0
      %s130 = sadd.s32 %s129, 1
      %s131 = scalar_select %p128, %s129, %s130
      %p134 = pneg %p128
      %p135 = scmp.eq.s32.totalorder %s16, 1
      %p136 = por %p134, %p135
      %p137 = scmp.ne.s32.totalorder %s129, %s132
      %p138 = scmp.eq.s32.totalorder %s16, 0
      %p139 = por %p137, %p138
      %p140 = scmp.ne.s32.totalorder %s129, %s132
      %p141 = scmp.eq.s32.totalorder %s21, 1
      %p142 = por %p140, %p141
      %p143 = scmp.ne.s32.totalorder %s132, %s133
      %p144 = scmp.eq.s32.totalorder %s21, 0
      %p145 = por %p143, %p144
      %p146 = scmp.ne.s32.totalorder %s132, %s133
      %p147 = scmp.eq.s32.totalorder %s22, 1
      %p148 = por %p146, %p147
      %p150 = scmp.ne.s32.totalorder %s133, %s149
      %p151 = scmp.eq.s32.totalorder %s22, 0
      %p152 = por %p150, %p151
      %p153 = scmp.le.s32.totalorder 1, %s16
      %p154 = scmp.lt.s32.totalorder %s16, 3
      %p155 = pnand %p153, %p154
      %p156 = pneg %p155
      // Predicated region
      $region9: #{tpu_custom_call.1} parent=5 // pred_check
        _
      $region10: #{tpu_custom_call.1} parent=5 // pred_check_branch
        %158 = sbr.rel (%p155) target = $region12
      $region11: #{tpu_custom_call.1} parent=5 // pred_region
        %s159 = ssub.s32 %s16, 1
        // Predicated region
        $region13: #{tpu_custom_call.1} parent=11 // pred_check
          %p160 = pneg %p89
        $region14: #{tpu_custom_call.1} parent=11 // pred_check_branch
          %162 = sbr.rel (%p160) target = $region16
        $region15: #{tpu_custom_call.1} parent=11 // pred_region
          %164 = vsyncadd [#allocation7], 0
          %s165 = smul.addr %s26, 4
          %s166 = scalar_lea.hbm %s1, %s165
          %s167 = sshll.u32 %s166, 4
          %s168 = int_to_ptr.hbm [resolvable:$true] %s167
          %s169 = sshll.u32 [#allocation6], 4
          %s170 = int_to_ptr.vmem [resolvable:$true] %s169
          %175 = dma.hbm_to_vmem [thread:$0]  %s168, 9216, %s170, [#allocation7], 64, 64, 4
        $region16: #{tpu_custom_call.1} parent=11 // pred_fallthru
          _
        // Predicated region
        $region17: #{tpu_custom_call.1} parent=11 // pred_check
          %p176 = pneg %p115
        $region18: #{tpu_custom_call.1} parent=11 // pred_check_branch
          %178 = sbr.rel (%p176) target = $region20
        $region19: #{tpu_custom_call.1} parent=11 // pred_region
          %p179 = scmp.lt.s32.totalorder %s26, 0
          %s180 = scalar_select %p179, %s26, 0
          %s181 = scalar_lea.vmem %s2, %s180
        $region20: #{tpu_custom_call.1} parent=11 // pred_fallthru
          _
      $region12: #{tpu_custom_call.1} parent=5 // pred_fallthru
        _
      %p182 = scmp.lt.s32.totalorder %s16, 2
      // Predicated region
      $region21: #{tpu_custom_call.1} parent=5 // pred_check
        %p183 = pneg %p182
      $region22: #{tpu_custom_call.1} parent=5 // pred_check_branch
        %185 = sbr.rel (%p183) target = $region24
      $region23: #{tpu_custom_call.1} parent=5 // pred_region
        // Predicated region
        $region25: #{tpu_custom_call.1} parent=23 // pred_check
          %p186 = pneg %p57
        $region26: #{tpu_custom_call.1} parent=23 // pred_check_branch
          %188 = sbr.rel (%p186) target = $region28
        $region27: #{tpu_custom_call.1} parent=23 // pred_region
          %s189 = sand.u32 %s47, 1
          %s190 = scalar_lea.sflag [#allocation4], %s189
          %s191 = sand.u32 %s47, 1
          %s192 = smul.addr %s191, 288
          %s193 = scalar_lea.vmem [#allocation3], %s192
          %s194 = sadd.s32 %s24, %s25
          %196 = vsyncadd %s190, 0
          %s197 = smul.addr %s194, 72
          %s198 = smul.addr %s197, 4
          %s199 = scalar_lea.hbm %s0, %s198
          %s200 = sshll.u32 %s199, 4
          %s201 = int_to_ptr.hbm [resolvable:$true] %s200
          %s202 = sshll.u32 %s193, 4
          %s203 = int_to_ptr.vmem [resolvable:$true] %s202
          %208 = dma.hbm_to_vmem [thread:$0]  %s201, 4608, %s203, %s190, 64, 64, 4
        $region28: #{tpu_custom_call.1} parent=23 // pred_fallthru
          _
      $region24: #{tpu_custom_call.1} parent=5 // pred_fallthru
        _
      %p209 = scmp.le.s32.totalorder 1, %s16
      %p210 = scmp.lt.s32.totalorder %s16, 3
      %p211 = pnand %p209, %p210
      %p212 = pneg %p211
      // Predicated region
      $region29: #{tpu_custom_call.1} parent=5 // pred_check
        _
      $region30: #{tpu_custom_call.1} parent=5 // pred_check_branch
        %214 = sbr.rel (%p211) target = $region32
      $region31: #{tpu_custom_call.1} parent=5 // pred_region
        %s215 = ssub.s32 %s16, 1
        %s216 = sand.u32 %s50, 1
        %s217 = scalar_lea.sflag [#allocation4], %s216
        %s218 = sand.u32 %s50, 1
        %s219 = smul.addr %s218, 288
        %s220 = scalar_lea.vmem [#allocation3], %s219
        // Predicated region
        $region33: #{tpu_custom_call.1} parent=31 // pred_check
          %p221 = pneg %p63
        $region34: #{tpu_custom_call.1} parent=31 // pred_check_branch
          %223 = sbr.rel (%p221) target = $region36
        $region35: #{tpu_custom_call.1} parent=31 // pred_region
          %225 = dma.done %s217, 4608
        $region36: #{tpu_custom_call.1} parent=31 // pred_fallthru
          _
        // Predicated region
        $region37: #{tpu_custom_call.1} parent=31 // pred_check
          %p226 = pneg %p89
        $region38: #{tpu_custom_call.1} parent=31 // pred_check_branch
          %228 = sbr.rel (%p226) target = $region40
        $region39: #{tpu_custom_call.1} parent=31 // pred_region
          %230 = dma.done [#allocation7], 9216
        $region40: #{tpu_custom_call.1} parent=31 // pred_fallthru
          _
        %s231 = sand.u32 %s50, 1
        %s232 = scalar_lea.sflag [#allocation4], %s231
        %s233 = sand.u32 %s50, 1
        %s234 = smul.addr %s233, 288
        %s235 = scalar_lea.vmem [#allocation3], %s234
        %p236 = pneg %p63
        %p237 = pneg %p60
        %p238 = pneg %p89
        %p239 = pneg %p86
        %p240 = scmp.lt.s32.totalorder %s26, 0
        %s241 = scalar_select %p240, %s26, 0
        %s242 = scalar_lea.vmem %s2, %s241
        %p243 = pneg %p115
        %p244 = pneg %p112
        %p245 = pneg %p145
        %p246 = pneg %p142
        %s247 = sand.u32 %s132, 1
        %s248 = scalar_lea.sflag [#allocation5], %s247
        %s249 = sand.u32 %s132, 1
        %s250 = smul.addr %s249, 512
        %s251 = scalar_lea.vmem [#allocation8], %s250
        %s252 = sadd.s32 %s27, %s28
        %p253 = scmp.lt.s32.totalorder %s26, 0
        %s254 = scalar_select %p253, %s26, 0
        %s255 = scalar_lea.vmem %s2, %s254
        %s256 = smul.u32 16, %s28
        %v258 = vld [vmem:[%s220] sm:$0xf]
        %v259 = vld [vmem:[%s220 + $0x4] sm:$0xf]
        %v260 = vld [vmem:[%s220 + $0x8] sm:$0xf]
        %v261 = vld [vmem:[%s220 + $0xc] sm:$0xf]
        %v262 = vld [vmem:[%s220 + $0x10] sm:$0xf]
        %v263 = vld [vmem:[%s220 + $0x14] sm:$0xf]
        %v264 = vld [vmem:[%s220 + $0x18] sm:$0xf]
        %v265 = vld [vmem:[%s220 + $0x1c] sm:$0xf]
        %v266 = vld [vmem:[%s220 + $0x20] sm:$0xf]
        %v267 = vld [vmem:[%s220 + $0x24] sm:$0xf]
        %v268 = vld [vmem:[%s220 + $0x28] sm:$0xf]
        %v269 = vld [vmem:[%s220 + $0x2c] sm:$0xf]
        %v270 = vld [vmem:[%s220 + $0x30] sm:$0xf]
        %v271 = vld [vmem:[%s220 + $0x34] sm:$0xf]
        %v272 = vld [vmem:[%s220 + $0x38] sm:$0xf]
        %v273 = vld [vmem:[%s220 + $0x3c] sm:$0xf]
        %v274 = vld [vmem:[%s220 + $0x40] sm:$0xf]
        %v275 = vld [vmem:[%s220 + $0x44] sm:$0xf]
        %v276 = vld [vmem:[%s220 + $0x48] sm:$0xf]
        %v277 = vld [vmem:[%s220 + $0x4c] sm:$0xf]
        %v278 = vld [vmem:[%s220 + $0x50] sm:$0xf]
        %v279 = vld [vmem:[%s220 + $0x54] sm:$0xf]
        %v280 = vld [vmem:[%s220 + $0x58] sm:$0xf]
        %v281 = vld [vmem:[%s220 + $0x5c] sm:$0xf]
        %v282 = vld [vmem:[%s220 + $0x60] sm:$0xf]
        %v283 = vld [vmem:[%s220 + $0x64] sm:$0xf]
        %v284 = vld [vmem:[%s220 + $0x68] sm:$0xf]
        %v285 = vld [vmem:[%s220 + $0x6c] sm:$0xf]
        %v286 = vld [vmem:[%s220 + $0x70] sm:$0xf]
        %v287 = vld [vmem:[%s220 + $0x74] sm:$0xf]
        %v288 = vld [vmem:[%s220 + $0x78] sm:$0xf]
        %v289 = vld [vmem:[%s220 + $0x7c] sm:$0xf]
        %v290 = vld [vmem:[%s220 + $0x80] sm:$0xf]
        %v291 = vld [vmem:[%s220 + $0x84] sm:$0xf]
        %v292 = vld [vmem:[%s220 + $0x88] sm:$0xf]
        %v293 = vld [vmem:[%s220 + $0x8c] sm:$0xf]
        %v294 = vld [vmem:[%s220 + $0x90] sm:$0xf]
        %v295 = vld [vmem:[%s220 + $0x94] sm:$0xf]
        %v296 = vld [vmem:[%s220 + $0x98] sm:$0xf]
        %v297 = vld [vmem:[%s220 + $0x9c] sm:$0xf]
        %v298 = vld [vmem:[%s220 + $0xa0] sm:$0xf]
        %v299 = vld [vmem:[%s220 + $0xa4] sm:$0xf]
        %v300 = vld [vmem:[%s220 + $0xa8] sm:$0xf]
        %v301 = vld [vmem:[%s220 + $0xac] sm:$0xf]
        %v302 = vld [vmem:[%s220 + $0xb0] sm:$0xf]
        %v303 = vld [vmem:[%s220 + $0xb4] sm:$0xf]
        %v304 = vld [vmem:[%s220 + $0xb8] sm:$0xf]
        %v305 = vld [vmem:[%s220 + $0xbc] sm:$0xf]
        %v306 = vld [vmem:[%s220 + $0xc0] sm:$0xf]
        %v307 = vld [vmem:[%s220 + $0xc4] sm:$0xf]
        %v308 = vld [vmem:[%s220 + $0xc8] sm:$0xf]
        %v309 = vld [vmem:[%s220 + $0xcc] sm:$0xf]
        %v310 = vld [vmem:[%s220 + $0xd0] sm:$0xf]
        %v311 = vld [vmem:[%s220 + $0xd4] sm:$0xf]
        %v312 = vld [vmem:[%s220 + $0xd8] sm:$0xf]
        %v313 = vld [vmem:[%s220 + $0xdc] sm:$0xf]
        %v314 = vld [vmem:[%s220 + $0xe0] sm:$0xf]
        %v315 = vld [vmem:[%s220 + $0xe4] sm:$0xf]
        %v316 = vld [vmem:[%s220 + $0xe8] sm:$0xf]
        %v317 = vld [vmem:[%s220 + $0xec] sm:$0xf]
        %v318 = vld [vmem:[%s220 + $0xf0] sm:$0xf]
        %v319 = vld [vmem:[%s220 + $0xf4] sm:$0xf]
        %v320 = vld [vmem:[%s220 + $0xf8] sm:$0xf]
        %v321 = vld [vmem:[%s220 + $0xfc] sm:$0xf]
        %v322 = vld [vmem:[#allocation6] sm:$0xf]
        %v323 = vld [vmem:[#allocation6 + $0x4] sm:$0xf]
        %v324 = vld [vmem:[#allocation6 + $0x8] sm:$0xf]
        %v325 = vld [vmem:[#allocation6 + $0xc] sm:$0xf]
        %v326 = vld [vmem:[#allocation6 + $0x10] sm:$0xf]
        %v327 = vld [vmem:[#allocation6 + $0x14] sm:$0xf]
        %v328 = vld [vmem:[#allocation6 + $0x18] sm:$0xf]
        %v329 = vld [vmem:[#allocation6 + $0x1c] sm:$0xf]
        %v330 = vld [vmem:[#allocation6 + $0x20] sm:$0xf]
        %v331 = vld [vmem:[#allocation6 + $0x24] sm:$0xf]
        %v332 = vld [vmem:[#allocation6 + $0x28] sm:$0xf]
        %v333 = vld [vmem:[#allocation6 + $0x2c] sm:$0xf]
        %v334 = vld [vmem:[#allocation6 + $0x30] sm:$0xf]
        %v335 = vld [vmem:[#allocation6 + $0x34] sm:$0xf]
        %v336 = vld [vmem:[#allocation6 + $0x38] sm:$0xf]
        %v337 = vld [vmem:[#allocation6 + $0x3c] sm:$0xf]
        %v402 = vunpack.c.l.b16 %v258
        %v403 = vunpack.c.l.b16 %v259
        %v404 = vunpack.c.l.b16 %v260
        %v405 = vunpack.c.l.b16 %v261
        %v406 = vunpack.c.l.b16 %v262
        %v407 = vunpack.c.l.b16 %v263
        %v408 = vunpack.c.l.b16 %v264
        %v409 = vunpack.c.l.b16 %v265
        %v410 = vunpack.c.l.b16 %v266
        %v411 = vunpack.c.l.b16 %v267
        %v412 = vunpack.c.l.b16 %v268
        %v413 = vunpack.c.l.b16 %v269
        %v414 = vunpack.c.l.b16 %v270
        %v415 = vunpack.c.l.b16 %v271
        %v416 = vunpack.c.l.b16 %v272
        %v417 = vunpack.c.l.b16 %v273
        %v418 = vunpack.c.l.b16 %v274
        %v419 = vunpack.c.l.b16 %v275
        %v420 = vunpack.c.l.b16 %v276
        %v421 = vunpack.c.l.b16 %v277
        %v422 = vunpack.c.l.b16 %v278
        %v423 = vunpack.c.l.b16 %v279
        %v424 = vunpack.c.l.b16 %v280
        %v425 = vunpack.c.l.b16 %v281
        %v426 = vunpack.c.l.b16 %v282
        %v427 = vunpack.c.l.b16 %v283
        %v428 = vunpack.c.l.b16 %v284
        %v429 = vunpack.c.l.b16 %v285
        %v430 = vunpack.c.l.b16 %v286
        %v431 = vunpack.c.l.b16 %v287
        %v432 = vunpack.c.l.b16 %v288
        %v433 = vunpack.c.l.b16 %v289
        %v434 = vunpack.c.l.b16 %v290
        %v435 = vunpack.c.l.b16 %v291
        %v436 = vunpack.c.l.b16 %v292
        %v437 = vunpack.c.l.b16 %v293
        %v438 = vunpack.c.l.b16 %v294
        %v439 = vunpack.c.l.b16 %v295
        %v440 = vunpack.c.l.b16 %v296
        %v441 = vunpack.c.l.b16 %v297
        %v442 = vunpack.c.l.b16 %v298
        %v443 = vunpack.c.l.b16 %v299
        %v444 = vunpack.c.l.b16 %v300
        %v445 = vunpack.c.l.b16 %v301
        %v446 = vunpack.c.l.b16 %v302
        %v447 = vunpack.c.l.b16 %v303
        %v448 = vunpack.c.l.b16 %v304
        %v449 = vunpack.c.l.b16 %v305
        %v450 = vunpack.c.l.b16 %v306
        %v451 = vunpack.c.l.b16 %v307
        %v452 = vunpack.c.l.b16 %v308
        %v453 = vunpack.c.l.b16 %v309
        %v454 = vunpack.c.l.b16 %v310
        %v455 = vunpack.c.l.b16 %v311
        %v456 = vunpack.c.l.b16 %v312
        %v457 = vunpack.c.l.b16 %v313
        %v458 = vunpack.c.l.b16 %v314
        %v459 = vunpack.c.l.b16 %v315
        %v460 = vunpack.c.l.b16 %v316
        %v461 = vunpack.c.l.b16 %v317
        %v462 = vunpack.c.l.b16 %v318
        %v463 = vunpack.c.l.b16 %v319
        %v464 = vunpack.c.l.b16 %v320
        %v465 = vunpack.c.l.b16 %v321
        %v466 = vpack.c.b16 %v403, %v402
        %v467 = vpack.c.b16 %v405, %v404
        %v468 = vpack.c.b16 %v407, %v406
        %v469 = vpack.c.b16 %v409, %v408
        %v470 = vpack.c.b16 %v411, %v410
        %v471 = vpack.c.b16 %v413, %v412
        %v472 = vpack.c.b16 %v415, %v414
        %v473 = vpack.c.b16 %v417, %v416
        %v474 = vpack.c.b16 %v419, %v418
        %v475 = vpack.c.b16 %v421, %v420
        %v476 = vpack.c.b16 %v423, %v422
        %v477 = vpack.c.b16 %v425, %v424
        %v478 = vpack.c.b16 %v427, %v426
        %v479 = vpack.c.b16 %v429, %v428
        %v480 = vpack.c.b16 %v431, %v430
        %v481 = vpack.c.b16 %v433, %v432
        %v482 = vpack.c.b16 %v435, %v434
        %v483 = vpack.c.b16 %v437, %v436
        %v484 = vpack.c.b16 %v439, %v438
        %v485 = vpack.c.b16 %v441, %v440
        %v486 = vpack.c.b16 %v443, %v442
        %v487 = vpack.c.b16 %v445, %v444
        %v488 = vpack.c.b16 %v447, %v446
        %v489 = vpack.c.b16 %v449, %v448
        %v490 = vpack.c.b16 %v451, %v450
        %v491 = vpack.c.b16 %v453, %v452
        %v492 = vpack.c.b16 %v455, %v454
        %v493 = vpack.c.b16 %v457, %v456
        %v494 = vpack.c.b16 %v459, %v458
        %v495 = vpack.c.b16 %v461, %v460
        %v496 = vpack.c.b16 %v463, %v462
        %v497 = vpack.c.b16 %v465, %v464
        %v546 = vunpack.c.l.b16 %v322
        %v547 = vunpack.c.l.b16 %v323
        %v548 = vunpack.c.l.b16 %v324
        %v549 = vunpack.c.l.b16 %v325
        %v550 = vunpack.c.l.b16 %v326
        %v551 = vunpack.c.l.b16 %v327
        %v552 = vunpack.c.l.b16 %v328
        %v553 = vunpack.c.l.b16 %v329
        %v554 = vunpack.c.l.b16 %v330
        %v555 = vunpack.c.l.b16 %v331
        %v556 = vunpack.c.l.b16 %v332
        %v557 = vunpack.c.l.b16 %v333
        %v558 = vunpack.c.l.b16 %v334
        %v559 = vunpack.c.l.b16 %v335
        %v560 = vunpack.c.l.b16 %v336
        %v561 = vunpack.c.l.b16 %v337
        %v562 = vpack.c.b16 %v547, %v546
        %v563 = vpack.c.b16 %v549, %v548
        %v564 = vpack.c.b16 %v551, %v550
        %v565 = vpack.c.b16 %v553, %v552
        %v566 = vpack.c.b16 %v555, %v554
        %v567 = vpack.c.b16 %v557, %v556
        %v568 = vpack.c.b16 %v559, %v558
        %v569 = vpack.c.b16 %v561, %v560
        %578 = vmatpush.bf16.msra.mxu0 %v569
        %579 = vmatpush.bf16.msra.mxu0 %v568
        %580 = vmatpush.bf16.msra.mxu0 %v567
        %581 = vmatpush.bf16.msra.mxu0 %v566
        %582 = vmatpush.bf16.msra.mxu0 %v565
        %583 = vmatpush.bf16.msra.mxu0 %v564
        %584 = vmatpush.bf16.msra.mxu0 %v563
        %585 = vmatpush.bf16.msra.mxu0 %v562
        %586 = vmatmul.bf16.gmra.mxu0 %v466
        %v587 = vpop.f32.mrf.mxu0
        %v588 = vadd.f32 0.0, %v587
        %v589 = vpop.f32.mrf.mxu0
        %v590 = vadd.f32 0.0, %v589
        %591 = vmatmul.bf16.gmra.mxu0 %v467
        %v592 = vpop.f32.mrf.mxu0
        %v593 = vadd.f32 0.0, %v592
        %v594 = vpop.f32.mrf.mxu0
        %v595 = vadd.f32 0.0, %v594
        %596 = vmatmul.bf16.gmra.mxu0 %v468
        %v597 = vpop.f32.mrf.mxu0
        %v598 = vadd.f32 0.0, %v597
        %v599 = vpop.f32.mrf.mxu0
        %v600 = vadd.f32 0.0, %v599
        %601 = vmatmul.bf16.gmra.mxu0 %v469
        %v602 = vpop.f32.mrf.mxu0
        %v603 = vadd.f32 0.0, %v602
        %v604 = vpop.f32.mrf.mxu0
        %v605 = vadd.f32 0.0, %v604
        %606 = vmatmul.bf16.gmra.mxu0 %v470
        %v607 = vpop.f32.mrf.mxu0
        %v608 = vadd.f32 0.0, %v607
        %v609 = vpop.f32.mrf.mxu0
        %v610 = vadd.f32 0.0, %v609
        %611 = vmatmul.bf16.gmra.mxu0 %v471
        %v612 = vpop.f32.mrf.mxu0
        %v613 = vadd.f32 0.0, %v612
        %v614 = vpop.f32.mrf.mxu0
        %v615 = vadd.f32 0.0, %v614
        %616 = vmatmul.bf16.gmra.mxu0 %v472
        %v617 = vpop.f32.mrf.mxu0
        %v618 = vadd.f32 0.0, %v617
        %v619 = vpop.f32.mrf.mxu0
        %v620 = vadd.f32 0.0, %v619
        %621 = vmatmul.bf16.gmra.mxu0 %v473
        %v622 = vpop.f32.mrf.mxu0
        %v623 = vadd.f32 0.0, %v622
        %v624 = vpop.f32.mrf.mxu0
        %v625 = vadd.f32 0.0, %v624
        %626 = vmatmul.bf16.gmra.mxu0 %v474
        %v627 = vpop.f32.mrf.mxu0
        %v628 = vadd.f32 0.0, %v627
        %v629 = vpop.f32.mrf.mxu0
        %v630 = vadd.f32 0.0, %v629
        %631 = vmatmul.bf16.gmra.mxu0 %v475
        %v632 = vpop.f32.mrf.mxu0
        %v633 = vadd.f32 0.0, %v632
        %v634 = vpop.f32.mrf.mxu0
        %v635 = vadd.f32 0.0, %v634
        %636 = vmatmul.bf16.gmra.mxu0 %v476
        %v637 = vpop.f32.mrf.mxu0
        %v638 = vadd.f32 0.0, %v637
        %v639 = vpop.f32.mrf.mxu0
        %v640 = vadd.f32 0.0, %v639
        %641 = vmatmul.bf16.gmra.mxu0 %v477
        %v642 = vpop.f32.mrf.mxu0
        %v643 = vadd.f32 0.0, %v642
        %v644 = vpop.f32.mrf.mxu0
        %v645 = vadd.f32 0.0, %v644
        %646 = vmatmul.bf16.gmra.mxu0 %v478
        %v647 = vpop.f32.mrf.mxu0
        %v648 = vadd.f32 0.0, %v647
        %v649 = vpop.f32.mrf.mxu0
        %v650 = vadd.f32 0.0, %v649
        %651 = vmatmul.bf16.gmra.mxu0 %v479
        %v652 = vpop.f32.mrf.mxu0
        %v653 = vadd.f32 0.0, %v652
        %v654 = vpop.f32.mrf.mxu0
        %v655 = vadd.f32 0.0, %v654
        %656 = vmatmul.bf16.gmra.mxu0 %v480
        %v657 = vpop.f32.mrf.mxu0
        %v658 = vadd.f32 0.0, %v657
        %v659 = vpop.f32.mrf.mxu0
        %v660 = vadd.f32 0.0, %v659
        %661 = vmatmul.bf16.gmra.mxu0 %v481
        %v662 = vpop.f32.mrf.mxu0
        %v663 = vadd.f32 0.0, %v662
        %v664 = vpop.f32.mrf.mxu0
        %v665 = vadd.f32 0.0, %v664
        %666 = vmatmul.bf16.gmra.mxu0 %v482
        %v667 = vpop.f32.mrf.mxu0
        %v668 = vadd.f32 0.0, %v667
        %v669 = vpop.f32.mrf.mxu0
        %v670 = vadd.f32 0.0, %v669
        %671 = vmatmul.bf16.gmra.mxu0 %v483
        %v672 = vpop.f32.mrf.mxu0
        %v673 = vadd.f32 0.0, %v672
        %v674 = vpop.f32.mrf.mxu0
        %v675 = vadd.f32 0.0, %v674
        %676 = vmatmul.bf16.gmra.mxu0 %v484
        %v677 = vpop.f32.mrf.mxu0
        %v678 = vadd.f32 0.0, %v677
        %v679 = vpop.f32.mrf.mxu0
        %v680 = vadd.f32 0.0, %v679
        %681 = vmatmul.bf16.gmra.mxu0 %v485
        %v682 = vpop.f32.mrf.mxu0
        %v683 = vadd.f32 0.0, %v682
        %v684 = vpop.f32.mrf.mxu0
        %v685 = vadd.f32 0.0, %v684
        %686 = vmatmul.bf16.gmra.mxu0 %v486
        %v687 = vpop.f32.mrf.mxu0
        %v688 = vadd.f32 0.0, %v687
        %v689 = vpop.f32.mrf.mxu0
        %v690 = vadd.f32 0.0, %v689
        %691 = vmatmul.bf16.gmra.mxu0 %v487
        %v692 = vpop.f32.mrf.mxu0
        %v693 = vadd.f32 0.0, %v692
        %v694 = vpop.f32.mrf.mxu0
        %v695 = vadd.f32 0.0, %v694
        %696 = vmatmul.bf16.gmra.mxu0 %v488
        %v697 = vpop.f32.mrf.mxu0
        %v698 = vadd.f32 0.0, %v697
        %v699 = vpop.f32.mrf.mxu0
        %v700 = vadd.f32 0.0, %v699
        %701 = vmatmul.bf16.gmra.mxu0 %v489
        %v702 = vpop.f32.mrf.mxu0
        %v703 = vadd.f32 0.0, %v702
        %v704 = vpop.f32.mrf.mxu0
        %v705 = vadd.f32 0.0, %v704
        %706 = vmatmul.bf16.gmra.mxu0 %v490
        %v707 = vpop.f32.mrf.mxu0
        %v708 = vadd.f32 0.0, %v707
        %v709 = vpop.f32.mrf.mxu0
        %v710 = vadd.f32 0.0, %v709
        %711 = vmatmul.bf16.gmra.mxu0 %v491
        %v712 = vpop.f32.mrf.mxu0
        %v713 = vadd.f32 0.0, %v712
        %v714 = vpop.f32.mrf.mxu0
        %v715 = vadd.f32 0.0, %v714
        %716 = vmatmul.bf16.gmra.mxu0 %v492
        %v717 = vpop.f32.mrf.mxu0
        %v718 = vadd.f32 0.0, %v717
        %v719 = vpop.f32.mrf.mxu0
        %v720 = vadd.f32 0.0, %v719
        %721 = vmatmul.bf16.gmra.mxu0 %v493
        %v722 = vpop.f32.mrf.mxu0
        %v723 = vadd.f32 0.0, %v722
        %v724 = vpop.f32.mrf.mxu0
        %v725 = vadd.f32 0.0, %v724
        %726 = vmatmul.bf16.gmra.mxu0 %v494
        %v727 = vpop.f32.mrf.mxu0
        %v728 = vadd.f32 0.0, %v727
        %v729 = vpop.f32.mrf.mxu0
        %v730 = vadd.f32 0.0, %v729
        %731 = vmatmul.bf16.gmra.mxu0 %v495
        %v732 = vpop.f32.mrf.mxu0
        %v733 = vadd.f32 0.0, %v732
        %v734 = vpop.f32.mrf.mxu0
        %v735 = vadd.f32 0.0, %v734
        %736 = vmatmul.bf16.gmra.mxu0 %v496
        %v737 = vpop.f32.mrf.mxu0
        %v738 = vadd.f32 0.0, %v737
        %v739 = vpop.f32.mrf.mxu0
        %v740 = vadd.f32 0.0, %v739
        %741 = vmatmul.bf16.gmra.mxu0 %v497
        %v742 = vpop.f32.mrf.mxu0
        %v743 = vadd.f32 0.0, %v742
        %v744 = vpop.f32.mrf.mxu0
        %v745 = vadd.f32 0.0, %v744
        %746 = vdwg.mxu0
        %747 = vst [vmem:[#allocation2] sm:$0xff] %v588
        %748 = vst [vmem:[#allocation2 + $0x8] sm:$0xff] %v590
        %749 = vst [vmem:[#allocation2 + $0x10] sm:$0xff] %v593
        %750 = vst [vmem:[#allocation2 + $0x18] sm:$0xff] %v595
        %751 = vst [vmem:[#allocation2 + $0x20] sm:$0xff] %v598
        %752 = vst [vmem:[#allocation2 + $0x28] sm:$0xff] %v600
        %753 = vst [vmem:[#allocation2 + $0x30] sm:$0xff] %v603
        %754 = vst [vmem:[#allocation2 + $0x38] sm:$0xff] %v605
        %755 = vst [vmem:[#allocation2 + $0x40] sm:$0xff] %v608
        %756 = vst [vmem:[#allocation2 + $0x48] sm:$0xff] %v610
        %757 = vst [vmem:[#allocation2 + $0x50] sm:$0xff] %v613
        %758 = vst [vmem:[#allocation2 + $0x58] sm:$0xff] %v615
        %759 = vst [vmem:[#allocation2 + $0x60] sm:$0xff] %v618
        %760 = vst [vmem:[#allocation2 + $0x68] sm:$0xff] %v620
        %761 = vst [vmem:[#allocation2 + $0x70] sm:$0xff] %v623
        %762 = vst [vmem:[#allocation2 + $0x78] sm:$0xff] %v625
        %763 = vst [vmem:[#allocation2 + $0x80] sm:$0xff] %v628
        %764 = vst [vmem:[#allocation2 + $0x88] sm:$0xff] %v630
        %765 = vst [vmem:[#allocation2 + $0x90] sm:$0xff] %v633
        %766 = vst [vmem:[#allocation2 + $0x98] sm:$0xff] %v635
        %767 = vst [vmem:[#allocation2 + $0xa0] sm:$0xff] %v638
        %768 = vst [vmem:[#allocation2 + $0xa8] sm:$0xff] %v640
        %769 = vst [vmem:[#allocation2 + $0xb0] sm:$0xff] %v643
        %770 = vst [vmem:[#allocation2 + $0xb8] sm:$0xff] %v645
        %771 = vst [vmem:[#allocation2 + $0xc0] sm:$0xff] %v648
        %772 = vst [vmem:[#allocation2 + $0xc8] sm:$0xff] %v650
        %773 = vst [vmem:[#allocation2 + $0xd0] sm:$0xff] %v653
        %774 = vst [vmem:[#allocation2 + $0xd8] sm:$0xff] %v655
        %775 = vst [vmem:[#allocation2 + $0xe0] sm:$0xff] %v658
        %776 = vst [vmem:[#allocation2 + $0xe8] sm:$0xff] %v660
        %777 = vst [vmem:[#allocation2 + $0xf0] sm:$0xff] %v663
        %778 = vst [vmem:[#allocation2 + $0xf8] sm:$0xff] %v665
        %779 = vst [vmem:[#allocation2 + $0x100] sm:$0xff] %v668
        %780 = vst [vmem:[#allocation2 + $0x108] sm:$0xff] %v670
        %781 = vst [vmem:[#allocation2 + $0x110] sm:$0xff] %v673
        %782 = vst [vmem:[#allocation2 + $0x118] sm:$0xff] %v675
        %783 = vst [vmem:[#allocation2 + $0x120] sm:$0xff] %v678
        %784 = vst [vmem:[#allocation2 + $0x128] sm:$0xff] %v680
        %785 = vst [vmem:[#allocation2 + $0x130] sm:$0xff] %v683
        %786 = vst [vmem:[#allocation2 + $0x138] sm:$0xff] %v685
        %787 = vst [vmem:[#allocation2 + $0x140] sm:$0xff] %v688
        %788 = vst [vmem:[#allocation2 + $0x148] sm:$0xff] %v690
        %789 = vst [vmem:[#allocation2 + $0x150] sm:$0xff] %v693
        %790 = vst [vmem:[#allocation2 + $0x158] sm:$0xff] %v695
        %791 = vst [vmem:[#allocation2 + $0x160] sm:$0xff] %v698
        %792 = vst [vmem:[#allocation2 + $0x168] sm:$0xff] %v700
        %793 = vst [vmem:[#allocation2 + $0x170] sm:$0xff] %v703
        %794 = vst [vmem:[#allocation2 + $0x178] sm:$0xff] %v705
        %795 = vst [vmem:[#allocation2 + $0x180] sm:$0xff] %v708
        %796 = vst [vmem:[#allocation2 + $0x188] sm:$0xff] %v710
        %797 = vst [vmem:[#allocation2 + $0x190] sm:$0xff] %v713
        %798 = vst [vmem:[#allocation2 + $0x198] sm:$0xff] %v715
        %799 = vst [vmem:[#allocation2 + $0x1a0] sm:$0xff] %v718
        %800 = vst [vmem:[#allocation2 + $0x1a8] sm:$0xff] %v720
        %801 = vst [vmem:[#allocation2 + $0x1b0] sm:$0xff] %v723
        %802 = vst [vmem:[#allocation2 + $0x1b8] sm:$0xff] %v725
        %803 = vst [vmem:[#allocation2 + $0x1c0] sm:$0xff] %v728
        %804 = vst [vmem:[#allocation2 + $0x1c8] sm:$0xff] %v730
        %805 = vst [vmem:[#allocation2 + $0x1d0] sm:$0xff] %v733
        %806 = vst [vmem:[#allocation2 + $0x1d8] sm:$0xff] %v735
        %807 = vst [vmem:[#allocation2 + $0x1e0] sm:$0xff] %v738
        %808 = vst [vmem:[#allocation2 + $0x1e8] sm:$0xff] %v740
        %809 = vst [vmem:[#allocation2 + $0x1f0] sm:$0xff] %v743
        %810 = vst [vmem:[#allocation2 + $0x1f8] sm:$0xff] %v745
        %vm811 = vsmask.f32 7424
        %v813 = vshrl.u32 %v466, 16
        %v815 = vshll.u32 %v466, 16
        %v817 = vrot.slane %v815, 1
        %v818 = vor.u32 %v813, %v817
        %v820 = vshll.u32 %v467, 16
        %v822 = vrot.slane %v820, 1
        %v823 = vsel %vm811, %v818, %v822
        %v824 = vshrl.u32 %v467, 16
        %v826 = vor.u32 %v824, %v822
        %v828 = vshll.u32 %v468, 16
        %v830 = vrot.slane %v828, 1
        %v831 = vsel %vm811, %v826, %v830
        %v832 = vshrl.u32 %v468, 16
        %v834 = vor.u32 %v832, %v830
        %v836 = vshll.u32 %v469, 16
        %v838 = vrot.slane %v836, 1
        %v839 = vsel %vm811, %v834, %v838
        %v840 = vshrl.u32 %v469, 16
        %v842 = vor.u32 %v840, %v838
        %v844 = vshll.u32 %v470, 16
        %v846 = vrot.slane %v844, 1
        %v847 = vsel %vm811, %v842, %v846
        %v848 = vshrl.u32 %v470, 16
        %v850 = vor.u32 %v848, %v846
        %v852 = vshll.u32 %v471, 16
        %v854 = vrot.slane %v852, 1
        %v855 = vsel %vm811, %v850, %v854
        %v856 = vshrl.u32 %v471, 16
        %v858 = vor.u32 %v856, %v854
        %v860 = vshll.u32 %v472, 16
        %v862 = vrot.slane %v860, 1
        %v863 = vsel %vm811, %v858, %v862
        %v864 = vshrl.u32 %v472, 16
        %v866 = vor.u32 %v864, %v862
        %v868 = vshll.u32 %v473, 16
        %v870 = vrot.slane %v868, 1
        %v871 = vsel %vm811, %v866, %v870
        %v872 = vshrl.u32 %v473, 16
        %v874 = vor.u32 %v872, %v870
        %v876 = vshll.u32 %v474, 16
        %v878 = vrot.slane %v876, 1
        %v879 = vsel %vm811, %v874, %v878
        %v880 = vshrl.u32 %v474, 16
        %v882 = vor.u32 %v880, %v878
        %v884 = vshll.u32 %v475, 16
        %v886 = vrot.slane %v884, 1
        %v887 = vsel %vm811, %v882, %v886
        %v888 = vshrl.u32 %v475, 16
        %v890 = vor.u32 %v888, %v886
        %v892 = vshll.u32 %v476, 16
        %v894 = vrot.slane %v892, 1
        %v895 = vsel %vm811, %v890, %v894
        %v896 = vshrl.u32 %v476, 16
        %v898 = vor.u32 %v896, %v894
        %v900 = vshll.u32 %v477, 16
        %v902 = vrot.slane %v900, 1
        %v903 = vsel %vm811, %v898, %v902
        %v904 = vshrl.u32 %v477, 16
        %v906 = vor.u32 %v904, %v902
        %v908 = vshll.u32 %v478, 16
        %v910 = vrot.slane %v908, 1
        %v911 = vsel %vm811, %v906, %v910
        %v912 = vshrl.u32 %v478, 16
        %v914 = vor.u32 %v912, %v910
        %v916 = vshll.u32 %v479, 16
        %v918 = vrot.slane %v916, 1
        %v919 = vsel %vm811, %v914, %v918
        %v920 = vshrl.u32 %v479, 16
        %v922 = vor.u32 %v920, %v918
        %v924 = vshll.u32 %v480, 16
        %v926 = vrot.slane %v924, 1
        %v927 = vsel %vm811, %v922, %v926
        %v928 = vshrl.u32 %v480, 16
        %v930 = vor.u32 %v928, %v926
        %v932 = vshll.u32 %v481, 16
        %v934 = vrot.slane %v932, 1
        %v935 = vsel %vm811, %v930, %v934
        %v936 = vshrl.u32 %v481, 16
        %v938 = vor.u32 %v936, %v934
        %v940 = vshll.u32 %v482, 16
        %v942 = vrot.slane %v940, 1
        %v943 = vsel %vm811, %v938, %v942
        %v944 = vshrl.u32 %v482, 16
        %v946 = vor.u32 %v944, %v942
        %v948 = vshll.u32 %v483, 16
        %v950 = vrot.slane %v948, 1
        %v951 = vsel %vm811, %v946, %v950
        %v952 = vshrl.u32 %v483, 16
        %v954 = vor.u32 %v952, %v950
        %v956 = vshll.u32 %v484, 16
        %v958 = vrot.slane %v956, 1
        %v959 = vsel %vm811, %v954, %v958
        %v960 = vshrl.u32 %v484, 16
        %v962 = vor.u32 %v960, %v958
        %v964 = vshll.u32 %v485, 16
        %v966 = vrot.slane %v964, 1
        %v967 = vsel %vm811, %v962, %v966
        %v968 = vshrl.u32 %v485, 16
        %v970 = vor.u32 %v968, %v966
        %v972 = vshll.u32 %v486, 16
        %v974 = vrot.slane %v972, 1
        %v975 = vsel %vm811, %v970, %v974
        %v976 = vshrl.u32 %v486, 16
        %v978 = vor.u32 %v976, %v974
        %v980 = vshll.u32 %v487, 16
        %v982 = vrot.slane %v980, 1
        %v983 = vsel %vm811, %v978, %v982
        %v984 = vshrl.u32 %v487, 16
        %v986 = vor.u32 %v984, %v982
        %v988 = vshll.u32 %v488, 16
        %v990 = vrot.slane %v988, 1
        %v991 = vsel %vm811, %v986, %v990
        %v992 = vshrl.u32 %v488, 16
        %v994 = vor.u32 %v992, %v990
        %v996 = vshll.u32 %v489, 16
        %v998 = vrot.slane %v996, 1
        %v999 = vsel %vm811, %v994, %v998
        %v1000 = vshrl.u32 %v489, 16
        %v1002 = vor.u32 %v1000, %v998
        %v1004 = vshll.u32 %v490, 16
        %v1006 = vrot.slane %v1004, 1
        %v1007 = vsel %vm811, %v1002, %v1006
        %v1008 = vshrl.u32 %v490, 16
        %v1010 = vor.u32 %v1008, %v1006
        %v1012 = vshll.u32 %v491, 16
        %v1014 = vrot.slane %v1012, 1
        %v1015 = vsel %vm811, %v1010, %v1014
        %v1016 = vshrl.u32 %v491, 16
        %v1018 = vor.u32 %v1016, %v1014
        %v1020 = vshll.u32 %v492, 16
        %v1022 = vrot.slane %v1020, 1
        %v1023 = vsel %vm811, %v1018, %v1022
        %v1024 = vshrl.u32 %v492, 16
        %v1026 = vor.u32 %v1024, %v1022
        %v1028 = vshll.u32 %v493, 16
        %v1030 = vrot.slane %v1028, 1
        %v1031 = vsel %vm811, %v1026, %v1030
        %v1032 = vshrl.u32 %v493, 16
        %v1034 = vor.u32 %v1032, %v1030
        %v1036 = vshll.u32 %v494, 16
        %v1038 = vrot.slane %v1036, 1
        %v1039 = vsel %vm811, %v1034, %v1038
        %v1040 = vshrl.u32 %v494, 16
        %v1042 = vor.u32 %v1040, %v1038
        %v1044 = vshll.u32 %v495, 16
        %v1046 = vrot.slane %v1044, 1
        %v1047 = vsel %vm811, %v1042, %v1046
        %v1048 = vshrl.u32 %v495, 16
        %v1050 = vor.u32 %v1048, %v1046
        %v1052 = vshll.u32 %v496, 16
        %v1054 = vrot.slane %v1052, 1
        %v1055 = vsel %vm811, %v1050, %v1054
        %v1056 = vshrl.u32 %v496, 16
        %v1058 = vor.u32 %v1056, %v1054
        %v1060 = vshll.u32 %v497, 16
        %v1062 = vrot.slane %v1060, 1
        %v1063 = vsel %vm811, %v1058, %v1062
        %v1064 = vshrl.u32 %v497, 16
        %v1066 = vor.u32 %v1064, %v1062
        %vm1099 = vcmask 1047552
        %vm1100 = vmand %vm1099, %vm811
        %v1101 = vsel %vm1100, %v1066, 0
        %s1102 = scalar_lea.vmem [#allocation6], 64
        %v1103 = vld [vmem:[%s1102] sm:$0xf]
        %v1104 = vld [vmem:[%s1102 + $0x4] sm:$0xf]
        %v1105 = vld [vmem:[%s1102 + $0x8] sm:$0xf]
        %v1106 = vld [vmem:[%s1102 + $0xc] sm:$0xf]
        %v1107 = vld [vmem:[%s1102 + $0x10] sm:$0xf]
        %v1108 = vld [vmem:[%s1102 + $0x14] sm:$0xf]
        %v1109 = vld [vmem:[%s1102 + $0x18] sm:$0xf]
        %v1110 = vld [vmem:[%s1102 + $0x1c] sm:$0xf]
        %v1111 = vld [vmem:[%s1102 + $0x20] sm:$0xf]
        %v1112 = vld [vmem:[%s1102 + $0x24] sm:$0xf]
        %v1113 = vld [vmem:[%s1102 + $0x28] sm:$0xf]
        %v1114 = vld [vmem:[%s1102 + $0x2c] sm:$0xf]
        %v1115 = vld [vmem:[%s1102 + $0x30] sm:$0xf]
        %v1116 = vld [vmem:[%s1102 + $0x34] sm:$0xf]
        %v1117 = vld [vmem:[%s1102 + $0x38] sm:$0xf]
        %v1118 = vld [vmem:[%s1102 + $0x3c] sm:$0xf]
        %v1135 = vunpack.c.l.b16 %v1103
        %v1136 = vunpack.c.l.b16 %v1104
        %v1137 = vunpack.c.l.b16 %v1105
        %v1138 = vunpack.c.l.b16 %v1106
        %v1139 = vunpack.c.l.b16 %v1107
        %v1140 = vunpack.c.l.b16 %v1108
        %v1141 = vunpack.c.l.b16 %v1109
        %v1142 = vunpack.c.l.b16 %v1110
        %v1143 = vunpack.c.l.b16 %v1111
        %v1144 = vunpack.c.l.b16 %v1112
        %v1145 = vunpack.c.l.b16 %v1113
        %v1146 = vunpack.c.l.b16 %v1114
        %v1147 = vunpack.c.l.b16 %v1115
        %v1148 = vunpack.c.l.b16 %v1116
        %v1149 = vunpack.c.l.b16 %v1117
        %v1150 = vunpack.c.l.b16 %v1118
        %v1151 = vpack.c.b16 %v1136, %v1135
        %v1152 = vpack.c.b16 %v1138, %v1137
        %v1153 = vpack.c.b16 %v1140, %v1139
        %v1154 = vpack.c.b16 %v1142, %v1141
        %v1155 = vpack.c.b16 %v1144, %v1143
        %v1156 = vpack.c.b16 %v1146, %v1145
        %v1157 = vpack.c.b16 %v1148, %v1147
        %v1158 = vpack.c.b16 %v1150, %v1149
        %1167 = vmatpush.bf16.msra.mxu0 %v1158
        %1168 = vmatpush.bf16.msra.mxu0 %v1157
        %1169 = vmatpush.bf16.msra.mxu0 %v1156
        %1170 = vmatpush.bf16.msra.mxu0 %v1155
        %1171 = vmatpush.bf16.msra.mxu0 %v1154
        %1172 = vmatpush.bf16.msra.mxu0 %v1153
        %1173 = vmatpush.bf16.msra.mxu0 %v1152
        %1174 = vmatpush.bf16.msra.mxu0 %v1151
        %1175 = vmatmul.bf16.gmra.mxu0 %v823
        %v1176 = vpop.f32.mrf.mxu0
        %v1177 = vadd.f32 0.0, %v1176
        %v1178 = vpop.f32.mrf.mxu0
        %v1179 = vadd.f32 0.0, %v1178
        %1180 = vmatmul.bf16.gmra.mxu0 %v831
        %v1181 = vpop.f32.mrf.mxu0
        %v1182 = vadd.f32 0.0, %v1181
        %v1183 = vpop.f32.mrf.mxu0
        %v1184 = vadd.f32 0.0, %v1183
        %1185 = vmatmul.bf16.gmra.mxu0 %v839
        %v1186 = vpop.f32.mrf.mxu0
        %v1187 = vadd.f32 0.0, %v1186
        %v1188 = vpop.f32.mrf.mxu0
        %v1189 = vadd.f32 0.0, %v1188
        %1190 = vmatmul.bf16.gmra.mxu0 %v847
        %v1191 = vpop.f32.mrf.mxu0
        %v1192 = vadd.f32 0.0, %v1191
        %v1193 = vpop.f32.mrf.mxu0
        %v1194 = vadd.f32 0.0, %v1193
        %1195 = vmatmul.bf16.gmra.mxu0 %v855
        %v1196 = vpop.f32.mrf.mxu0
        %v1197 = vadd.f32 0.0, %v1196
        %v1198 = vpop.f32.mrf.mxu0
        %v1199 = vadd.f32 0.0, %v1198
        %1200 = vmatmul.bf16.gmra.mxu0 %v863
        %v1201 = vpop.f32.mrf.mxu0
        %v1202 = vadd.f32 0.0, %v1201
        %v1203 = vpop.f32.mrf.mxu0
        %v1204 = vadd.f32 0.0, %v1203
        %1205 = vmatmul.bf16.gmra.mxu0 %v871
        %v1206 = vpop.f32.mrf.mxu0
        %v1207 = vadd.f32 0.0, %v1206
        %v1208 = vpop.f32.mrf.mxu0
        %v1209 = vadd.f32 0.0, %v1208
        %1210 = vmatmul.bf16.gmra.mxu0 %v879
        %v1211 = vpop.f32.mrf.mxu0
        %v1212 = vadd.f32 0.0, %v1211
        %v1213 = vpop.f32.mrf.mxu0
        %v1214 = vadd.f32 0.0, %v1213
        %1215 = vmatmul.bf16.gmra.mxu0 %v887
        %v1216 = vpop.f32.mrf.mxu0
        %v1217 = vadd.f32 0.0, %v1216
        %v1218 = vpop.f32.mrf.mxu0
        %v1219 = vadd.f32 0.0, %v1218
        %1220 = vmatmul.bf16.gmra.mxu0 %v895
        %v1221 = vpop.f32.mrf.mxu0
        %v1222 = vadd.f32 0.0, %v1221
        %v1223 = vpop.f32.mrf.mxu0
        %v1224 = vadd.f32 0.0, %v1223
        %1225 = vmatmul.bf16.gmra.mxu0 %v903
        %v1226 = vpop.f32.mrf.mxu0
        %v1227 = vadd.f32 0.0, %v1226
        %v1228 = vpop.f32.mrf.mxu0
        %v1229 = vadd.f32 0.0, %v1228
        %1230 = vmatmul.bf16.gmra.mxu0 %v911
        %v1231 = vpop.f32.mrf.mxu0
        %v1232 = vadd.f32 0.0, %v1231
        %v1233 = vpop.f32.mrf.mxu0
        %v1234 = vadd.f32 0.0, %v1233
        %1235 = vmatmul.bf16.gmra.mxu0 %v919
        %v1236 = vpop.f32.mrf.mxu0
        %v1237 = vadd.f32 0.0, %v1236
        %v1238 = vpop.f32.mrf.mxu0
        %v1239 = vadd.f32 0.0, %v1238
        %1240 = vmatmul.bf16.gmra.mxu0 %v927
        %v1241 = vpop.f32.mrf.mxu0
        %v1242 = vadd.f32 0.0, %v1241
        %v1243 = vpop.f32.mrf.mxu0
        %v1244 = vadd.f32 0.0, %v1243
        %1245 = vmatmul.bf16.gmra.mxu0 %v935
        %v1246 = vpop.f32.mrf.mxu0
        %v1247 = vadd.f32 0.0, %v1246
        %v1248 = vpop.f32.mrf.mxu0
        %v1249 = vadd.f32 0.0, %v1248
        %1250 = vmatmul.bf16.gmra.mxu0 %v943
        %v1251 = vpop.f32.mrf.mxu0
        %v1252 = vadd.f32 0.0, %v1251
        %v1253 = vpop.f32.mrf.mxu0
        %v1254 = vadd.f32 0.0, %v1253
        %1255 = vmatmul.bf16.gmra.mxu0 %v951
        %v1256 = vpop.f32.mrf.mxu0
        %v1257 = vadd.f32 0.0, %v1256
        %v1258 = vpop.f32.mrf.mxu0
        %v1259 = vadd.f32 0.0, %v1258
        %1260 = vmatmul.bf16.gmra.mxu0 %v959
        %v1261 = vpop.f32.mrf.mxu0
        %v1262 = vadd.f32 0.0, %v1261
        %v1263 = vpop.f32.mrf.mxu0
        %v1264 = vadd.f32 0.0, %v1263
        %1265 = vmatmul.bf16.gmra.mxu0 %v967
        %v1266 = vpop.f32.mrf.mxu0
        %v1267 = vadd.f32 0.0, %v1266
        %v1268 = vpop.f32.mrf.mxu0
        %v1269 = vadd.f32 0.0, %v1268
        %1270 = vmatmul.bf16.gmra.mxu0 %v975
        %v1271 = vpop.f32.mrf.mxu0
        %v1272 = vadd.f32 0.0, %v1271
        %v1273 = vpop.f32.mrf.mxu0
        %v1274 = vadd.f32 0.0, %v1273
        %1275 = vmatmul.bf16.gmra.mxu0 %v983
        %v1276 = vpop.f32.mrf.mxu0
        %v1277 = vadd.f32 0.0, %v1276
        %v1278 = vpop.f32.mrf.mxu0
        %v1279 = vadd.f32 0.0, %v1278
        %1280 = vmatmul.bf16.gmra.mxu0 %v991
        %v1281 = vpop.f32.mrf.mxu0
        %v1282 = vadd.f32 0.0, %v1281
        %v1283 = vpop.f32.mrf.mxu0
        %v1284 = vadd.f32 0.0, %v1283
        %1285 = vmatmul.bf16.gmra.mxu0 %v999
        %v1286 = vpop.f32.mrf.mxu0
        %v1287 = vadd.f32 0.0, %v1286
        %v1288 = vpop.f32.mrf.mxu0
        %v1289 = vadd.f32 0.0, %v1288
        %1290 = vmatmul.bf16.gmra.mxu0 %v1007
        %v1291 = vpop.f32.mrf.mxu0
        %v1292 = vadd.f32 0.0, %v1291
        %v1293 = vpop.f32.mrf.mxu0
        %v1294 = vadd.f32 0.0, %v1293
        %1295 = vmatmul.bf16.gmra.mxu0 %v1015
        %v1296 = vpop.f32.mrf.mxu0
        %v1297 = vadd.f32 0.0, %v1296
        %v1298 = vpop.f32.mrf.mxu0
        %v1299 = vadd.f32 0.0, %v1298
        %1300 = vmatmul.bf16.gmra.mxu0 %v1023
        %v1301 = vpop.f32.mrf.mxu0
        %v1302 = vadd.f32 0.0, %v1301
        %v1303 = vpop.f32.mrf.mxu0
        %v1304 = vadd.f32 0.0, %v1303
        %1305 = vmatmul.bf16.gmra.mxu0 %v1031
        %v1306 = vpop.f32.mrf.mxu0
        %v1307 = vadd.f32 0.0, %v1306
        %v1308 = vpop.f32.mrf.mxu0
        %v1309 = vadd.f32 0.0, %v1308
        %1310 = vmatmul.bf16.gmra.mxu0 %v1039
        %v1311 = vpop.f32.mrf.mxu0
        %v1312 = vadd.f32 0.0, %v1311
        %v1313 = vpop.f32.mrf.mxu0
        %v1314 = vadd.f32 0.0, %v1313
        %1315 = vmatmul.bf16.gmra.mxu0 %v1047
        %v1316 = vpop.f32.mrf.mxu0
        %v1317 = vadd.f32 0.0, %v1316
        %v1318 = vpop.f32.mrf.mxu0
        %v1319 = vadd.f32 0.0, %v1318
        %1320 = vmatmul.bf16.gmra.mxu0 %v1055
        %v1321 = vpop.f32.mrf.mxu0
        %v1322 = vadd.f32 0.0, %v1321
        %v1323 = vpop.f32.mrf.mxu0
        %v1324 = vadd.f32 0.0, %v1323
        %1325 = vmatmul.bf16.gmra.mxu0 %v1063
        %v1326 = vpop.f32.mrf.mxu0
        %v1327 = vadd.f32 0.0, %v1326
        %v1328 = vpop.f32.mrf.mxu0
        %v1329 = vadd.f32 0.0, %v1328
        %1330 = vmatmul.bf16.gmra.mxu0 %v1101
        %v1331 = vpop.f32.mrf.mxu0
        %v1332 = vadd.f32 0.0, %v1331
        %v1333 = vpop.f32.mrf.mxu0
        %v1334 = vadd.f32 0.0, %v1333
        %1335 = vdwg.mxu0
        %v1336 = vld [vmem:[#allocation2] sm:$0xff]
        %v1337 = vld [vmem:[#allocation2 + $0x8] sm:$0xff]
        %v1338 = vld [vmem:[#allocation2 + $0x10] sm:$0xff]
        %v1339 = vld [vmem:[#allocation2 + $0x18] sm:$0xff]
        %v1340 = vld [vmem:[#allocation2 + $0x20] sm:$0xff]
        %v1341 = vld [vmem:[#allocation2 + $0x28] sm:$0xff]
        %v1342 = vld [vmem:[#allocation2 + $0x30] sm:$0xff]
        %v1343 = vld [vmem:[#allocation2 + $0x38] sm:$0xff]
        %v1344 = vld [vmem:[#allocation2 + $0x40] sm:$0xff]
        %v1345 = vld [vmem:[#allocation2 + $0x48] sm:$0xff]
        %v1346 = vld [vmem:[#allocation2 + $0x50] sm:$0xff]
        %v1347 = vld [vmem:[#allocation2 + $0x58] sm:$0xff]
        %v1348 = vld [vmem:[#allocation2 + $0x60] sm:$0xff]
        %v1349 = vld [vmem:[#allocation2 + $0x68] sm:$0xff]
        %v1350 = vld [vmem:[#allocation2 + $0x70] sm:$0xff]
        %v1351 = vld [vmem:[#allocation2 + $0x78] sm:$0xff]
        %v1352 = vld [vmem:[#allocation2 + $0x80] sm:$0xff]
        %v1353 = vld [vmem:[#allocation2 + $0x88] sm:$0xff]
        %v1354 = vld [vmem:[#allocation2 + $0x90] sm:$0xff]
        %v1355 = vld [vmem:[#allocation2 + $0x98] sm:$0xff]
        %v1356 = vld [vmem:[#allocation2 + $0xa0] sm:$0xff]
        %v1357 = vld [vmem:[#allocation2 + $0xa8] sm:$0xff]
        %v1358 = vld [vmem:[#allocation2 + $0xb0] sm:$0xff]
        %v1359 = vld [vmem:[#allocation2 + $0xb8] sm:$0xff]
        %v1360 = vld [vmem:[#allocation2 + $0xc0] sm:$0xff]
        %v1361 = vld [vmem:[#allocation2 + $0xc8] sm:$0xff]
        %v1362 = vld [vmem:[#allocation2 + $0xd0] sm:$0xff]
        %v1363 = vld [vmem:[#allocation2 + $0xd8] sm:$0xff]
        %v1364 = vld [vmem:[#allocation2 + $0xe0] sm:$0xff]
        %v1365 = vld [vmem:[#allocation2 + $0xe8] sm:$0xff]
        %v1366 = vld [vmem:[#allocation2 + $0xf0] sm:$0xff]
        %v1367 = vld [vmem:[#allocation2 + $0xf8] sm:$0xff]
        %v1368 = vld [vmem:[#allocation2 + $0x100] sm:$0xff]
        %v1369 = vld [vmem:[#allocation2 + $0x108] sm:$0xff]
        %v1370 = vld [vmem:[#allocation2 + $0x110] sm:$0xff]
        %v1371 = vld [vmem:[#allocation2 + $0x118] sm:$0xff]
        %v1372 = vld [vmem:[#allocation2 + $0x120] sm:$0xff]
        %v1373 = vld [vmem:[#allocation2 + $0x128] sm:$0xff]
        %v1374 = vld [vmem:[#allocation2 + $0x130] sm:$0xff]
        %v1375 = vld [vmem:[#allocation2 + $0x138] sm:$0xff]
        %v1376 = vld [vmem:[#allocation2 + $0x140] sm:$0xff]
        %v1377 = vld [vmem:[#allocation2 + $0x148] sm:$0xff]
        %v1378 = vld [vmem:[#allocation2 + $0x150] sm:$0xff]
        %v1379 = vld [vmem:[#allocation2 + $0x158] sm:$0xff]
        %v1380 = vld [vmem:[#allocation2 + $0x160] sm:$0xff]
        %v1381 = vld [vmem:[#allocation2 + $0x168] sm:$0xff]
        %v1382 = vld [vmem:[#allocation2 + $0x170] sm:$0xff]
        %v1383 = vld [vmem:[#allocation2 + $0x178] sm:$0xff]
        %v1384 = vld [vmem:[#allocation2 + $0x180] sm:$0xff]
        %v1385 = vld [vmem:[#allocation2 + $0x188] sm:$0xff]
        %v1386 = vld [vmem:[#allocation2 + $0x190] sm:$0xff]
        %v1387 = vld [vmem:[#allocation2 + $0x198] sm:$0xff]
        %v1388 = vld [vmem:[#allocation2 + $0x1a0] sm:$0xff]
        %v1389 = vld [vmem:[#allocation2 + $0x1a8] sm:$0xff]
        %v1390 = vld [vmem:[#allocation2 + $0x1b0] sm:$0xff]
        %v1391 = vld [vmem:[#allocation2 + $0x1b8] sm:$0xff]
        %v1392 = vld [vmem:[#allocation2 + $0x1c0] sm:$0xff]
        %v1393 = vld [vmem:[#allocation2 + $0x1c8] sm:$0xff]
        %v1394 = vld [vmem:[#allocation2 + $0x1d0] sm:$0xff]
        %v1395 = vld [vmem:[#allocation2 + $0x1d8] sm:$0xff]
        %v1396 = vld [vmem:[#allocation2 + $0x1e0] sm:$0xff]
        %v1397 = vld [vmem:[#allocation2 + $0x1e8] sm:$0xff]
        %v1398 = vld [vmem:[#allocation2 + $0x1f0] sm:$0xff]
        %v1399 = vld [vmem:[#allocation2 + $0x1f8] sm:$0xff]
        %v1400 = vadd.f32 %v1336, %v1177
        %v1401 = vadd.f32 %v1337, %v1179
        %v1402 = vadd.f32 %v1338, %v1182
        %v1403 = vadd.f32 %v1339, %v1184
        %v1404 = vadd.f32 %v1340, %v1187
        %v1405 = vadd.f32 %v1341, %v1189
        %v1406 = vadd.f32 %v1342, %v1192
        %v1407 = vadd.f32 %v1343, %v1194
        %v1408 = vadd.f32 %v1344, %v1197
        %v1409 = vadd.f32 %v1345, %v1199
        %v1410 = vadd.f32 %v1346, %v1202
        %v1411 = vadd.f32 %v1347, %v1204
        %v1412 = vadd.f32 %v1348, %v1207
        %v1413 = vadd.f32 %v1349, %v1209
        %v1414 = vadd.f32 %v1350, %v1212
        %v1415 = vadd.f32 %v1351, %v1214
        %v1416 = vadd.f32 %v1352, %v1217
        %v1417 = vadd.f32 %v1353, %v1219
        %v1418 = vadd.f32 %v1354, %v1222
        %v1419 = vadd.f32 %v1355, %v1224
        %v1420 = vadd.f32 %v1356, %v1227
        %v1421 = vadd.f32 %v1357, %v1229
        %v1422 = vadd.f32 %v1358, %v1232
        %v1423 = vadd.f32 %v1359, %v1234
        %v1424 = vadd.f32 %v1360, %v1237
        %v1425 = vadd.f32 %v1361, %v1239
        %v1426 = vadd.f32 %v1362, %v1242
        %v1427 = vadd.f32 %v1363, %v1244
        %v1428 = vadd.f32 %v1364, %v1247
        %v1429 = vadd.f32 %v1365, %v1249
        %v1430 = vadd.f32 %v1366, %v1252
        %v1431 = vadd.f32 %v1367, %v1254
        %v1432 = vadd.f32 %v1368, %v1257
        %v1433 = vadd.f32 %v1369, %v1259
        %v1434 = vadd.f32 %v1370, %v1262
        %v1435 = vadd.f32 %v1371, %v1264
        %v1436 = vadd.f32 %v1372, %v1267
        %v1437 = vadd.f32 %v1373, %v1269
        %v1438 = vadd.f32 %v1374, %v1272
        %v1439 = vadd.f32 %v1375, %v1274
        %v1440 = vadd.f32 %v1376, %v1277
        %v1441 = vadd.f32 %v1377, %v1279
        %v1442 = vadd.f32 %v1378, %v1282
        %v1443 = vadd.f32 %v1379, %v1284
        %v1444 = vadd.f32 %v1380, %v1287
        %v1445 = vadd.f32 %v1381, %v1289
        %v1446 = vadd.f32 %v1382, %v1292
        %v1447 = vadd.f32 %v1383, %v1294
        %v1448 = vadd.f32 %v1384, %v1297
        %v1449 = vadd.f32 %v1385, %v1299
        %v1450 = vadd.f32 %v1386, %v1302
        %v1451 = vadd.f32 %v1387, %v1304
        %v1452 = vadd.f32 %v1388, %v1307
        %v1453 = vadd.f32 %v1389, %v1309
        %v1454 = vadd.f32 %v1390, %v1312
        %v1455 = vadd.f32 %v1391, %v1314
        %v1456 = vadd.f32 %v1392, %v1317
        %v1457 = vadd.f32 %v1393, %v1319
        %v1458 = vadd.f32 %v1394, %v1322
        %v1459 = vadd.f32 %v1395, %v1324
        %v1460 = vadd.f32 %v1396, %v1327
        %v1461 = vadd.f32 %v1397, %v1329
        %v1462 = vadd.f32 %v1398, %v1332
        %v1463 = vadd.f32 %v1399, %v1334
        %1464 = vst [vmem:[#allocation2] sm:$0xff] %v1400
        %1465 = vst [vmem:[#allocation2 + $0x8] sm:$0xff] %v1401
        %1466 = vst [vmem:[#allocation2 + $0x10] sm:$0xff] %v1402
        %1467 = vst [vmem:[#allocation2 + $0x18] sm:$0xff] %v1403
        %1468 = vst [vmem:[#allocation2 + $0x20] sm:$0xff] %v1404
        %1469 = vst [vmem:[#allocation2 + $0x28] sm:$0xff] %v1405
        %1470 = vst [vmem:[#allocation2 + $0x30] sm:$0xff] %v1406
        %1471 = vst [vmem:[#allocation2 + $0x38] sm:$0xff] %v1407
        %1472 = vst [vmem:[#allocation2 + $0x40] sm:$0xff] %v1408
        %1473 = vst [vmem:[#allocation2 + $0x48] sm:$0xff] %v1409
        %1474 = vst [vmem:[#allocation2 + $0x50] sm:$0xff] %v1410
        %1475 = vst [vmem:[#allocation2 + $0x58] sm:$0xff] %v1411
        %1476 = vst [vmem:[#allocation2 + $0x60] sm:$0xff] %v1412
        %1477 = vst [vmem:[#allocation2 + $0x68] sm:$0xff] %v1413
        %1478 = vst [vmem:[#allocation2 + $0x70] sm:$0xff] %v1414
        %1479 = vst [vmem:[#allocation2 + $0x78] sm:$0xff] %v1415
        %1480 = vst [vmem:[#allocation2 + $0x80] sm:$0xff] %v1416
        %1481 = vst [vmem:[#allocation2 + $0x88] sm:$0xff] %v1417
        %1482 = vst [vmem:[#allocation2 + $0x90] sm:$0xff] %v1418
        %1483 = vst [vmem:[#allocation2 + $0x98] sm:$0xff] %v1419
        %1484 = vst [vmem:[#allocation2 + $0xa0] sm:$0xff] %v1420
        %1485 = vst [vmem:[#allocation2 + $0xa8] sm:$0xff] %v1421
        %1486 = vst [vmem:[#allocation2 + $0xb0] sm:$0xff] %v1422
        %1487 = vst [vmem:[#allocation2 + $0xb8] sm:$0xff] %v1423
        %1488 = vst [vmem:[#allocation2 + $0xc0] sm:$0xff] %v1424
        %1489 = vst [vmem:[#allocation2 + $0xc8] sm:$0xff] %v1425
        %1490 = vst [vmem:[#allocation2 + $0xd0] sm:$0xff] %v1426
        %1491 = vst [vmem:[#allocation2 + $0xd8] sm:$0xff] %v1427
        %1492 = vst [vmem:[#allocation2 + $0xe0] sm:$0xff] %v1428
        %1493 = vst [vmem:[#allocation2 + $0xe8] sm:$0xff] %v1429
        %1494 = vst [vmem:[#allocation2 + $0xf0] sm:$0xff] %v1430
        %1495 = vst [vmem:[#allocation2 + $0xf8] sm:$0xff] %v1431
        %1496 = vst [vmem:[#allocation2 + $0x100] sm:$0xff] %v1432
        %1497 = vst [vmem:[#allocation2 + $0x108] sm:$0xff] %v1433
        %1498 = vst [vmem:[#allocation2 + $0x110] sm:$0xff] %v1434
        %1499 = vst [vmem:[#allocation2 + $0x118] sm:$0xff] %v1435
        %1500 = vst [vmem:[#allocation2 + $0x120] sm:$0xff] %v1436
        %1501 = vst [vmem:[#allocation2 + $0x128] sm:$0xff] %v1437
        %1502 = vst [vmem:[#allocation2 + $0x130] sm:$0xff] %v1438
        %1503 = vst [vmem:[#allocation2 + $0x138] sm:$0xff] %v1439
        %1504 = vst [vmem:[#allocation2 + $0x140] sm:$0xff] %v1440
        %1505 = vst [vmem:[#allocation2 + $0x148] sm:$0xff] %v1441
        %1506 = vst [vmem:[#allocation2 + $0x150] sm:$0xff] %v1442
        %1507 = vst [vmem:[#allocation2 + $0x158] sm:$0xff] %v1443
        %1508 = vst [vmem:[#allocation2 + $0x160] sm:$0xff] %v1444
        %1509 = vst [vmem:[#allocation2 + $0x168] sm:$0xff] %v1445
        %1510 = vst [vmem:[#allocation2 + $0x170] sm:$0xff] %v1446
        %1511 = vst [vmem:[#allocation2 + $0x178] sm:$0xff] %v1447
        %1512 = vst [vmem:[#allocation2 + $0x180] sm:$0xff] %v1448
        %1513 = vst [vmem:[#allocation2 + $0x188] sm:$0xff] %v1449
        %1514 = vst [vmem:[#allocation2 + $0x190] sm:$0xff] %v1450
        %1515 = vst [vmem:[#allocation2 + $0x198] sm:$0xff] %v1451
        %1516 = vst [vmem:[#allocation2 + $0x1a0] sm:$0xff] %v1452
        %1517 = vst [vmem:[#allocation2 + $0x1a8] sm:$0xff] %v1453
        %1518 = vst [vmem:[#allocation2 + $0x1b0] sm:$0xff] %v1454
        %1519 = vst [vmem:[#allocation2 + $0x1b8] sm:$0xff] %v1455
        %1520 = vst [vmem:[#allocation2 + $0x1c0] sm:$0xff] %v1456
        %1521 = vst [vmem:[#allocation2 + $0x1c8] sm:$0xff] %v1457
        %1522 = vst [vmem:[#allocation2 + $0x1d0] sm:$0xff] %v1458
        %1523 = vst [vmem:[#allocation2 + $0x1d8] sm:$0xff] %v1459
        %1524 = vst [vmem:[#allocation2 + $0x1e0] sm:$0xff] %v1460
        %1525 = vst [vmem:[#allocation2 + $0x1e8] sm:$0xff] %v1461
        %1526 = vst [vmem:[#allocation2 + $0x1f0] sm:$0xff] %v1462
        %1527 = vst [vmem:[#allocation2 + $0x1f8] sm:$0xff] %v1463
        %vm1528 = vcmask 1046528
        %v1529 = vrot.slane %v466, 1
        %v1530 = vrot.slane %v467, 1
        %v1531 = vsel %vm1528, %v1529, %v1530
        %v1532 = vrot.slane %v468, 1
        %v1533 = vsel %vm1528, %v1530, %v1532
        %v1534 = vrot.slane %v469, 1
        %v1535 = vsel %vm1528, %v1532, %v1534
        %v1536 = vrot.slane %v470, 1
        %v1537 = vsel %vm1528, %v1534, %v1536
        %v1538 = vrot.slane %v471, 1
        %v1539 = vsel %vm1528, %v1536, %v1538
        %v1540 = vrot.slane %v472, 1
        %v1541 = vsel %vm1528, %v1538, %v1540
        %v1542 = vrot.slane %v473, 1
        %v1543 = vsel %vm1528, %v1540, %v1542
        %v1544 = vrot.slane %v474, 1
        %v1545 = vsel %vm1528, %v1542, %v1544
        %v1546 = vrot.slane %v475, 1
        %v1547 = vsel %vm1528, %v1544, %v1546
        %v1548 = vrot.slane %v476, 1
        %v1549 = vsel %vm1528, %v1546, %v1548
        %v1550 = vrot.slane %v477, 1
        %v1551 = vsel %vm1528, %v1548, %v1550
        %v1552 = vrot.slane %v478, 1
        %v1553 = vsel %vm1528, %v1550, %v1552
        %v1554 = vrot.slane %v479, 1
        %v1555 = vsel %vm1528, %v1552, %v1554
        %v1556 = vrot.slane %v480, 1
        %v1557 = vsel %vm1528, %v1554, %v1556
        %v1558 = vrot.slane %v481, 1
        %v1559 = vsel %vm1528, %v1556, %v1558
        %v1560 = vrot.slane %v482, 1
        %v1561 = vsel %vm1528, %v1558, %v1560
        %v1562 = vrot.slane %v483, 1
        %v1563 = vsel %vm1528, %v1560, %v1562
        %v1564 = vrot.slane %v484, 1
        %v1565 = vsel %vm1528, %v1562, %v1564
        %v1566 = vrot.slane %v485, 1
        %v1567 = vsel %vm1528, %v1564, %v1566
        %v1568 = vrot.slane %v486, 1
        %v1569 = vsel %vm1528, %v1566, %v1568
        %v1570 = vrot.slane %v487, 1
        %v1571 = vsel %vm1528, %v1568, %v1570
        %v1572 = vrot.slane %v488, 1
        %v1573 = vsel %vm1528, %v1570, %v1572
        %v1574 = vrot.slane %v489, 1
        %v1575 = vsel %vm1528, %v1572, %v1574
        %v1576 = vrot.slane %v490, 1
        %v1577 = vsel %vm1528, %v1574, %v1576
        %v1578 = vrot.slane %v491, 1
        %v1579 = vsel %vm1528, %v1576, %v1578
        %v1580 = vrot.slane %v492, 1
        %v1581 = vsel %vm1528, %v1578, %v1580
        %v1582 = vrot.slane %v493, 1
        %v1583 = vsel %vm1528, %v1580, %v1582
        %v1584 = vrot.slane %v494, 1
        %v1585 = vsel %vm1528, %v1582, %v1584
        %v1586 = vrot.slane %v495, 1
        %v1587 = vsel %vm1528, %v1584, %v1586
        %v1588 = vrot.slane %v496, 1
        %v1589 = vsel %vm1528, %v1586, %v1588
        %v1590 = vrot.slane %v497, 1
        %v1591 = vsel %vm1528, %v1588, %v1590
        %vm1623 = vcmask 1046528
        %v1626 = vsel %vm1623, %v1590, 0
        %s1628 = scalar_lea.vmem [#allocation6], 128
        %v1629 = vld [vmem:[%s1628] sm:$0xf]
        %v1630 = vld [vmem:[%s1628 + $0x4] sm:$0xf]
        %v1631 = vld [vmem:[%s1628 + $0x8] sm:$0xf]
        %v1632 = vld [vmem:[%s1628 + $0xc] sm:$0xf]
        %v1633 = vld [vmem:[%s1628 + $0x10] sm:$0xf]
        %v1634 = vld [vmem:[%s1628 + $0x14] sm:$0xf]
        %v1635 = vld [vmem:[%s1628 + $0x18] sm:$0xf]
        %v1636 = vld [vmem:[%s1628 + $0x1c] sm:$0xf]
        %v1637 = vld [vmem:[%s1628 + $0x20] sm:$0xf]
        %v1638 = vld [vmem:[%s1628 + $0x24] sm:$0xf]
        %v1639 = vld [vmem:[%s1628 + $0x28] sm:$0xf]
        %v1640 = vld [vmem:[%s1628 + $0x2c] sm:$0xf]
        %v1641 = vld [vmem:[%s1628 + $0x30] sm:$0xf]
        %v1642 = vld [vmem:[%s1628 + $0x34] sm:$0xf]
        %v1643 = vld [vmem:[%s1628 + $0x38] sm:$0xf]
        %v1644 = vld [vmem:[%s1628 + $0x3c] sm:$0xf]
        %v1661 = vunpack.c.l.b16 %v1629
        %v1662 = vunpack.c.l.b16 %v1630
        %v1663 = vunpack.c.l.b16 %v1631
        %v1664 = vunpack.c.l.b16 %v1632
        %v1665 = vunpack.c.l.b16 %v1633
        %v1666 = vunpack.c.l.b16 %v1634
        %v1667 = vunpack.c.l.b16 %v1635
        %v1668 = vunpack.c.l.b16 %v1636
        %v1669 = vunpack.c.l.b16 %v1637
        %v1670 = vunpack.c.l.b16 %v1638
        %v1671 = vunpack.c.l.b16 %v1639
        %v1672 = vunpack.c.l.b16 %v1640
        %v1673 = vunpack.c.l.b16 %v1641
        %v1674 = vunpack.c.l.b16 %v1642
        %v1675 = vunpack.c.l.b16 %v1643
        %v1676 = vunpack.c.l.b16 %v1644
        %v1677 = vpack.c.b16 %v1662, %v1661
        %v1678 = vpack.c.b16 %v1664, %v1663
        %v1679 = vpack.c.b16 %v1666, %v1665
        %v1680 = vpack.c.b16 %v1668, %v1667
        %v1681 = vpack.c.b16 %v1670, %v1669
        %v1682 = vpack.c.b16 %v1672, %v1671
        %v1683 = vpack.c.b16 %v1674, %v1673
        %v1684 = vpack.c.b16 %v1676, %v1675
        %1693 = vmatpush.bf16.msra.mxu0 %v1684
        %1694 = vmatpush.bf16.msra.mxu0 %v1683
        %1695 = vmatpush.bf16.msra.mxu0 %v1682
        %1696 = vmatpush.bf16.msra.mxu0 %v1681
        %1697 = vmatpush.bf16.msra.mxu0 %v1680
        %1698 = vmatpush.bf16.msra.mxu0 %v1679
        %1699 = vmatpush.bf16.msra.mxu0 %v1678
        %1700 = vmatpush.bf16.msra.mxu0 %v1677
        %1701 = vmatmul.bf16.gmra.mxu0 %v1531
        %v1702 = vpop.f32.mrf.mxu0
        %v1703 = vadd.f32 0.0, %v1702
        %v1704 = vpop.f32.mrf.mxu0
        %v1705 = vadd.f32 0.0, %v1704
        %1706 = vmatmul.bf16.gmra.mxu0 %v1533
        %v1707 = vpop.f32.mrf.mxu0
        %v1708 = vadd.f32 0.0, %v1707
        %v1709 = vpop.f32.mrf.mxu0
        %v1710 = vadd.f32 0.0, %v1709
        %1711 = vmatmul.bf16.gmra.mxu0 %v1535
        %v1712 = vpop.f32.mrf.mxu0
        %v1713 = vadd.f32 0.0, %v1712
        %v1714 = vpop.f32.mrf.mxu0
        %v1715 = vadd.f32 0.0, %v1714
        %1716 = vmatmul.bf16.gmra.mxu0 %v1537
        %v1717 = vpop.f32.mrf.mxu0
        %v1718 = vadd.f32 0.0, %v1717
        %v1719 = vpop.f32.mrf.mxu0
        %v1720 = vadd.f32 0.0, %v1719
        %1721 = vmatmul.bf16.gmra.mxu0 %v1539
        %v1722 = vpop.f32.mrf.mxu0
        %v1723 = vadd.f32 0.0, %v1722
        %v1724 = vpop.f32.mrf.mxu0
        %v1725 = vadd.f32 0.0, %v1724
        %1726 = vmatmul.bf16.gmra.mxu0 %v1541
        %v1727 = vpop.f32.mrf.mxu0
        %v1728 = vadd.f32 0.0, %v1727
        %v1729 = vpop.f32.mrf.mxu0
        %v1730 = vadd.f32 0.0, %v1729
        %1731 = vmatmul.bf16.gmra.mxu0 %v1543
        %v1732 = vpop.f32.mrf.mxu0
        %v1733 = vadd.f32 0.0, %v1732
        %v1734 = vpop.f32.mrf.mxu0
        %v1735 = vadd.f32 0.0, %v1734
        %1736 = vmatmul.bf16.gmra.mxu0 %v1545
        %v1737 = vpop.f32.mrf.mxu0
        %v1738 = vadd.f32 0.0, %v1737
        %v1739 = vpop.f32.mrf.mxu0
        %v1740 = vadd.f32 0.0, %v1739
        %1741 = vmatmul.bf16.gmra.mxu0 %v1547
        %v1742 = vpop.f32.mrf.mxu0
        %v1743 = vadd.f32 0.0, %v1742
        %v1744 = vpop.f32.mrf.mxu0
        %v1745 = vadd.f32 0.0, %v1744
        %1746 = vmatmul.bf16.gmra.mxu0 %v1549
        %v1747 = vpop.f32.mrf.mxu0
        %v1748 = vadd.f32 0.0, %v1747
        %v1749 = vpop.f32.mrf.mxu0
        %v1750 = vadd.f32 0.0, %v1749
        %1751 = vmatmul.bf16.gmra.mxu0 %v1551
        %v1752 = vpop.f32.mrf.mxu0
        %v1753 = vadd.f32 0.0, %v1752
        %v1754 = vpop.f32.mrf.mxu0
        %v1755 = vadd.f32 0.0, %v1754
        %1756 = vmatmul.bf16.gmra.mxu0 %v1553
        %v1757 = vpop.f32.mrf.mxu0
        %v1758 = vadd.f32 0.0, %v1757
        %v1759 = vpop.f32.mrf.mxu0
        %v1760 = vadd.f32 0.0, %v1759
        %1761 = vmatmul.bf16.gmra.mxu0 %v1555
        %v1762 = vpop.f32.mrf.mxu0
        %v1763 = vadd.f32 0.0, %v1762
        %v1764 = vpop.f32.mrf.mxu0
        %v1765 = vadd.f32 0.0, %v1764
        %1766 = vmatmul.bf16.gmra.mxu0 %v1557
        %v1767 = vpop.f32.mrf.mxu0
        %v1768 = vadd.f32 0.0, %v1767
        %v1769 = vpop.f32.mrf.mxu0
        %v1770 = vadd.f32 0.0, %v1769
        %1771 = vmatmul.bf16.gmra.mxu0 %v1559
        %v1772 = vpop.f32.mrf.mxu0
        %v1773 = vadd.f32 0.0, %v1772
        %v1774 = vpop.f32.mrf.mxu0
        %v1775 = vadd.f32 0.0, %v1774
        %1776 = vmatmul.bf16.gmra.mxu0 %v1561
        %v1777 = vpop.f32.mrf.mxu0
        %v1778 = vadd.f32 0.0, %v1777
        %v1779 = vpop.f32.mrf.mxu0
        %v1780 = vadd.f32 0.0, %v1779
        %1781 = vmatmul.bf16.gmra.mxu0 %v1563
        %v1782 = vpop.f32.mrf.mxu0
        %v1783 = vadd.f32 0.0, %v1782
        %v1784 = vpop.f32.mrf.mxu0
        %v1785 = vadd.f32 0.0, %v1784
        %1786 = vmatmul.bf16.gmra.mxu0 %v1565
        %v1787 = vpop.f32.mrf.mxu0
        %v1788 = vadd.f32 0.0, %v1787
        %v1789 = vpop.f32.mrf.mxu0
        %v1790 = vadd.f32 0.0, %v1789
        %1791 = vmatmul.bf16.gmra.mxu0 %v1567
        %v1792 = vpop.f32.mrf.mxu0
        %v1793 = vadd.f32 0.0, %v1792
        %v1794 = vpop.f32.mrf.mxu0
        %v1795 = vadd.f32 0.0, %v1794
        %1796 = vmatmul.bf16.gmra.mxu0 %v1569
        %v1797 = vpop.f32.mrf.mxu0
        %v1798 = vadd.f32 0.0, %v1797
        %v1799 = vpop.f32.mrf.mxu0
        %v1800 = vadd.f32 0.0, %v1799
        %1801 = vmatmul.bf16.gmra.mxu0 %v1571
        %v1802 = vpop.f32.mrf.mxu0
        %v1803 = vadd.f32 0.0, %v1802
        %v1804 = vpop.f32.mrf.mxu0
        %v1805 = vadd.f32 0.0, %v1804
        %1806 = vmatmul.bf16.gmra.mxu0 %v1573
        %v1807 = vpop.f32.mrf.mxu0
        %v1808 = vadd.f32 0.0, %v1807
        %v1809 = vpop.f32.mrf.mxu0
        %v1810 = vadd.f32 0.0, %v1809
        %1811 = vmatmul.bf16.gmra.mxu0 %v1575
        %v1812 = vpop.f32.mrf.mxu0
        %v1813 = vadd.f32 0.0, %v1812
        %v1814 = vpop.f32.mrf.mxu0
        %v1815 = vadd.f32 0.0, %v1814
        %1816 = vmatmul.bf16.gmra.mxu0 %v1577
        %v1817 = vpop.f32.mrf.mxu0
        %v1818 = vadd.f32 0.0, %v1817
        %v1819 = vpop.f32.mrf.mxu0
        %v1820 = vadd.f32 0.0, %v1819
        %1821 = vmatmul.bf16.gmra.mxu0 %v1579
        %v1822 = vpop.f32.mrf.mxu0
        %v1823 = vadd.f32 0.0, %v1822
        %v1824 = vpop.f32.mrf.mxu0
        %v1825 = vadd.f32 0.0, %v1824
        %1826 = vmatmul.bf16.gmra.mxu0 %v1581
        %v1827 = vpop.f32.mrf.mxu0
        %v1828 = vadd.f32 0.0, %v1827
        %v1829 = vpop.f32.mrf.mxu0
        %v1830 = vadd.f32 0.0, %v1829
        %1831 = vmatmul.bf16.gmra.mxu0 %v1583
        %v1832 = vpop.f32.mrf.mxu0
        %v1833 = vadd.f32 0.0, %v1832
        %v1834 = vpop.f32.mrf.mxu0
        %v1835 = vadd.f32 0.0, %v1834
        %1836 = vmatmul.bf16.gmra.mxu0 %v1585
        %v1837 = vpop.f32.mrf.mxu0
        %v1838 = vadd.f32 0.0, %v1837
        %v1839 = vpop.f32.mrf.mxu0
        %v1840 = vadd.f32 0.0, %v1839
        %1841 = vmatmul.bf16.gmra.mxu0 %v1587
        %v1842 = vpop.f32.mrf.mxu0
        %v1843 = vadd.f32 0.0, %v1842
        %v1844 = vpop.f32.mrf.mxu0
        %v1845 = vadd.f32 0.0, %v1844
        %1846 = vmatmul.bf16.gmra.mxu0 %v1589
        %v1847 = vpop.f32.mrf.mxu0
        %v1848 = vadd.f32 0.0, %v1847
        %v1849 = vpop.f32.mrf.mxu0
        %v1850 = vadd.f32 0.0, %v1849
        %1851 = vmatmul.bf16.gmra.mxu0 %v1591
        %v1852 = vpop.f32.mrf.mxu0
        %v1853 = vadd.f32 0.0, %v1852
        %v1854 = vpop.f32.mrf.mxu0
        %v1855 = vadd.f32 0.0, %v1854
        %1856 = vmatmul.bf16.gmra.mxu0 %v1626
        %v1857 = vpop.f32.mrf.mxu0
        %v1858 = vadd.f32 0.0, %v1857
        %v1859 = vpop.f32.mrf.mxu0
        %v1860 = vadd.f32 0.0, %v1859
        %1861 = vdwg.mxu0
        %v1862 = vld [vmem:[#allocation2] sm:$0xff]
        %v1863 = vld [vmem:[#allocation2 + $0x8] sm:$0xff]
        %v1864 = vld [vmem:[#allocation2 + $0x10] sm:$0xff]
        %v1865 = vld [vmem:[#allocation2 + $0x18] sm:$0xff]
        %v1866 = vld [vmem:[#allocation2 + $0x20] sm:$0xff]
        %v1867 = vld [vmem:[#allocation2 + $0x28] sm:$0xff]
        %v1868 = vld [vmem:[#allocation2 + $0x30] sm:$0xff]
        %v1869 = vld [vmem:[#allocation2 + $0x38] sm:$0xff]
        %v1870 = vld [vmem:[#allocation2 + $0x40] sm:$0xff]
        %v1871 = vld [vmem:[#allocation2 + $0x48] sm:$0xff]
        %v1872 = vld [vmem:[#allocation2 + $0x50] sm:$0xff]
        %v1873 = vld [vmem:[#allocation2 + $0x58] sm:$0xff]
        %v1874 = vld [vmem:[#allocation2 + $0x60] sm:$0xff]
        %v1875 = vld [vmem:[#allocation2 + $0x68] sm:$0xff]
        %v1876 = vld [vmem:[#allocation2 + $0x70] sm:$0xff]
        %v1877 = vld [vmem:[#allocation2 + $0x78] sm:$0xff]
        %v1878 = vld [vmem:[#allocation2 + $0x80] sm:$0xff]
        %v1879 = vld [vmem:[#allocation2 + $0x88] sm:$0xff]
        %v1880 = vld [vmem:[#allocation2 + $0x90] sm:$0xff]
        %v1881 = vld [vmem:[#allocation2 + $0x98] sm:$0xff]
        %v1882 = vld [vmem:[#allocation2 + $0xa0] sm:$0xff]
        %v1883 = vld [vmem:[#allocation2 + $0xa8] sm:$0xff]
        %v1884 = vld [vmem:[#allocation2 + $0xb0] sm:$0xff]
        %v1885 = vld [vmem:[#allocation2 + $0xb8] sm:$0xff]
        %v1886 = vld [vmem:[#allocation2 + $0xc0] sm:$0xff]
        %v1887 = vld [vmem:[#allocation2 + $0xc8] sm:$0xff]
        %v1888 = vld [vmem:[#allocation2 + $0xd0] sm:$0xff]
        %v1889 = vld [vmem:[#allocation2 + $0xd8] sm:$0xff]
        %v1890 = vld [vmem:[#allocation2 + $0xe0] sm:$0xff]
        %v1891 = vld [vmem:[#allocation2 + $0xe8] sm:$0xff]
        %v1892 = vld [vmem:[#allocation2 + $0xf0] sm:$0xff]
        %v1893 = vld [vmem:[#allocation2 + $0xf8] sm:$0xff]
        %v1894 = vld [vmem:[#allocation2 + $0x100] sm:$0xff]
        %v1895 = vld [vmem:[#allocation2 + $0x108] sm:$0xff]
        %v1896 = vld [vmem:[#allocation2 + $0x110] sm:$0xff]
        %v1897 = vld [vmem:[#allocation2 + $0x118] sm:$0xff]
        %v1898 = vld [vmem:[#allocation2 + $0x120] sm:$0xff]
        %v1899 = vld [vmem:[#allocation2 + $0x128] sm:$0xff]
        %v1900 = vld [vmem:[#allocation2 + $0x130] sm:$0xff]
        %v1901 = vld [vmem:[#allocation2 + $0x138] sm:$0xff]
        %v1902 = vld [vmem:[#allocation2 + $0x140] sm:$0xff]
        %v1903 = vld [vmem:[#allocation2 + $0x148] sm:$0xff]
        %v1904 = vld [vmem:[#allocation2 + $0x150] sm:$0xff]
        %v1905 = vld [vmem:[#allocation2 + $0x158] sm:$0xff]
        %v1906 = vld [vmem:[#allocation2 + $0x160] sm:$0xff]
        %v1907 = vld [vmem:[#allocation2 + $0x168] sm:$0xff]
        %v1908 = vld [vmem:[#allocation2 + $0x170] sm:$0xff]
        %v1909 = vld [vmem:[#allocation2 + $0x178] sm:$0xff]
        %v1910 = vld [vmem:[#allocation2 + $0x180] sm:$0xff]
        %v1911 = vld [vmem:[#allocation2 + $0x188] sm:$0xff]
        %v1912 = vld [vmem:[#allocation2 + $0x190] sm:$0xff]
        %v1913 = vld [vmem:[#allocation2 + $0x198] sm:$0xff]
        %v1914 = vld [vmem:[#allocation2 + $0x1a0] sm:$0xff]
        %v1915 = vld [vmem:[#allocation2 + $0x1a8] sm:$0xff]
        %v1916 = vld [vmem:[#allocation2 + $0x1b0] sm:$0xff]
        %v1917 = vld [vmem:[#allocation2 + $0x1b8] sm:$0xff]
        %v1918 = vld [vmem:[#allocation2 + $0x1c0] sm:$0xff]
        %v1919 = vld [vmem:[#allocation2 + $0x1c8] sm:$0xff]
        %v1920 = vld [vmem:[#allocation2 + $0x1d0] sm:$0xff]
        %v1921 = vld [vmem:[#allocation2 + $0x1d8] sm:$0xff]
        %v1922 = vld [vmem:[#allocation2 + $0x1e0] sm:$0xff]
        %v1923 = vld [vmem:[#allocation2 + $0x1e8] sm:$0xff]
        %v1924 = vld [vmem:[#allocation2 + $0x1f0] sm:$0xff]
        %v1925 = vld [vmem:[#allocation2 + $0x1f8] sm:$0xff]
        %v1926 = vadd.f32 %v1862, %v1703
        %v1927 = vadd.f32 %v1863, %v1705
        %v1928 = vadd.f32 %v1864, %v1708
        %v1929 = vadd.f32 %v1865, %v1710
        %v1930 = vadd.f32 %v1866, %v1713
        %v1931 = vadd.f32 %v1867, %v1715
        %v1932 = vadd.f32 %v1868, %v1718
        %v1933 = vadd.f32 %v1869, %v1720
        %v1934 = vadd.f32 %v1870, %v1723
        %v1935 = vadd.f32 %v1871, %v1725
        %v1936 = vadd.f32 %v1872, %v1728
        %v1937 = vadd.f32 %v1873, %v1730
        %v1938 = vadd.f32 %v1874, %v1733
        %v1939 = vadd.f32 %v1875, %v1735
        %v1940 = vadd.f32 %v1876, %v1738
        %v1941 = vadd.f32 %v1877, %v1740
        %v1942 = vadd.f32 %v1878, %v1743
        %v1943 = vadd.f32 %v1879, %v1745
        %v1944 = vadd.f32 %v1880, %v1748
        %v1945 = vadd.f32 %v1881, %v1750
        %v1946 = vadd.f32 %v1882, %v1753
        %v1947 = vadd.f32 %v1883, %v1755
        %v1948 = vadd.f32 %v1884, %v1758
        %v1949 = vadd.f32 %v1885, %v1760
        %v1950 = vadd.f32 %v1886, %v1763
        %v1951 = vadd.f32 %v1887, %v1765
        %v1952 = vadd.f32 %v1888, %v1768
        %v1953 = vadd.f32 %v1889, %v1770
        %v1954 = vadd.f32 %v1890, %v1773
        %v1955 = vadd.f32 %v1891, %v1775
        %v1956 = vadd.f32 %v1892, %v1778
        %v1957 = vadd.f32 %v1893, %v1780
        %v1958 = vadd.f32 %v1894, %v1783
        %v1959 = vadd.f32 %v1895, %v1785
        %v1960 = vadd.f32 %v1896, %v1788
        %v1961 = vadd.f32 %v1897, %v1790
        %v1962 = vadd.f32 %v1898, %v1793
        %v1963 = vadd.f32 %v1899, %v1795
        %v1964 = vadd.f32 %v1900, %v1798
        %v1965 = vadd.f32 %v1901, %v1800
        %v1966 = vadd.f32 %v1902, %v1803
        %v1967 = vadd.f32 %v1903, %v1805
        %v1968 = vadd.f32 %v1904, %v1808
        %v1969 = vadd.f32 %v1905, %v1810
        %v1970 = vadd.f32 %v1906, %v1813
        %v1971 = vadd.f32 %v1907, %v1815
        %v1972 = vadd.f32 %v1908, %v1818
        %v1973 = vadd.f32 %v1909, %v1820
        %v1974 = vadd.f32 %v1910, %v1823
        %v1975 = vadd.f32 %v1911, %v1825
        %v1976 = vadd.f32 %v1912, %v1828
        %v1977 = vadd.f32 %v1913, %v1830
        %v1978 = vadd.f32 %v1914, %v1833
        %v1979 = vadd.f32 %v1915, %v1835
        %v1980 = vadd.f32 %v1916, %v1838
        %v1981 = vadd.f32 %v1917, %v1840
        %v1982 = vadd.f32 %v1918, %v1843
        %v1983 = vadd.f32 %v1919, %v1845
        %v1984 = vadd.f32 %v1920, %v1848
        %v1985 = vadd.f32 %v1921, %v1850
        %v1986 = vadd.f32 %v1922, %v1853
        %v1987 = vadd.f32 %v1923, %v1855
        %v1988 = vadd.f32 %v1924, %v1858
        %v1989 = vadd.f32 %v1925, %v1860
        %1990 = vst [vmem:[#allocation2] sm:$0xff] %v1926
        %1991 = vst [vmem:[#allocation2 + $0x8] sm:$0xff] %v1927
        %1992 = vst [vmem:[#allocation2 + $0x10] sm:$0xff] %v1928
        %1993 = vst [vmem:[#allocation2 + $0x18] sm:$0xff] %v1929
        %1994 = vst [vmem:[#allocation2 + $0x20] sm:$0xff] %v1930
        %1995 = vst [vmem:[#allocation2 + $0x28] sm:$0xff] %v1931
        %1996 = vst [vmem:[#allocation2 + $0x30] sm:$0xff] %v1932
        %1997 = vst [vmem:[#allocation2 + $0x38] sm:$0xff] %v1933
        %1998 = vst [vmem:[#allocation2 + $0x40] sm:$0xff] %v1934
        %1999 = vst [vmem:[#allocation2 + $0x48] sm:$0xff] %v1935
        %2000 = vst [vmem:[#allocation2 + $0x50] sm:$0xff] %v1936
        %2001 = vst [vmem:[#allocation2 + $0x58] sm:$0xff] %v1937
        %2002 = vst [vmem:[#allocation2 + $0x60] sm:$0xff] %v1938
        %2003 = vst [vmem:[#allocation2 + $0x68] sm:$0xff] %v1939
        %2004 = vst [vmem:[#allocation2 + $0x70] sm:$0xff] %v1940
        %2005 = vst [vmem:[#allocation2 + $0x78] sm:$0xff] %v1941
        %2006 = vst [vmem:[#allocation2 + $0x80] sm:$0xff] %v1942
        %2007 = vst [vmem:[#allocation2 + $0x88] sm:$0xff] %v1943
        %2008 = vst [vmem:[#allocation2 + $0x90] sm:$0xff] %v1944
        %2009 = vst [vmem:[#allocation2 + $0x98] sm:$0xff] %v1945
        %2010 = vst [vmem:[#allocation2 + $0xa0] sm:$0xff] %v1946
        %2011 = vst [vmem:[#allocation2 + $0xa8] sm:$0xff] %v1947
        %2012 = vst [vmem:[#allocation2 + $0xb0] sm:$0xff] %v1948
        %2013 = vst [vmem:[#allocation2 + $0xb8] sm:$0xff] %v1949
        %2014 = vst [vmem:[#allocation2 + $0xc0] sm:$0xff] %v1950
        %2015 = vst [vmem:[#allocation2 + $0xc8] sm:$0xff] %v1951
        %2016 = vst [vmem:[#allocation2 + $0xd0] sm:$0xff] %v1952
        %2017 = vst [vmem:[#allocation2 + $0xd8] sm:$0xff] %v1953
        %2018 = vst [vmem:[#allocation2 + $0xe0] sm:$0xff] %v1954
        %2019 = vst [vmem:[#allocation2 + $0xe8] sm:$0xff] %v1955
        %2020 = vst [vmem:[#allocation2 + $0xf0] sm:$0xff] %v1956
        %2021 = vst [vmem:[#allocation2 + $0xf8] sm:$0xff] %v1957
        %2022 = vst [vmem:[#allocation2 + $0x100] sm:$0xff] %v1958
        %2023 = vst [vmem:[#allocation2 + $0x108] sm:$0xff] %v1959
        %2024 = vst [vmem:[#allocation2 + $0x110] sm:$0xff] %v1960
        %2025 = vst [vmem:[#allocation2 + $0x118] sm:$0xff] %v1961
        %2026 = vst [vmem:[#allocation2 + $0x120] sm:$0xff] %v1962
        %2027 = vst [vmem:[#allocation2 + $0x128] sm:$0xff] %v1963
        %2028 = vst [vmem:[#allocation2 + $0x130] sm:$0xff] %v1964
        %2029 = vst [vmem:[#allocation2 + $0x138] sm:$0xff] %v1965
        %2030 = vst [vmem:[#allocation2 + $0x140] sm:$0xff] %v1966
        %2031 = vst [vmem:[#allocation2 + $0x148] sm:$0xff] %v1967
        %2032 = vst [vmem:[#allocation2 + $0x150] sm:$0xff] %v1968
        %2033 = vst [vmem:[#allocation2 + $0x158] sm:$0xff] %v1969
        %2034 = vst [vmem:[#allocation2 + $0x160] sm:$0xff] %v1970
        %2035 = vst [vmem:[#allocation2 + $0x168] sm:$0xff] %v1971
        %2036 = vst [vmem:[#allocation2 + $0x170] sm:$0xff] %v1972
        %2037 = vst [vmem:[#allocation2 + $0x178] sm:$0xff] %v1973
        %2038 = vst [vmem:[#allocation2 + $0x180] sm:$0xff] %v1974
        %2039 = vst [vmem:[#allocation2 + $0x188] sm:$0xff] %v1975
        %2040 = vst [vmem:[#allocation2 + $0x190] sm:$0xff] %v1976
        %2041 = vst [vmem:[#allocation2 + $0x198] sm:$0xff] %v1977
        %2042 = vst [vmem:[#allocation2 + $0x1a0] sm:$0xff] %v1978
        %2043 = vst [vmem:[#allocation2 + $0x1a8] sm:$0xff] %v1979
        %2044 = vst [vmem:[#allocation2 + $0x1b0] sm:$0xff] %v1980
        %2045 = vst [vmem:[#allocation2 + $0x1b8] sm:$0xff] %v1981
        %2046 = vst [vmem:[#allocation2 + $0x1c0] sm:$0xff] %v1982
        %2047 = vst [vmem:[#allocation2 + $0x1c8] sm:$0xff] %v1983
        %2048 = vst [vmem:[#allocation2 + $0x1d0] sm:$0xff] %v1984
        %2049 = vst [vmem:[#allocation2 + $0x1d8] sm:$0xff] %v1985
        %2050 = vst [vmem:[#allocation2 + $0x1e0] sm:$0xff] %v1986
        %2051 = vst [vmem:[#allocation2 + $0x1e8] sm:$0xff] %v1987
        %2052 = vst [vmem:[#allocation2 + $0x1f0] sm:$0xff] %v1988
        %2053 = vst [vmem:[#allocation2 + $0x1f8] sm:$0xff] %v1989
        %s2054 = scalar_lea.vmem %s220, 16 [#allocation3]
        %v2055 = vld [vmem:[%s2054] sm:$0xf]
        %v2056 = vld [vmem:[%s2054 + $0x4] sm:$0xf]
        %v2057 = vld [vmem:[%s2054 + $0x8] sm:$0xf]
        %v2058 = vld [vmem:[%s2054 + $0xc] sm:$0xf]
        %v2059 = vld [vmem:[%s2054 + $0x10] sm:$0xf]
        %v2060 = vld [vmem:[%s2054 + $0x14] sm:$0xf]
        %v2061 = vld [vmem:[%s2054 + $0x18] sm:$0xf]
        %v2062 = vld [vmem:[%s2054 + $0x1c] sm:$0xf]
        %v2063 = vld [vmem:[%s2054 + $0x20] sm:$0xf]
        %v2064 = vld [vmem:[%s2054 + $0x24] sm:$0xf]
        %v2065 = vld [vmem:[%s2054 + $0x28] sm:$0xf]
        %v2066 = vld [vmem:[%s2054 + $0x2c] sm:$0xf]
        %v2067 = vld [vmem:[%s2054 + $0x30] sm:$0xf]
        %v2068 = vld [vmem:[%s2054 + $0x34] sm:$0xf]
        %v2069 = vld [vmem:[%s2054 + $0x38] sm:$0xf]
        %v2070 = vld [vmem:[%s2054 + $0x3c] sm:$0xf]
        %v2071 = vld [vmem:[%s2054 + $0x40] sm:$0xf]
        %v2072 = vld [vmem:[%s2054 + $0x44] sm:$0xf]
        %v2073 = vld [vmem:[%s2054 + $0x48] sm:$0xf]
        %v2074 = vld [vmem:[%s2054 + $0x4c] sm:$0xf]
        %v2075 = vld [vmem:[%s2054 + $0x50] sm:$0xf]
        %v2076 = vld [vmem:[%s2054 + $0x54] sm:$0xf]
        %v2077 = vld [vmem:[%s2054 + $0x58] sm:$0xf]
        %v2078 = vld [vmem:[%s2054 + $0x5c] sm:$0xf]
        %v2079 = vld [vmem:[%s2054 + $0x60] sm:$0xf]
        %v2080 = vld [vmem:[%s2054 + $0x64] sm:$0xf]
        %v2081 = vld [vmem:[%s2054 + $0x68] sm:$0xf]
        %v2082 = vld [vmem:[%s2054 + $0x6c] sm:$0xf]
        %v2083 = vld [vmem:[%s2054 + $0x70] sm:$0xf]
        %v2084 = vld [vmem:[%s2054 + $0x74] sm:$0xf]
        %v2085 = vld [vmem:[%s2054 + $0x78] sm:$0xf]
        %v2086 = vld [vmem:[%s2054 + $0x7c] sm:$0xf]
        %v2087 = vld [vmem:[%s2054 + $0x80] sm:$0xf]
        %v2088 = vld [vmem:[%s2054 + $0x84] sm:$0xf]
        %v2089 = vld [vmem:[%s2054 + $0x88] sm:$0xf]
        %v2090 = vld [vmem:[%s2054 + $0x8c] sm:$0xf]
        %v2091 = vld [vmem:[%s2054 + $0x90] sm:$0xf]
        %v2092 = vld [vmem:[%s2054 + $0x94] sm:$0xf]
        %v2093 = vld [vmem:[%s2054 + $0x98] sm:$0xf]
        %v2094 = vld [vmem:[%s2054 + $0x9c] sm:$0xf]
        %v2095 = vld [vmem:[%s2054 + $0xa0] sm:$0xf]
        %v2096 = vld [vmem:[%s2054 + $0xa4] sm:$0xf]
        %v2097 = vld [vmem:[%s2054 + $0xa8] sm:$0xf]
        %v2098 = vld [vmem:[%s2054 + $0xac] sm:$0xf]
        %v2099 = vld [vmem:[%s2054 + $0xb0] sm:$0xf]
        %v2100 = vld [vmem:[%s2054 + $0xb4] sm:$0xf]
        %v2101 = vld [vmem:[%s2054 + $0xb8] sm:$0xf]
        %v2102 = vld [vmem:[%s2054 + $0xbc] sm:$0xf]
        %v2103 = vld [vmem:[%s2054 + $0xc0] sm:$0xf]
        %v2104 = vld [vmem:[%s2054 + $0xc4] sm:$0xf]
        %v2105 = vld [vmem:[%s2054 + $0xc8] sm:$0xf]
        %v2106 = vld [vmem:[%s2054 + $0xcc] sm:$0xf]
        %v2107 = vld [vmem:[%s2054 + $0xd0] sm:$0xf]
        %v2108 = vld [vmem:[%s2054 + $0xd4] sm:$0xf]
        %v2109 = vld [vmem:[%s2054 + $0xd8] sm:$0xf]
        %v2110 = vld [vmem:[%s2054 + $0xdc] sm:$0xf]
        %v2111 = vld [vmem:[%s2054 + $0xe0] sm:$0xf]
        %v2112 = vld [vmem:[%s2054 + $0xe4] sm:$0xf]
        %v2113 = vld [vmem:[%s2054 + $0xe8] sm:$0xf]
        %v2114 = vld [vmem:[%s2054 + $0xec] sm:$0xf]
        %v2115 = vld [vmem:[%s2054 + $0xf0] sm:$0xf]
        %v2116 = vld [vmem:[%s2054 + $0xf4] sm:$0xf]
        %v2117 = vld [vmem:[%s2054 + $0xf8] sm:$0xf]
        %v2118 = vld [vmem:[%s2054 + $0xfc] sm:$0xf]
        %s2119 = scalar_lea.vmem [#allocation6], 192
        %v2120 = vld [vmem:[%s2119] sm:$0xf]
        %v2121 = vld [vmem:[%s2119 + $0x4] sm:$0xf]
        %v2122 = vld [vmem:[%s2119 + $0x8] sm:$0xf]
        %v2123 = vld [vmem:[%s2119 + $0xc] sm:$0xf]
        %v2124 = vld [vmem:[%s2119 + $0x10] sm:$0xf]
        %v2125 = vld [vmem:[%s2119 + $0x14] sm:$0xf]
        %v2126 = vld [vmem:[%s2119 + $0x18] sm:$0xf]
        %v2127 = vld [vmem:[%s2119 + $0x1c] sm:$0xf]
        %v2128 = vld [vmem:[%s2119 + $0x20] sm:$0xf]
        %v2129 = vld [vmem:[%s2119 + $0x24] sm:$0xf]
        %v2130 = vld [vmem:[%s2119 + $0x28] sm:$0xf]
        %v2131 = vld [vmem:[%s2119 + $0x2c] sm:$0xf]
        %v2132 = vld [vmem:[%s2119 + $0x30] sm:$0xf]
        %v2133 = vld [vmem:[%s2119 + $0x34] sm:$0xf]
        %v2134 = vld [vmem:[%s2119 + $0x38] sm:$0xf]
        %v2135 = vld [vmem:[%s2119 + $0x3c] sm:$0xf]
        %v2200 = vunpack.c.l.b16 %v2055
        %v2201 = vunpack.c.l.b16 %v2056
        %v2202 = vunpack.c.l.b16 %v2057
        %v2203 = vunpack.c.l.b16 %v2058
        %v2204 = vunpack.c.l.b16 %v2059
        %v2205 = vunpack.c.l.b16 %v2060
        %v2206 = vunpack.c.l.b16 %v2061
        %v2207 = vunpack.c.l.b16 %v2062
        %v2208 = vunpack.c.l.b16 %v2063
        %v2209 = vunpack.c.l.b16 %v2064
        %v2210 = vunpack.c.l.b16 %v2065
        %v2211 = vunpack.c.l.b16 %v2066
        %v2212 = vunpack.c.l.b16 %v2067
        %v2213 = vunpack.c.l.b16 %v2068
        %v2214 = vunpack.c.l.b16 %v2069
        %v2215 = vunpack.c.l.b16 %v2070
        %v2216 = vunpack.c.l.b16 %v2071
        %v2217 = vunpack.c.l.b16 %v2072
        %v2218 = vunpack.c.l.b16 %v2073
        %v2219 = vunpack.c.l.b16 %v2074
        %v2220 = vunpack.c.l.b16 %v2075
        %v2221 = vunpack.c.l.b16 %v2076
        %v2222 = vunpack.c.l.b16 %v2077
        %v2223 = vunpack.c.l.b16 %v2078
        %v2224 = vunpack.c.l.b16 %v2079
        %v2225 = vunpack.c.l.b16 %v2080
        %v2226 = vunpack.c.l.b16 %v2081
        %v2227 = vunpack.c.l.b16 %v2082
        %v2228 = vunpack.c.l.b16 %v2083
        %v2229 = vunpack.c.l.b16 %v2084
        %v2230 = vunpack.c.l.b16 %v2085
        %v2231 = vunpack.c.l.b16 %v2086
        %v2232 = vunpack.c.l.b16 %v2087
        %v2233 = vunpack.c.l.b16 %v2088
        %v2234 = vunpack.c.l.b16 %v2089
        %v2235 = vunpack.c.l.b16 %v2090
        %v2236 = vunpack.c.l.b16 %v2091
        %v2237 = vunpack.c.l.b16 %v2092
        %v2238 = vunpack.c.l.b16 %v2093
        %v2239 = vunpack.c.l.b16 %v2094
        %v2240 = vunpack.c.l.b16 %v2095
        %v2241 = vunpack.c.l.b16 %v2096
        %v2242 = vunpack.c.l.b16 %v2097
        %v2243 = vunpack.c.l.b16 %v2098
        %v2244 = vunpack.c.l.b16 %v2099
        %v2245 = vunpack.c.l.b16 %v2100
        %v2246 = vunpack.c.l.b16 %v2101
        %v2247 = vunpack.c.l.b16 %v2102
        %v2248 = vunpack.c.l.b16 %v2103
        %v2249 = vunpack.c.l.b16 %v2104
        %v2250 = vunpack.c.l.b16 %v2105
        %v2251 = vunpack.c.l.b16 %v2106
        %v2252 = vunpack.c.l.b16 %v2107
        %v2253 = vunpack.c.l.b16 %v2108
        %v2254 = vunpack.c.l.b16 %v2109
        %v2255 = vunpack.c.l.b16 %v2110
        %v2256 = vunpack.c.l.b16 %v2111
        %v2257 = vunpack.c.l.b16 %v2112
        %v2258 = vunpack.c.l.b16 %v2113
        %v2259 = vunpack.c.l.b16 %v2114
        %v2260 = vunpack.c.l.b16 %v2115
        %v2261 = vunpack.c.l.b16 %v2116
        %v2262 = vunpack.c.l.b16 %v2117
        %v2263 = vunpack.c.l.b16 %v2118
        %v2264 = vpack.c.b16 %v2201, %v2200
        %v2265 = vpack.c.b16 %v2203, %v2202
        %v2266 = vpack.c.b16 %v2205, %v2204
        %v2267 = vpack.c.b16 %v2207, %v2206
        %v2268 = vpack.c.b16 %v2209, %v2208
        %v2269 = vpack.c.b16 %v2211, %v2210
        %v2270 = vpack.c.b16 %v2213, %v2212
        %v2271 = vpack.c.b16 %v2215, %v2214
        %v2272 = vpack.c.b16 %v2217, %v2216
        %v2273 = vpack.c.b16 %v2219, %v2218
        %v2274 = vpack.c.b16 %v2221, %v2220
        %v2275 = vpack.c.b16 %v2223, %v2222
        %v2276 = vpack.c.b16 %v2225, %v2224
        %v2277 = vpack.c.b16 %v2227, %v2226
        %v2278 = vpack.c.b16 %v2229, %v2228
        %v2279 = vpack.c.b16 %v2231, %v2230
        %v2280 = vpack.c.b16 %v2233, %v2232
        %v2281 = vpack.c.b16 %v2235, %v2234
        %v2282 = vpack.c.b16 %v2237, %v2236
        %v2283 = vpack.c.b16 %v2239, %v2238
        %v2284 = vpack.c.b16 %v2241, %v2240
        %v2285 = vpack.c.b16 %v2243, %v2242
        %v2286 = vpack.c.b16 %v2245, %v2244
        %v2287 = vpack.c.b16 %v2247, %v2246
        %v2288 = vpack.c.b16 %v2249, %v2248
        %v2289 = vpack.c.b16 %v2251, %v2250
        %v2290 = vpack.c.b16 %v2253, %v2252
        %v2291 = vpack.c.b16 %v2255, %v2254
        %v2292 = vpack.c.b16 %v2257, %v2256
        %v2293 = vpack.c.b16 %v2259, %v2258
        %v2294 = vpack.c.b16 %v2261, %v2260
        %v2295 = vpack.c.b16 %v2263, %v2262
        %v2344 = vunpack.c.l.b16 %v2120
        %v2345 = vunpack.c.l.b16 %v2121
        %v2346 = vunpack.c.l.b16 %v2122
        %v2347 = vunpack.c.l.b16 %v2123
        %v2348 = vunpack.c.l.b16 %v2124
        %v2349 = vunpack.c.l.b16 %v2125
        %v2350 = vunpack.c.l.b16 %v2126
        %v2351 = vunpack.c.l.b16 %v2127
        %v2352 = vunpack.c.l.b16 %v2128
        %v2353 = vunpack.c.l.b16 %v2129
        %v2354 = vunpack.c.l.b16 %v2130
        %v2355 = vunpack.c.l.b16 %v2131
        %v2356 = vunpack.c.l.b16 %v2132
        %v2357 = vunpack.c.l.b16 %v2133
        %v2358 = vunpack.c.l.b16 %v2134
        %v2359 = vunpack.c.l.b16 %v2135
        %v2360 = vpack.c.b16 %v2345, %v2344
        %v2361 = vpack.c.b16 %v2347, %v2346
        %v2362 = vpack.c.b16 %v2349, %v2348
        %v2363 = vpack.c.b16 %v2351, %v2350
        %v2364 = vpack.c.b16 %v2353, %v2352
        %v2365 = vpack.c.b16 %v2355, %v2354
        %v2366 = vpack.c.b16 %v2357, %v2356
        %v2367 = vpack.c.b16 %v2359, %v2358
        %2376 = vmatpush.bf16.msra.mxu0 %v2367
        %2377 = vmatpush.bf16.msra.mxu0 %v2366
        %2378 = vmatpush.bf16.msra.mxu0 %v2365
        %2379 = vmatpush.bf16.msra.mxu0 %v2364
        %2380 = vmatpush.bf16.msra.mxu0 %v2363
        %2381 = vmatpush.bf16.msra.mxu0 %v2362
        %2382 = vmatpush.bf16.msra.mxu0 %v2361
        %2383 = vmatpush.bf16.msra.mxu0 %v2360
        %2384 = vmatmul.bf16.gmra.mxu0 %v2264
        %v2385 = vpop.f32.mrf.mxu0
        %v2386 = vadd.f32 0.0, %v2385
        %v2387 = vpop.f32.mrf.mxu0
        %v2388 = vadd.f32 0.0, %v2387
        %2389 = vmatmul.bf16.gmra.mxu0 %v2265
        %v2390 = vpop.f32.mrf.mxu0
        %v2391 = vadd.f32 0.0, %v2390
        %v2392 = vpop.f32.mrf.mxu0
        %v2393 = vadd.f32 0.0, %v2392
        %2394 = vmatmul.bf16.gmra.mxu0 %v2266
        %v2395 = vpop.f32.mrf.mxu0
        %v2396 = vadd.f32 0.0, %v2395
        %v2397 = vpop.f32.mrf.mxu0
        %v2398 = vadd.f32 0.0, %v2397
        %2399 = vmatmul.bf16.gmra.mxu0 %v2267
        %v2400 = vpop.f32.mrf.mxu0
        %v2401 = vadd.f32 0.0, %v2400
        %v2402 = vpop.f32.mrf.mxu0
        %v2403 = vadd.f32 0.0, %v2402
        %2404 = vmatmul.bf16.gmra.mxu0 %v2268
        %v2405 = vpop.f32.mrf.mxu0
        %v2406 = vadd.f32 0.0, %v2405
        %v2407 = vpop.f32.mrf.mxu0
        %v2408 = vadd.f32 0.0, %v2407
        %2409 = vmatmul.bf16.gmra.mxu0 %v2269
        %v2410 = vpop.f32.mrf.mxu0
        %v2411 = vadd.f32 0.0, %v2410
        %v2412 = vpop.f32.mrf.mxu0
        %v2413 = vadd.f32 0.0, %v2412
        %2414 = vmatmul.bf16.gmra.mxu0 %v2270
        %v2415 = vpop.f32.mrf.mxu0
        %v2416 = vadd.f32 0.0, %v2415
        %v2417 = vpop.f32.mrf.mxu0
        %v2418 = vadd.f32 0.0, %v2417
        %2419 = vmatmul.bf16.gmra.mxu0 %v2271
        %v2420 = vpop.f32.mrf.mxu0
        %v2421 = vadd.f32 0.0, %v2420
        %v2422 = vpop.f32.mrf.mxu0
        %v2423 = vadd.f32 0.0, %v2422
        %2424 = vmatmul.bf16.gmra.mxu0 %v2272
        %v2425 = vpop.f32.mrf.mxu0
        %v2426 = vadd.f32 0.0, %v2425
        %v2427 = vpop.f32.mrf.mxu0
        %v2428 = vadd.f32 0.0, %v2427
        %2429 = vmatmul.bf16.gmra.mxu0 %v2273
        %v2430 = vpop.f32.mrf.mxu0
        %v2431 = vadd.f32 0.0, %v2430
        %v2432 = vpop.f32.mrf.mxu0
        %v2433 = vadd.f32 0.0, %v2432
        %2434 = vmatmul.bf16.gmra.mxu0 %v2274
        %v2435 = vpop.f32.mrf.mxu0
        %v2436 = vadd.f32 0.0, %v2435
        %v2437 = vpop.f32.mrf.mxu0
        %v2438 = vadd.f32 0.0, %v2437
        %2439 = vmatmul.bf16.gmra.mxu0 %v2275
        %v2440 = vpop.f32.mrf.mxu0
        %v2441 = vadd.f32 0.0, %v2440
        %v2442 = vpop.f32.mrf.mxu0
        %v2443 = vadd.f32 0.0, %v2442
        %2444 = vmatmul.bf16.gmra.mxu0 %v2276
        %v2445 = vpop.f32.mrf.mxu0
        %v2446 = vadd.f32 0.0, %v2445
        %v2447 = vpop.f32.mrf.mxu0
        %v2448 = vadd.f32 0.0, %v2447
        %2449 = vmatmul.bf16.gmra.mxu0 %v2277
        %v2450 = vpop.f32.mrf.mxu0
        %v2451 = vadd.f32 0.0, %v2450
        %v2452 = vpop.f32.mrf.mxu0
        %v2453 = vadd.f32 0.0, %v2452
        %2454 = vmatmul.bf16.gmra.mxu0 %v2278
        %v2455 = vpop.f32.mrf.mxu0
        %v2456 = vadd.f32 0.0, %v2455
        %v2457 = vpop.f32.mrf.mxu0
        %v2458 = vadd.f32 0.0, %v2457
        %2459 = vmatmul.bf16.gmra.mxu0 %v2279
        %v2460 = vpop.f32.mrf.mxu0
        %v2461 = vadd.f32 0.0, %v2460
        %v2462 = vpop.f32.mrf.mxu0
        %v2463 = vadd.f32 0.0, %v2462
        %2464 = vmatmul.bf16.gmra.mxu0 %v2280
        %v2465 = vpop.f32.mrf.mxu0
        %v2466 = vadd.f32 0.0, %v2465
        %v2467 = vpop.f32.mrf.mxu0
        %v2468 = vadd.f32 0.0, %v2467
        %2469 = vmatmul.bf16.gmra.mxu0 %v2281
        %v2470 = vpop.f32.mrf.mxu0
        %v2471 = vadd.f32 0.0, %v2470
        %v2472 = vpop.f32.mrf.mxu0
        %v2473 = vadd.f32 0.0, %v2472
        %2474 = vmatmul.bf16.gmra.mxu0 %v2282
        %v2475 = vpop.f32.mrf.mxu0
        %v2476 = vadd.f32 0.0, %v2475
        %v2477 = vpop.f32.mrf.mxu0
        %v2478 = vadd.f32 0.0, %v2477
        %2479 = vmatmul.bf16.gmra.mxu0 %v2283
        %v2480 = vpop.f32.mrf.mxu0
        %v2481 = vadd.f32 0.0, %v2480
        %v2482 = vpop.f32.mrf.mxu0
        %v2483 = vadd.f32 0.0, %v2482
        %2484 = vmatmul.bf16.gmra.mxu0 %v2284
        %v2485 = vpop.f32.mrf.mxu0
        %v2486 = vadd.f32 0.0, %v2485
        %v2487 = vpop.f32.mrf.mxu0
        %v2488 = vadd.f32 0.0, %v2487
        %2489 = vmatmul.bf16.gmra.mxu0 %v2285
        %v2490 = vpop.f32.mrf.mxu0
        %v2491 = vadd.f32 0.0, %v2490
        %v2492 = vpop.f32.mrf.mxu0
        %v2493 = vadd.f32 0.0, %v2492
        %2494 = vmatmul.bf16.gmra.mxu0 %v2286
        %v2495 = vpop.f32.mrf.mxu0
        %v2496 = vadd.f32 0.0, %v2495
        %v2497 = vpop.f32.mrf.mxu0
        %v2498 = vadd.f32 0.0, %v2497
        %2499 = vmatmul.bf16.gmra.mxu0 %v2287
        %v2500 = vpop.f32.mrf.mxu0
        %v2501 = vadd.f32 0.0, %v2500
        %v2502 = vpop.f32.mrf.mxu0
        %v2503 = vadd.f32 0.0, %v2502
        %2504 = vmatmul.bf16.gmra.mxu0 %v2288
        %v2505 = vpop.f32.mrf.mxu0
        %v2506 = vadd.f32 0.0, %v2505
        %v2507 = vpop.f32.mrf.mxu0
        %v2508 = vadd.f32 0.0, %v2507
        %2509 = vmatmul.bf16.gmra.mxu0 %v2289
        %v2510 = vpop.f32.mrf.mxu0
        %v2511 = vadd.f32 0.0, %v2510
        %v2512 = vpop.f32.mrf.mxu0
        %v2513 = vadd.f32 0.0, %v2512
        %2514 = vmatmul.bf16.gmra.mxu0 %v2290
        %v2515 = vpop.f32.mrf.mxu0
        %v2516 = vadd.f32 0.0, %v2515
        %v2517 = vpop.f32.mrf.mxu0
        %v2518 = vadd.f32 0.0, %v2517
        %2519 = vmatmul.bf16.gmra.mxu0 %v2291
        %v2520 = vpop.f32.mrf.mxu0
        %v2521 = vadd.f32 0.0, %v2520
        %v2522 = vpop.f32.mrf.mxu0
        %v2523 = vadd.f32 0.0, %v2522
        %2524 = vmatmul.bf16.gmra.mxu0 %v2292
        %v2525 = vpop.f32.mrf.mxu0
        %v2526 = vadd.f32 0.0, %v2525
        %v2527 = vpop.f32.mrf.mxu0
        %v2528 = vadd.f32 0.0, %v2527
        %2529 = vmatmul.bf16.gmra.mxu0 %v2293
        %v2530 = vpop.f32.mrf.mxu0
        %v2531 = vadd.f32 0.0, %v2530
        %v2532 = vpop.f32.mrf.mxu0
        %v2533 = vadd.f32 0.0, %v2532
        %2534 = vmatmul.bf16.gmra.mxu0 %v2294
        %v2535 = vpop.f32.mrf.mxu0
        %v2536 = vadd.f32 0.0, %v2535
        %v2537 = vpop.f32.mrf.mxu0
        %v2538 = vadd.f32 0.0, %v2537
        %2539 = vmatmul.bf16.gmra.mxu0 %v2295
        %v2540 = vpop.f32.mrf.mxu0
        %v2541 = vadd.f32 0.0, %v2540
        %v2542 = vpop.f32.mrf.mxu0
        %v2543 = vadd.f32 0.0, %v2542
        %2544 = vdwg.mxu0
        %v2545 = vld [vmem:[#allocation2] sm:$0xff]
        %v2546 = vld [vmem:[#allocation2 + $0x8] sm:$0xff]
        %v2547 = vld [vmem:[#allocation2 + $0x10] sm:$0xff]
        %v2548 = vld [vmem:[#allocation2 + $0x18] sm:$0xff]
        %v2549 = vld [vmem:[#allocation2 + $0x20] sm:$0xff]
        %v2550 = vld [vmem:[#allocation2 + $0x28] sm:$0xff]
        %v2551 = vld [vmem:[#allocation2 + $0x30] sm:$0xff]
        %v2552 = vld [vmem:[#allocation2 + $0x38] sm:$0xff]
        %v2553 = vld [vmem:[#allocation2 + $0x40] sm:$0xff]
        %v2554 = vld [vmem:[#allocation2 + $0x48] sm:$0xff]
        %v2555 = vld [vmem:[#allocation2 + $0x50] sm:$0xff]
        %v2556 = vld [vmem:[#allocation2 + $0x58] sm:$0xff]
        %v2557 = vld [vmem:[#allocation2 + $0x60] sm:$0xff]
        %v2558 = vld [vmem:[#allocation2 + $0x68] sm:$0xff]
        %v2559 = vld [vmem:[#allocation2 + $0x70] sm:$0xff]
        %v2560 = vld [vmem:[#allocation2 + $0x78] sm:$0xff]
        %v2561 = vld [vmem:[#allocation2 + $0x80] sm:$0xff]
        %v2562 = vld [vmem:[#allocation2 + $0x88] sm:$0xff]
        %v2563 = vld [vmem:[#allocation2 + $0x90] sm:$0xff]
        %v2564 = vld [vmem:[#allocation2 + $0x98] sm:$0xff]
        %v2565 = vld [vmem:[#allocation2 + $0xa0] sm:$0xff]
        %v2566 = vld [vmem:[#allocation2 + $0xa8] sm:$0xff]
        %v2567 = vld [vmem:[#allocation2 + $0xb0] sm:$0xff]
        %v2568 = vld [vmem:[#allocation2 + $0xb8] sm:$0xff]
        %v2569 = vld [vmem:[#allocation2 + $0xc0] sm:$0xff]
        %v2570 = vld [vmem:[#allocation2 + $0xc8] sm:$0xff]
        %v2571 = vld [vmem:[#allocation2 + $0xd0] sm:$0xff]
        %v2572 = vld [vmem:[#allocation2 + $0xd8] sm:$0xff]
        %v2573 = vld [vmem:[#allocation2 + $0xe0] sm:$0xff]
        %v2574 = vld [vmem:[#allocation2 + $0xe8] sm:$0xff]
        %v2575 = vld [vmem:[#allocation2 + $0xf0] sm:$0xff]
        %v2576 = vld [vmem:[#allocation2 + $0xf8] sm:$0xff]
        %v2577 = vld [vmem:[#allocation2 + $0x100] sm:$0xff]
        %v2578 = vld [vmem:[#allocation2 + $0x108] sm:$0xff]
        %v2579 = vld [vmem:[#allocation2 + $0x110] sm:$0xff]
        %v2580 = vld [vmem:[#allocation2 + $0x118] sm:$0xff]
        %v2581 = vld [vmem:[#allocation2 + $0x120] sm:$0xff]
        %v2582 = vld [vmem:[#allocation2 + $0x128] sm:$0xff]
        %v2583 = vld [vmem:[#allocation2 + $0x130] sm:$0xff]
        %v2584 = vld [vmem:[#allocation2 + $0x138] sm:$0xff]
        %v2585 = vld [vmem:[#allocation2 + $0x140] sm:$0xff]
        %v2586 = vld [vmem:[#allocation2 + $0x148] sm:$0xff]
        %v2587 = vld [vmem:[#allocation2 + $0x150] sm:$0xff]
        %v2588 = vld [vmem:[#allocation2 + $0x158] sm:$0xff]
        %v2589 = vld [vmem:[#allocation2 + $0x160] sm:$0xff]
        %v2590 = vld [vmem:[#allocation2 + $0x168] sm:$0xff]
        %v2591 = vld [vmem:[#allocation2 + $0x170] sm:$0xff]
        %v2592 = vld [vmem:[#allocation2 + $0x178] sm:$0xff]
        %v2593 = vld [vmem:[#allocation2 + $0x180] sm:$0xff]
        %v2594 = vld [vmem:[#allocation2 + $0x188] sm:$0xff]
        %v2595 = vld [vmem:[#allocation2 + $0x190] sm:$0xff]
        %v2596 = vld [vmem:[#allocation2 + $0x198] sm:$0xff]
        %v2597 = vld [vmem:[#allocation2 + $0x1a0] sm:$0xff]
        %v2598 = vld [vmem:[#allocation2 + $0x1a8] sm:$0xff]
        %v2599 = vld [vmem:[#allocation2 + $0x1b0] sm:$0xff]
        %v2600 = vld [vmem:[#allocation2 + $0x1b8] sm:$0xff]
        %v2601 = vld [vmem:[#allocation2 + $0x1c0] sm:$0xff]
        %v2602 = vld [vmem:[#allocation2 + $0x1c8] sm:$0xff]
        %v2603 = vld [vmem:[#allocation2 + $0x1d0] sm:$0xff]
        %v2604 = vld [vmem:[#allocation2 + $0x1d8] sm:$0xff]
        %v2605 = vld [vmem:[#allocation2 + $0x1e0] sm:$0xff]
        %v2606 = vld [vmem:[#allocation2 + $0x1e8] sm:$0xff]
        %v2607 = vld [vmem:[#allocation2 + $0x1f0] sm:$0xff]
        %v2608 = vld [vmem:[#allocation2 + $0x1f8] sm:$0xff]
        %v2609 = vadd.f32 %v2545, %v2386
        %v2610 = vadd.f32 %v2546, %v2388
        %v2611 = vadd.f32 %v2547, %v2391
        %v2612 = vadd.f32 %v2548, %v2393
        %v2613 = vadd.f32 %v2549, %v2396
        %v2614 = vadd.f32 %v2550, %v2398
        %v2615 = vadd.f32 %v2551, %v2401
        %v2616 = vadd.f32 %v2552, %v2403
        %v2617 = vadd.f32 %v2553, %v2406
        %v2618 = vadd.f32 %v2554, %v2408
        %v2619 = vadd.f32 %v2555, %v2411
        %v2620 = vadd.f32 %v2556, %v2413
        %v2621 = vadd.f32 %v2557, %v2416
        %v2622 = vadd.f32 %v2558, %v2418
        %v2623 = vadd.f32 %v2559, %v2421
        %v2624 = vadd.f32 %v2560, %v2423
        %v2625 = vadd.f32 %v2561, %v2426
        %v2626 = vadd.f32 %v2562, %v2428
        %v2627 = vadd.f32 %v2563, %v2431
        %v2628 = vadd.f32 %v2564, %v2433
        %v2629 = vadd.f32 %v2565, %v2436
        %v2630 = vadd.f32 %v2566, %v2438
        %v2631 = vadd.f32 %v2567, %v2441
        %v2632 = vadd.f32 %v2568, %v2443
        %v2633 = vadd.f32 %v2569, %v2446
        %v2634 = vadd.f32 %v2570, %v2448
        %v2635 = vadd.f32 %v2571, %v2451
        %v2636 = vadd.f32 %v2572, %v2453
        %v2637 = vadd.f32 %v2573, %v2456
        %v2638 = vadd.f32 %v2574, %v2458
        %v2639 = vadd.f32 %v2575, %v2461
        %v2640 = vadd.f32 %v2576, %v2463
        %v2641 = vadd.f32 %v2577, %v2466
        %v2642 = vadd.f32 %v2578, %v2468
        %v2643 = vadd.f32 %v2579, %v2471
        %v2644 = vadd.f32 %v2580, %v2473
        %v2645 = vadd.f32 %v2581, %v2476
        %v2646 = vadd.f32 %v2582, %v2478
        %v2647 = vadd.f32 %v2583, %v2481
        %v2648 = vadd.f32 %v2584, %v2483
        %v2649 = vadd.f32 %v2585, %v2486
        %v2650 = vadd.f32 %v2586, %v2488
        %v2651 = vadd.f32 %v2587, %v2491
        %v2652 = vadd.f32 %v2588, %v2493
        %v2653 = vadd.f32 %v2589, %v2496
        %v2654 = vadd.f32 %v2590, %v2498
        %v2655 = vadd.f32 %v2591, %v2501
        %v2656 = vadd.f32 %v2592, %v2503
        %v2657 = vadd.f32 %v2593, %v2506
        %v2658 = vadd.f32 %v2594, %v2508
        %v2659 = vadd.f32 %v2595, %v2511
        %v2660 = vadd.f32 %v2596, %v2513
        %v2661 = vadd.f32 %v2597, %v2516
        %v2662 = vadd.f32 %v2598, %v2518
        %v2663 = vadd.f32 %v2599, %v2521
        %v2664 = vadd.f32 %v2600, %v2523
        %v2665 = vadd.f32 %v2601, %v2526
        %v2666 = vadd.f32 %v2602, %v2528
        %v2667 = vadd.f32 %v2603, %v2531
        %v2668 = vadd.f32 %v2604, %v2533
        %v2669 = vadd.f32 %v2605, %v2536
        %v2670 = vadd.f32 %v2606, %v2538
        %v2671 = vadd.f32 %v2607, %v2541
        %v2672 = vadd.f32 %v2608, %v2543
        %2673 = vst [vmem:[#allocation2] sm:$0xff] %v2609
        %2674 = vst [vmem:[#allocation2 + $0x8] sm:$0xff] %v2610
        %2675 = vst [vmem:[#allocation2 + $0x10] sm:$0xff] %v2611
        %2676 = vst [vmem:[#allocation2 + $0x18] sm:$0xff] %v2612
        %2677 = vst [vmem:[#allocation2 + $0x20] sm:$0xff] %v2613
        %2678 = vst [vmem:[#allocation2 + $0x28] sm:$0xff] %v2614
        %2679 = vst [vmem:[#allocation2 + $0x30] sm:$0xff] %v2615
        %2680 = vst [vmem:[#allocation2 + $0x38] sm:$0xff] %v2616
        %2681 = vst [vmem:[#allocation2 + $0x40] sm:$0xff] %v2617
        %2682 = vst [vmem:[#allocation2 + $0x48] sm:$0xff] %v2618
        %2683 = vst [vmem:[#allocation2 + $0x50] sm:$0xff] %v2619
        %2684 = vst [vmem:[#allocation2 + $0x58] sm:$0xff] %v2620
        %2685 = vst [vmem:[#allocation2 + $0x60] sm:$0xff] %v2621
        %2686 = vst [vmem:[#allocation2 + $0x68] sm:$0xff] %v2622
        %2687 = vst [vmem:[#allocation2 + $0x70] sm:$0xff] %v2623
        %2688 = vst [vmem:[#allocation2 + $0x78] sm:$0xff] %v2624
        %2689 = vst [vmem:[#allocation2 + $0x80] sm:$0xff] %v2625
        %2690 = vst [vmem:[#allocation2 + $0x88] sm:$0xff] %v2626
        %2691 = vst [vmem:[#allocation2 + $0x90] sm:$0xff] %v2627
        %2692 = vst [vmem:[#allocation2 + $0x98] sm:$0xff] %v2628
        %2693 = vst [vmem:[#allocation2 + $0xa0] sm:$0xff] %v2629
        %2694 = vst [vmem:[#allocation2 + $0xa8] sm:$0xff] %v2630
        %2695 = vst [vmem:[#allocation2 + $0xb0] sm:$0xff] %v2631
        %2696 = vst [vmem:[#allocation2 + $0xb8] sm:$0xff] %v2632
        %2697 = vst [vmem:[#allocation2 + $0xc0] sm:$0xff] %v2633
        %2698 = vst [vmem:[#allocation2 + $0xc8] sm:$0xff] %v2634
        %2699 = vst [vmem:[#allocation2 + $0xd0] sm:$0xff] %v2635
        %2700 = vst [vmem:[#allocation2 + $0xd8] sm:$0xff] %v2636
        %2701 = vst [vmem:[#allocation2 + $0xe0] sm:$0xff] %v2637
        %2702 = vst [vmem:[#allocation2 + $0xe8] sm:$0xff] %v2638
        %2703 = vst [vmem:[#allocation2 + $0xf0] sm:$0xff] %v2639
        %2704 = vst [vmem:[#allocation2 + $0xf8] sm:$0xff] %v2640
        %2705 = vst [vmem:[#allocation2 + $0x100] sm:$0xff] %v2641
        %2706 = vst [vmem:[#allocation2 + $0x108] sm:$0xff] %v2642
        %2707 = vst [vmem:[#allocation2 + $0x110] sm:$0xff] %v2643
        %2708 = vst [vmem:[#allocation2 + $0x118] sm:$0xff] %v2644
        %2709 = vst [vmem:[#allocation2 + $0x120] sm:$0xff] %v2645
        %2710 = vst [vmem:[#allocation2 + $0x128] sm:$0xff] %v2646
        %2711 = vst [vmem:[#allocation2 + $0x130] sm:$0xff] %v2647
        %2712 = vst [vmem:[#allocation2 + $0x138] sm:$0xff] %v2648
        %2713 = vst [vmem:[#allocation2 + $0x140] sm:$0xff] %v2649
        %2714 = vst [vmem:[#allocation2 + $0x148] sm:$0xff] %v2650
        %2715 = vst [vmem:[#allocation2 + $0x150] sm:$0xff] %v2651
        %2716 = vst [vmem:[#allocation2 + $0x158] sm:$0xff] %v2652
        %2717 = vst [vmem:[#allocation2 + $0x160] sm:$0xff] %v2653
        %2718 = vst [vmem:[#allocation2 + $0x168] sm:$0xff] %v2654
        %2719 = vst [vmem:[#allocation2 + $0x170] sm:$0xff] %v2655
        %2720 = vst [vmem:[#allocation2 + $0x178] sm:$0xff] %v2656
        %2721 = vst [vmem:[#allocation2 + $0x180] sm:$0xff] %v2657
        %2722 = vst [vmem:[#allocation2 + $0x188] sm:$0xff] %v2658
        %2723 = vst [vmem:[#allocation2 + $0x190] sm:$0xff] %v2659
        %2724 = vst [vmem:[#allocation2 + $0x198] sm:$0xff] %v2660
        %2725 = vst [vmem:[#allocation2 + $0x1a0] sm:$0xff] %v2661
        %2726 = vst [vmem:[#allocation2 + $0x1a8] sm:$0xff] %v2662
        %2727 = vst [vmem:[#allocation2 + $0x1b0] sm:$0xff] %v2663
        %2728 = vst [vmem:[#allocation2 + $0x1b8] sm:$0xff] %v2664
        %2729 = vst [vmem:[#allocation2 + $0x1c0] sm:$0xff] %v2665
        %2730 = vst [vmem:[#allocation2 + $0x1c8] sm:$0xff] %v2666
        %2731 = vst [vmem:[#allocation2 + $0x1d0] sm:$0xff] %v2667
        %2732 = vst [vmem:[#allocation2 + $0x1d8] sm:$0xff] %v2668
        %2733 = vst [vmem:[#allocation2 + $0x1e0] sm:$0xff] %v2669
        %2734 = vst [vmem:[#allocation2 + $0x1e8] sm:$0xff] %v2670
        %2735 = vst [vmem:[#allocation2 + $0x1f0] sm:$0xff] %v2671
        %2736 = vst [vmem:[#allocation2 + $0x1f8] sm:$0xff] %v2672
        %v2738 = vshrl.u32 %v2264, 16
        %v2740 = vshll.u32 %v2264, 16
        %v2742 = vrot.slane %v2740, 1
        %v2743 = vor.u32 %v2738, %v2742
        %v2745 = vshll.u32 %v2265, 16
        %v2747 = vrot.slane %v2745, 1
        %v2748 = vsel %vm811, %v2743, %v2747
        %v2749 = vshrl.u32 %v2265, 16
        %v2751 = vor.u32 %v2749, %v2747
        %v2753 = vshll.u32 %v2266, 16
        %v2755 = vrot.slane %v2753, 1
        %v2756 = vsel %vm811, %v2751, %v2755
        %v2757 = vshrl.u32 %v2266, 16
        %v2759 = vor.u32 %v2757, %v2755
        %v2761 = vshll.u32 %v2267, 16
        %v2763 = vrot.slane %v2761, 1
        %v2764 = vsel %vm811, %v2759, %v2763
        %v2765 = vshrl.u32 %v2267, 16
        %v2767 = vor.u32 %v2765, %v2763
        %v2769 = vshll.u32 %v2268, 16
        %v2771 = vrot.slane %v2769, 1
        %v2772 = vsel %vm811, %v2767, %v2771
        %v2773 = vshrl.u32 %v2268, 16
        %v2775 = vor.u32 %v2773, %v2771
        %v2777 = vshll.u32 %v2269, 16
        %v2779 = vrot.slane %v2777, 1
        %v2780 = vsel %vm811, %v2775, %v2779
        %v2781 = vshrl.u32 %v2269, 16
        %v2783 = vor.u32 %v2781, %v2779
        %v2785 = vshll.u32 %v2270, 16
        %v2787 = vrot.slane %v2785, 1
        %v2788 = vsel %vm811, %v2783, %v2787
        %v2789 = vshrl.u32 %v2270, 16
        %v2791 = vor.u32 %v2789, %v2787
        %v2793 = vshll.u32 %v2271, 16
        %v2795 = vrot.slane %v2793, 1
        %v2796 = vsel %vm811, %v2791, %v2795
        %v2797 = vshrl.u32 %v2271, 16
        %v2799 = vor.u32 %v2797, %v2795
        %v2801 = vshll.u32 %v2272, 16
        %v2803 = vrot.slane %v2801, 1
        %v2804 = vsel %vm811, %v2799, %v2803
        %v2805 = vshrl.u32 %v2272, 16
        %v2807 = vor.u32 %v2805, %v2803
        %v2809 = vshll.u32 %v2273, 16
        %v2811 = vrot.slane %v2809, 1
        %v2812 = vsel %vm811, %v2807, %v2811
        %v2813 = vshrl.u32 %v2273, 16
        %v2815 = vor.u32 %v2813, %v2811
        %v2817 = vshll.u32 %v2274, 16
        %v2819 = vrot.slane %v2817, 1
        %v2820 = vsel %vm811, %v2815, %v2819
        %v2821 = vshrl.u32 %v2274, 16
        %v2823 = vor.u32 %v2821, %v2819
        %v2825 = vshll.u32 %v2275, 16
        %v2827 = vrot.slane %v2825, 1
        %v2828 = vsel %vm811, %v2823, %v2827
        %v2829 = vshrl.u32 %v2275, 16
        %v2831 = vor.u32 %v2829, %v2827
        %v2833 = vshll.u32 %v2276, 16
        %v2835 = vrot.slane %v2833, 1
        %v2836 = vsel %vm811, %v2831, %v2835
        %v2837 = vshrl.u32 %v2276, 16
        %v2839 = vor.u32 %v2837, %v2835
        %v2841 = vshll.u32 %v2277, 16
        %v2843 = vrot.slane %v2841, 1
        %v2844 = vsel %vm811, %v2839, %v2843
        %v2845 = vshrl.u32 %v2277, 16
        %v2847 = vor.u32 %v2845, %v2843
        %v2849 = vshll.u32 %v2278, 16
        %v2851 = vrot.slane %v2849, 1
        %v2852 = vsel %vm811, %v2847, %v2851
        %v2853 = vshrl.u32 %v2278, 16
        %v2855 = vor.u32 %v2853, %v2851
        %v2857 = vshll.u32 %v2279, 16
        %v2859 = vrot.slane %v2857, 1
        %v2860 = vsel %vm811, %v2855, %v2859
        %v2861 = vshrl.u32 %v2279, 16
        %v2863 = vor.u32 %v2861, %v2859
        %v2865 = vshll.u32 %v2280, 16
        %v2867 = vrot.slane %v2865, 1
        %v2868 = vsel %vm811, %v2863, %v2867
        %v2869 = vshrl.u32 %v2280, 16
        %v2871 = vor.u32 %v2869, %v2867
        %v2873 = vshll.u32 %v2281, 16
        %v2875 = vrot.slane %v2873, 1
        %v2876 = vsel %vm811, %v2871, %v2875
        %v2877 = vshrl.u32 %v2281, 16
        %v2879 = vor.u32 %v2877, %v2875
        %v2881 = vshll.u32 %v2282, 16
        %v2883 = vrot.slane %v2881, 1
        %v2884 = vsel %vm811, %v2879, %v2883
        %v2885 = vshrl.u32 %v2282, 16
        %v2887 = vor.u32 %v2885, %v2883
        %v2889 = vshll.u32 %v2283, 16
        %v2891 = vrot.slane %v2889, 1
        %v2892 = vsel %vm811, %v2887, %v2891
        %v2893 = vshrl.u32 %v2283, 16
        %v2895 = vor.u32 %v2893, %v2891
        %v2897 = vshll.u32 %v2284, 16
        %v2899 = vrot.slane %v2897, 1
        %v2900 = vsel %vm811, %v2895, %v2899
        %v2901 = vshrl.u32 %v2284, 16
        %v2903 = vor.u32 %v2901, %v2899
        %v2905 = vshll.u32 %v2285, 16
        %v2907 = vrot.slane %v2905, 1
        %v2908 = vsel %vm811, %v2903, %v2907
        %v2909 = vshrl.u32 %v2285, 16
        %v2911 = vor.u32 %v2909, %v2907
        %v2913 = vshll.u32 %v2286, 16
        %v2915 = vrot.slane %v2913, 1
        %v2916 = vsel %vm811, %v2911, %v2915
        %v2917 = vshrl.u32 %v2286, 16
        %v2919 = vor.u32 %v2917, %v2915
        %v2921 = vshll.u32 %v2287, 16
        %v2923 = vrot.slane %v2921, 1
        %v2924 = vsel %vm811, %v2919, %v2923
        %v2925 = vshrl.u32 %v2287, 16
        %v2927 = vor.u32 %v2925, %v2923
        %v2929 = vshll.u32 %v2288, 16
        %v2931 = vrot.slane %v2929, 1
        %v2932 = vsel %vm811, %v2927, %v2931
        %v2933 = vshrl.u32 %v2288, 16
        %v2935 = vor.u32 %v2933, %v2931
        %v2937 = vshll.u32 %v2289, 16
        %v2939 = vrot.slane %v2937, 1
        %v2940 = vsel %vm811, %v2935, %v2939
        %v2941 = vshrl.u32 %v2289, 16
        %v2943 = vor.u32 %v2941, %v2939
        %v2945 = vshll.u32 %v2290, 16
        %v2947 = vrot.slane %v2945, 1
        %v2948 = vsel %vm811, %v2943, %v2947
        %v2949 = vshrl.u32 %v2290, 16
        %v2951 = vor.u32 %v2949, %v2947
        %v2953 = vshll.u32 %v2291, 16
        %v2955 = vrot.slane %v2953, 1
        %v2956 = vsel %vm811, %v2951, %v2955
        %v2957 = vshrl.u32 %v2291, 16
        %v2959 = vor.u32 %v2957, %v2955
        %v2961 = vshll.u32 %v2292, 16
        %v2963 = vrot.slane %v2961, 1
        %v2964 = vsel %vm811, %v2959, %v2963
        %v2965 = vshrl.u32 %v2292, 16
        %v2967 = vor.u32 %v2965, %v2963
        %v2969 = vshll.u32 %v2293, 16
        %v2971 = vrot.slane %v2969, 1
        %v2972 = vsel %vm811, %v2967, %v2971
        %v2973 = vshrl.u32 %v2293, 16
        %v2975 = vor.u32 %v2973, %v2971
        %v2977 = vshll.u32 %v2294, 16
        %v2979 = vrot.slane %v2977, 1
        %v2980 = vsel %vm811, %v2975, %v2979
        %v2981 = vshrl.u32 %v2294, 16
        %v2983 = vor.u32 %v2981, %v2979
        %v2985 = vshll.u32 %v2295, 16
        %v2987 = vrot.slane %v2985, 1
        %v2988 = vsel %vm811, %v2983, %v2987
        %v2989 = vshrl.u32 %v2295, 16
        %v2991 = vor.u32 %v2989, %v2987
        %v3024 = vsel %vm1100, %v2991, 0
        %s3025 = scalar_lea.vmem [#allocation6], 256
        %v3026 = vld [vmem:[%s3025] sm:$0xf]
        %v3027 = vld [vmem:[%s3025 + $0x4] sm:$0xf]
        %v3028 = vld [vmem:[%s3025 + $0x8] sm:$0xf]
        %v3029 = vld [vmem:[%s3025 + $0xc] sm:$0xf]
        %v3030 = vld [vmem:[%s3025 + $0x10] sm:$0xf]
        %v3031 = vld [vmem:[%s3025 + $0x14] sm:$0xf]
        %v3032 = vld [vmem:[%s3025 + $0x18] sm:$0xf]
        %v3033 = vld [vmem:[%s3025 + $0x1c] sm:$0xf]
        %v3034 = vld [vmem:[%s3025 + $0x20] sm:$0xf]
        %v3035 = vld [vmem:[%s3025 + $0x24] sm:$0xf]
        %v3036 = vld [vmem:[%s3025 + $0x28] sm:$0xf]
        %v3037 = vld [vmem:[%s3025 + $0x2c] sm:$0xf]
        %v3038 = vld [vmem:[%s3025 + $0x30] sm:$0xf]
        %v3039 = vld [vmem:[%s3025 + $0x34] sm:$0xf]
        %v3040 = vld [vmem:[%s3025 + $0x38] sm:$0xf]
        %v3041 = vld [vmem:[%s3025 + $0x3c] sm:$0xf]
        %v3058 = vunpack.c.l.b16 %v3026
        %v3059 = vunpack.c.l.b16 %v3027
        %v3060 = vunpack.c.l.b16 %v3028
        %v3061 = vunpack.c.l.b16 %v3029
        %v3062 = vunpack.c.l.b16 %v3030
        %v3063 = vunpack.c.l.b16 %v3031
        %v3064 = vunpack.c.l.b16 %v3032
        %v3065 = vunpack.c.l.b16 %v3033
        %v3066 = vunpack.c.l.b16 %v3034
        %v3067 = vunpack.c.l.b16 %v3035
        %v3068 = vunpack.c.l.b16 %v3036
        %v3069 = vunpack.c.l.b16 %v3037
        %v3070 = vunpack.c.l.b16 %v3038
        %v3071 = vunpack.c.l.b16 %v3039
        %v3072 = vunpack.c.l.b16 %v3040
        %v3073 = vunpack.c.l.b16 %v3041
        %v3074 = vpack.c.b16 %v3059, %v3058
        %v3075 = vpack.c.b16 %v3061, %v3060
        %v3076 = vpack.c.b16 %v3063, %v3062
        %v3077 = vpack.c.b16 %v3065, %v3064
        %v3078 = vpack.c.b16 %v3067, %v3066
        %v3079 = vpack.c.b16 %v3069, %v3068
        %v3080 = vpack.c.b16 %v3071, %v3070
        %v3081 = vpack.c.b16 %v3073, %v3072
        %3090 = vmatpush.bf16.msra.mxu0 %v3081
        %3091 = vmatpush.bf16.msra.mxu0 %v3080
        %3092 = vmatpush.bf16.msra.mxu0 %v3079
        %3093 = vmatpush.bf16.msra.mxu0 %v3078
        %3094 = vmatpush.bf16.msra.mxu0 %v3077
        %3095 = vmatpush.bf16.msra.mxu0 %v3076
        %3096 = vmatpush.bf16.msra.mxu0 %v3075
        %3097 = vmatpush.bf16.msra.mxu0 %v3074
        %3098 = vmatmul.bf16.gmra.mxu0 %v2748
        %v3099 = vpop.f32.mrf.mxu0
        %v3100 = vadd.f32 0.0, %v3099
        %v3101 = vpop.f32.mrf.mxu0
        %v3102 = vadd.f32 0.0, %v3101
        %3103 = vmatmul.bf16.gmra.mxu0 %v2756
        %v3104 = vpop.f32.mrf.mxu0
        %v3105 = vadd.f32 0.0, %v3104
        %v3106 = vpop.f32.mrf.mxu0
        %v3107 = vadd.f32 0.0, %v3106
        %3108 = vmatmul.bf16.gmra.mxu0 %v2764
        %v3109 = vpop.f32.mrf.mxu0
        %v3110 = vadd.f32 0.0, %v3109
        %v3111 = vpop.f32.mrf.mxu0
        %v3112 = vadd.f32 0.0, %v3111
        %3113 = vmatmul.bf16.gmra.mxu0 %v2772
        %v3114 = vpop.f32.mrf.mxu0
        %v3115 = vadd.f32 0.0, %v3114
        %v3116 = vpop.f32.mrf.mxu0
        %v3117 = vadd.f32 0.0, %v3116
        %3118 = vmatmul.bf16.gmra.mxu0 %v2780
        %v3119 = vpop.f32.mrf.mxu0
        %v3120 = vadd.f32 0.0, %v3119
        %v3121 = vpop.f32.mrf.mxu0
        %v3122 = vadd.f32 0.0, %v3121
        %3123 = vmatmul.bf16.gmra.mxu0 %v2788
        %v3124 = vpop.f32.mrf.mxu0
        %v3125 = vadd.f32 0.0, %v3124
        %v3126 = vpop.f32.mrf.mxu0
        %v3127 = vadd.f32 0.0, %v3126
        %3128 = vmatmul.bf16.gmra.mxu0 %v2796
        %v3129 = vpop.f32.mrf.mxu0
        %v3130 = vadd.f32 0.0, %v3129
        %v3131 = vpop.f32.mrf.mxu0
        %v3132 = vadd.f32 0.0, %v3131
        %3133 = vmatmul.bf16.gmra.mxu0 %v2804
        %v3134 = vpop.f32.mrf.mxu0
        %v3135 = vadd.f32 0.0, %v3134
        %v3136 = vpop.f32.mrf.mxu0
        %v3137 = vadd.f32 0.0, %v3136
        %3138 = vmatmul.bf16.gmra.mxu0 %v2812
        %v3139 = vpop.f32.mrf.mxu0
        %v3140 = vadd.f32 0.0, %v3139
        %v3141 = vpop.f32.mrf.mxu0
        %v3142 = vadd.f32 0.0, %v3141
        %3143 = vmatmul.bf16.gmra.mxu0 %v2820
        %v3144 = vpop.f32.mrf.mxu0
        %v3145 = vadd.f32 0.0, %v3144
        %v3146 = vpop.f32.mrf.mxu0
        %v3147 = vadd.f32 0.0, %v3146
        %3148 = vmatmul.bf16.gmra.mxu0 %v2828
        %v3149 = vpop.f32.mrf.mxu0
        %v3150 = vadd.f32 0.0, %v3149
        %v3151 = vpop.f32.mrf.mxu0
        %v3152 = vadd.f32 0.0, %v3151
        %3153 = vmatmul.bf16.gmra.mxu0 %v2836
        %v3154 = vpop.f32.mrf.mxu0
        %v3155 = vadd.f32 0.0, %v3154
        %v3156 = vpop.f32.mrf.mxu0
        %v3157 = vadd.f32 0.0, %v3156
        %3158 = vmatmul.bf16.gmra.mxu0 %v2844
        %v3159 = vpop.f32.mrf.mxu0
        %v3160 = vadd.f32 0.0, %v3159
        %v3161 = vpop.f32.mrf.mxu0
        %v3162 = vadd.f32 0.0, %v3161
        %3163 = vmatmul.bf16.gmra.mxu0 %v2852
        %v3164 = vpop.f32.mrf.mxu0
        %v3165 = vadd.f32 0.0, %v3164
        %v3166 = vpop.f32.mrf.mxu0
        %v3167 = vadd.f32 0.0, %v3166
        %3168 = vmatmul.bf16.gmra.mxu0 %v2860
        %v3169 = vpop.f32.mrf.mxu0
        %v3170 = vadd.f32 0.0, %v3169
        %v3171 = vpop.f32.mrf.mxu0
        %v3172 = vadd.f32 0.0, %v3171
        %3173 = vmatmul.bf16.gmra.mxu0 %v2868
        %v3174 = vpop.f32.mrf.mxu0
        %v3175 = vadd.f32 0.0, %v3174
        %v3176 = vpop.f32.mrf.mxu0
        %v3177 = vadd.f32 0.0, %v3176
        %3178 = vmatmul.bf16.gmra.mxu0 %v2876
        %v3179 = vpop.f32.mrf.mxu0
        %v3180 = vadd.f32 0.0, %v3179
        %v3181 = vpop.f32.mrf.mxu0
        %v3182 = vadd.f32 0.0, %v3181
        %3183 = vmatmul.bf16.gmra.mxu0 %v2884
        %v3184 = vpop.f32.mrf.mxu0
        %v3185 = vadd.f32 0.0, %v3184
        %v3186 = vpop.f32.mrf.mxu0
        %v3187 = vadd.f32 0.0, %v3186
        %3188 = vmatmul.bf16.gmra.mxu0 %v2892
        %v3189 = vpop.f32.mrf.mxu0
        %v3190 = vadd.f32 0.0, %v3189
        %v3191 = vpop.f32.mrf.mxu0
        %v3192 = vadd.f32 0.0, %v3191
        %3193 = vmatmul.bf16.gmra.mxu0 %v2900
        %v3194 = vpop.f32.mrf.mxu0
        %v3195 = vadd.f32 0.0, %v3194
        %v3196 = vpop.f32.mrf.mxu0
        %v3197 = vadd.f32 0.0, %v3196
        %3198 = vmatmul.bf16.gmra.mxu0 %v2908
        %v3199 = vpop.f32.mrf.mxu0
        %v3200 = vadd.f32 0.0, %v3199
        %v3201 = vpop.f32.mrf.mxu0
        %v3202 = vadd.f32 0.0, %v3201
        %3203 = vmatmul.bf16.gmra.mxu0 %v2916
        %v3204 = vpop.f32.mrf.mxu0
        %v3205 = vadd.f32 0.0, %v3204
        %v3206 = vpop.f32.mrf.mxu0
        %v3207 = vadd.f32 0.0, %v3206
        %3208 = vmatmul.bf16.gmra.mxu0 %v2924
        %v3209 = vpop.f32.mrf.mxu0
        %v3210 = vadd.f32 0.0, %v3209
        %v3211 = vpop.f32.mrf.mxu0
        %v3212 = vadd.f32 0.0, %v3211
        %3213 = vmatmul.bf16.gmra.mxu0 %v2932
        %v3214 = vpop.f32.mrf.mxu0
        %v3215 = vadd.f32 0.0, %v3214
        %v3216 = vpop.f32.mrf.mxu0
        %v3217 = vadd.f32 0.0, %v3216
        %3218 = vmatmul.bf16.gmra.mxu0 %v2940
        %v3219 = vpop.f32.mrf.mxu0
        %v3220 = vadd.f32 0.0, %v3219
        %v3221 = vpop.f32.mrf.mxu0
        %v3222 = vadd.f32 0.0, %v3221
        %3223 = vmatmul.bf16.gmra.mxu0 %v2948
        %v3224 = vpop.f32.mrf.mxu0
        %v3225 = vadd.f32 0.0, %v3224
        %v3226 = vpop.f32.mrf.mxu0
        %v3227 = vadd.f32 0.0, %v3226
        %3228 = vmatmul.bf16.gmra.mxu0 %v2956
        %v3229 = vpop.f32.mrf.mxu0
        %v3230 = vadd.f32 0.0, %v3229
        %v3231 = vpop.f32.mrf.mxu0
        %v3232 = vadd.f32 0.0, %v3231
        %3233 = vmatmul.bf16.gmra.mxu0 %v2964
        %v3234 = vpop.f32.mrf.mxu0
        %v3235 = vadd.f32 0.0, %v3234
        %v3236 = vpop.f32.mrf.mxu0
        %v3237 = vadd.f32 0.0, %v3236
        %3238 = vmatmul.bf16.gmra.mxu0 %v2972
        %v3239 = vpop.f32.mrf.mxu0
        %v3240 = vadd.f32 0.0, %v3239
        %v3241 = vpop.f32.mrf.mxu0
        %v3242 = vadd.f32 0.0, %v3241
        %3243 = vmatmul.bf16.gmra.mxu0 %v2980
        %v3244 = vpop.f32.mrf.mxu0
        %v3245 = vadd.f32 0.0, %v3244
        %v3246 = vpop.f32.mrf.mxu0
        %v3247 = vadd.f32 0.0, %v3246
        %3248 = vmatmul.bf16.gmra.mxu0 %v2988
        %v3249 = vpop.f32.mrf.mxu0
        %v3250 = vadd.f32 0.0, %v3249
        %v3251 = vpop.f32.mrf.mxu0
        %v3252 = vadd.f32 0.0, %v3251
        %3253 = vmatmul.bf16.gmra.mxu0 %v3024
        %v3254 = vpop.f32.mrf.mxu0
        %v3255 = vadd.f32 0.0, %v3254
        %v3256 = vpop.f32.mrf.mxu0
        %v3257 = vadd.f32 0.0, %v3256
        %3258 = vdwg.mxu0
        %v3259 = vld [vmem:[#allocation2] sm:$0xff]
        %v3260 = vld [vmem:[#allocation2 + $0x8] sm:$0xff]
        %v3261 = vld [vmem:[#allocation2 + $0x10] sm:$0xff]
        %v3262 = vld [vmem:[#allocation2 + $0x18] sm:$0xff]
        %v3263 = vld [vmem:[#allocation2 + $0x20] sm:$0xff]
        %v3264 = vld [vmem:[#allocation2 + $0x28] sm:$0xff]
        %v3265 = vld [vmem:[#allocation2 + $0x30] sm:$0xff]
        %v3266 = vld [vmem:[#allocation2 + $0x38] sm:$0xff]
        %v3267 = vld [vmem:[#allocation2 + $0x40] sm:$0xff]
        %v3268 = vld [vmem:[#allocation2 + $0x48] sm:$0xff]
        %v3269 = vld [vmem:[#allocation2 + $0x50] sm:$0xff]
        %v3270 = vld [vmem:[#allocation2 + $0x58] sm:$0xff]
        %v3271 = vld [vmem:[#allocation2 + $0x60] sm:$0xff]
        %v3272 = vld [vmem:[#allocation2 + $0x68] sm:$0xff]
        %v3273 = vld [vmem:[#allocation2 + $0x70] sm:$0xff]
        %v3274 = vld [vmem:[#allocation2 + $0x78] sm:$0xff]
        %v3275 = vld [vmem:[#allocation2 + $0x80] sm:$0xff]
        %v3276 = vld [vmem:[#allocation2 + $0x88] sm:$0xff]
        %v3277 = vld [vmem:[#allocation2 + $0x90] sm:$0xff]
        %v3278 = vld [vmem:[#allocation2 + $0x98] sm:$0xff]
        %v3279 = vld [vmem:[#allocation2 + $0xa0] sm:$0xff]
        %v3280 = vld [vmem:[#allocation2 + $0xa8] sm:$0xff]
        %v3281 = vld [vmem:[#allocation2 + $0xb0] sm:$0xff]
        %v3282 = vld [vmem:[#allocation2 + $0xb8] sm:$0xff]
        %v3283 = vld [vmem:[#allocation2 + $0xc0] sm:$0xff]
        %v3284 = vld [vmem:[#allocation2 + $0xc8] sm:$0xff]
        %v3285 = vld [vmem:[#allocation2 + $0xd0] sm:$0xff]
        %v3286 = vld [vmem:[#allocation2 + $0xd8] sm:$0xff]
        %v3287 = vld [vmem:[#allocation2 + $0xe0] sm:$0xff]
        %v3288 = vld [vmem:[#allocation2 + $0xe8] sm:$0xff]
        %v3289 = vld [vmem:[#allocation2 + $0xf0] sm:$0xff]
        %v3290 = vld [vmem:[#allocation2 + $0xf8] sm:$0xff]
        %v3291 = vld [vmem:[#allocation2 + $0x100] sm:$0xff]
        %v3292 = vld [vmem:[#allocation2 + $0x108] sm:$0xff]
        %v3293 = vld [vmem:[#allocation2 + $0x110] sm:$0xff]
        %v3294 = vld [vmem:[#allocation2 + $0x118] sm:$0xff]
        %v3295 = vld [vmem:[#allocation2 + $0x120] sm:$0xff]
        %v3296 = vld [vmem:[#allocation2 + $0x128] sm:$0xff]
        %v3297 = vld [vmem:[#allocation2 + $0x130] sm:$0xff]
        %v3298 = vld [vmem:[#allocation2 + $0x138] sm:$0xff]
        %v3299 = vld [vmem:[#allocation2 + $0x140] sm:$0xff]
        %v3300 = vld [vmem:[#allocation2 + $0x148] sm:$0xff]
        %v3301 = vld [vmem:[#allocation2 + $0x150] sm:$0xff]
        %v3302 = vld [vmem:[#allocation2 + $0x158] sm:$0xff]
        %v3303 = vld [vmem:[#allocation2 + $0x160] sm:$0xff]
        %v3304 = vld [vmem:[#allocation2 + $0x168] sm:$0xff]
        %v3305 = vld [vmem:[#allocation2 + $0x170] sm:$0xff]
        %v3306 = vld [vmem:[#allocation2 + $0x178] sm:$0xff]
        %v3307 = vld [vmem:[#allocation2 + $0x180] sm:$0xff]
        %v3308 = vld [vmem:[#allocation2 + $0x188] sm:$0xff]
        %v3309 = vld [vmem:[#allocation2 + $0x190] sm:$0xff]
        %v3310 = vld [vmem:[#allocation2 + $0x198] sm:$0xff]
        %v3311 = vld [vmem:[#allocation2 + $0x1a0] sm:$0xff]
        %v3312 = vld [vmem:[#allocation2 + $0x1a8] sm:$0xff]
        %v3313 = vld [vmem:[#allocation2 + $0x1b0] sm:$0xff]
        %v3314 = vld [vmem:[#allocation2 + $0x1b8] sm:$0xff]
        %v3315 = vld [vmem:[#allocation2 + $0x1c0] sm:$0xff]
        %v3316 = vld [vmem:[#allocation2 + $0x1c8] sm:$0xff]
        %v3317 = vld [vmem:[#allocation2 + $0x1d0] sm:$0xff]
        %v3318 = vld [vmem:[#allocation2 + $0x1d8] sm:$0xff]
        %v3319 = vld [vmem:[#allocation2 + $0x1e0] sm:$0xff]
        %v3320 = vld [vmem:[#allocation2 + $0x1e8] sm:$0xff]
        %v3321 = vld [vmem:[#allocation2 + $0x1f0] sm:$0xff]
        %v3322 = vld [vmem:[#allocation2 + $0x1f8] sm:$0xff]
        %v3323 = vadd.f32 %v3259, %v3100
        %v3324 = vadd.f32 %v3260, %v3102
        %v3325 = vadd.f32 %v3261, %v3105
        %v3326 = vadd.f32 %v3262, %v3107
        %v3327 = vadd.f32 %v3263, %v3110
        %v3328 = vadd.f32 %v3264, %v3112
        %v3329 = vadd.f32 %v3265, %v3115
        %v3330 = vadd.f32 %v3266, %v3117
        %v3331 = vadd.f32 %v3267, %v3120
        %v3332 = vadd.f32 %v3268, %v3122
        %v3333 = vadd.f32 %v3269, %v3125
        %v3334 = vadd.f32 %v3270, %v3127
        %v3335 = vadd.f32 %v3271, %v3130
        %v3336 = vadd.f32 %v3272, %v3132
        %v3337 = vadd.f32 %v3273, %v3135
        %v3338 = vadd.f32 %v3274, %v3137
        %v3339 = vadd.f32 %v3275, %v3140
        %v3340 = vadd.f32 %v3276, %v3142
        %v3341 = vadd.f32 %v3277, %v3145
        %v3342 = vadd.f32 %v3278, %v3147
        %v3343 = vadd.f32 %v3279, %v3150
        %v3344 = vadd.f32 %v3280, %v3152
        %v3345 = vadd.f32 %v3281, %v3155
        %v3346 = vadd.f32 %v3282, %v3157
        %v3347 = vadd.f32 %v3283, %v3160
        %v3348 = vadd.f32 %v3284, %v3162
        %v3349 = vadd.f32 %v3285, %v3165
        %v3350 = vadd.f32 %v3286, %v3167
        %v3351 = vadd.f32 %v3287, %v3170
        %v3352 = vadd.f32 %v3288, %v3172
        %v3353 = vadd.f32 %v3289, %v3175
        %v3354 = vadd.f32 %v3290, %v3177
        %v3355 = vadd.f32 %v3291, %v3180
        %v3356 = vadd.f32 %v3292, %v3182
        %v3357 = vadd.f32 %v3293, %v3185
        %v3358 = vadd.f32 %v3294, %v3187
        %v3359 = vadd.f32 %v3295, %v3190
        %v3360 = vadd.f32 %v3296, %v3192
        %v3361 = vadd.f32 %v3297, %v3195
        %v3362 = vadd.f32 %v3298, %v3197
        %v3363 = vadd.f32 %v3299, %v3200
        %v3364 = vadd.f32 %v3300, %v3202
        %v3365 = vadd.f32 %v3301, %v3205
        %v3366 = vadd.f32 %v3302, %v3207
        %v3367 = vadd.f32 %v3303, %v3210
        %v3368 = vadd.f32 %v3304, %v3212
        %v3369 = vadd.f32 %v3305, %v3215
        %v3370 = vadd.f32 %v3306, %v3217
        %v3371 = vadd.f32 %v3307, %v3220
        %v3372 = vadd.f32 %v3308, %v3222
        %v3373 = vadd.f32 %v3309, %v3225
        %v3374 = vadd.f32 %v3310, %v3227
        %v3375 = vadd.f32 %v3311, %v3230
        %v3376 = vadd.f32 %v3312, %v3232
        %v3377 = vadd.f32 %v3313, %v3235
        %v3378 = vadd.f32 %v3314, %v3237
        %v3379 = vadd.f32 %v3315, %v3240
        %v3380 = vadd.f32 %v3316, %v3242
        %v3381 = vadd.f32 %v3317, %v3245
        %v3382 = vadd.f32 %v3318, %v3247
        %v3383 = vadd.f32 %v3319, %v3250
        %v3384 = vadd.f32 %v3320, %v3252
        %v3385 = vadd.f32 %v3321, %v3255
        %v3386 = vadd.f32 %v3322, %v3257
        %3387 = vst [vmem:[#allocation2] sm:$0xff] %v3323
        %3388 = vst [vmem:[#allocation2 + $0x8] sm:$0xff] %v3324
        %3389 = vst [vmem:[#allocation2 + $0x10] sm:$0xff] %v3325
        %3390 = vst [vmem:[#allocation2 + $0x18] sm:$0xff] %v3326
        %3391 = vst [vmem:[#allocation2 + $0x20] sm:$0xff] %v3327
        %3392 = vst [vmem:[#allocation2 + $0x28] sm:$0xff] %v3328
        %3393 = vst [vmem:[#allocation2 + $0x30] sm:$0xff] %v3329
        %3394 = vst [vmem:[#allocation2 + $0x38] sm:$0xff] %v3330
        %3395 = vst [vmem:[#allocation2 + $0x40] sm:$0xff] %v3331
        %3396 = vst [vmem:[#allocation2 + $0x48] sm:$0xff] %v3332
        %3397 = vst [vmem:[#allocation2 + $0x50] sm:$0xff] %v3333
        %3398 = vst [vmem:[#allocation2 + $0x58] sm:$0xff] %v3334
        %3399 = vst [vmem:[#allocation2 + $0x60] sm:$0xff] %v3335
        %3400 = vst [vmem:[#allocation2 + $0x68] sm:$0xff] %v3336
        %3401 = vst [vmem:[#allocation2 + $0x70] sm:$0xff] %v3337
        %3402 = vst [vmem:[#allocation2 + $0x78] sm:$0xff] %v3338
        %3403 = vst [vmem:[#allocation2 + $0x80] sm:$0xff] %v3339
        %3404 = vst [vmem:[#allocation2 + $0x88] sm:$0xff] %v3340
        %3405 = vst [vmem:[#allocation2 + $0x90] sm:$0xff] %v3341
        %3406 = vst [vmem:[#allocation2 + $0x98] sm:$0xff] %v3342
        %3407 = vst [vmem:[#allocation2 + $0xa0] sm:$0xff] %v3343
        %3408 = vst [vmem:[#allocation2 + $0xa8] sm:$0xff] %v3344
        %3409 = vst [vmem:[#allocation2 + $0xb0] sm:$0xff] %v3345
        %3410 = vst [vmem:[#allocation2 + $0xb8] sm:$0xff] %v3346
        %3411 = vst [vmem:[#allocation2 + $0xc0] sm:$0xff] %v3347
        %3412 = vst [vmem:[#allocation2 + $0xc8] sm:$0xff] %v3348
        %3413 = vst [vmem:[#allocation2 + $0xd0] sm:$0xff] %v3349
        %3414 = vst [vmem:[#allocation2 + $0xd8] sm:$0xff] %v3350
        %3415 = vst [vmem:[#allocation2 + $0xe0] sm:$0xff] %v3351
        %3416 = vst [vmem:[#allocation2 + $0xe8] sm:$0xff] %v3352
        %3417 = vst [vmem:[#allocation2 + $0xf0] sm:$0xff] %v3353
        %3418 = vst [vmem:[#allocation2 + $0xf8] sm:$0xff] %v3354
        %3419 = vst [vmem:[#allocation2 + $0x100] sm:$0xff] %v3355
        %3420 = vst [vmem:[#allocation2 + $0x108] sm:$0xff] %v3356
        %3421 = vst [vmem:[#allocation2 + $0x110] sm:$0xff] %v3357
        %3422 = vst [vmem:[#allocation2 + $0x118] sm:$0xff] %v3358
        %3423 = vst [vmem:[#allocation2 + $0x120] sm:$0xff] %v3359
        %3424 = vst [vmem:[#allocation2 + $0x128] sm:$0xff] %v3360
        %3425 = vst [vmem:[#allocation2 + $0x130] sm:$0xff] %v3361
        %3426 = vst [vmem:[#allocation2 + $0x138] sm:$0xff] %v3362
        %3427 = vst [vmem:[#allocation2 + $0x140] sm:$0xff] %v3363
        %3428 = vst [vmem:[#allocation2 + $0x148] sm:$0xff] %v3364
        %3429 = vst [vmem:[#allocation2 + $0x150] sm:$0xff] %v3365
        %3430 = vst [vmem:[#allocation2 + $0x158] sm:$0xff] %v3366
        %3431 = vst [vmem:[#allocation2 + $0x160] sm:$0xff] %v3367
        %3432 = vst [vmem:[#allocation2 + $0x168] sm:$0xff] %v3368
        %3433 = vst [vmem:[#allocation2 + $0x170] sm:$0xff] %v3369
        %3434 = vst [vmem:[#allocation2 + $0x178] sm:$0xff] %v3370
        %3435 = vst [vmem:[#allocation2 + $0x180] sm:$0xff] %v3371
        %3436 = vst [vmem:[#allocation2 + $0x188] sm:$0xff] %v3372
        %3437 = vst [vmem:[#allocation2 + $0x190] sm:$0xff] %v3373
        %3438 = vst [vmem:[#allocation2 + $0x198] sm:$0xff] %v3374
        %3439 = vst [vmem:[#allocation2 + $0x1a0] sm:$0xff] %v3375
        %3440 = vst [vmem:[#allocation2 + $0x1a8] sm:$0xff] %v3376
        %3441 = vst [vmem:[#allocation2 + $0x1b0] sm:$0xff] %v3377
        %3442 = vst [vmem:[#allocation2 + $0x1b8] sm:$0xff] %v3378
        %3443 = vst [vmem:[#allocation2 + $0x1c0] sm:$0xff] %v3379
        %3444 = vst [vmem:[#allocation2 + $0x1c8] sm:$0xff] %v3380
        %3445 = vst [vmem:[#allocation2 + $0x1d0] sm:$0xff] %v3381
        %3446 = vst [vmem:[#allocation2 + $0x1d8] sm:$0xff] %v3382
        %3447 = vst [vmem:[#allocation2 + $0x1e0] sm:$0xff] %v3383
        %3448 = vst [vmem:[#allocation2 + $0x1e8] sm:$0xff] %v3384
        %3449 = vst [vmem:[#allocation2 + $0x1f0] sm:$0xff] %v3385
        %3450 = vst [vmem:[#allocation2 + $0x1f8] sm:$0xff] %v3386
        %v3451 = vrot.slane %v2264, 1
        %v3452 = vrot.slane %v2265, 1
        %v3453 = vsel %vm1528, %v3451, %v3452
        %v3454 = vrot.slane %v2266, 1
        %v3455 = vsel %vm1528, %v3452, %v3454
        %v3456 = vrot.slane %v2267, 1
        %v3457 = vsel %vm1528, %v3454, %v3456
        %v3458 = vrot.slane %v2268, 1
        %v3459 = vsel %vm1528, %v3456, %v3458
        %v3460 = vrot.slane %v2269, 1
        %v3461 = vsel %vm1528, %v3458, %v3460
        %v3462 = vrot.slane %v2270, 1
        %v3463 = vsel %vm1528, %v3460, %v3462
        %v3464 = vrot.slane %v2271, 1
        %v3465 = vsel %vm1528, %v3462, %v3464
        %v3466 = vrot.slane %v2272, 1
        %v3467 = vsel %vm1528, %v3464, %v3466
        %v3468 = vrot.slane %v2273, 1
        %v3469 = vsel %vm1528, %v3466, %v3468
        %v3470 = vrot.slane %v2274, 1
        %v3471 = vsel %vm1528, %v3468, %v3470
        %v3472 = vrot.slane %v2275, 1
        %v3473 = vsel %vm1528, %v3470, %v3472
        %v3474 = vrot.slane %v2276, 1
        %v3475 = vsel %vm1528, %v3472, %v3474
        %v3476 = vrot.slane %v2277, 1
        %v3477 = vsel %vm1528, %v3474, %v3476
        %v3478 = vrot.slane %v2278, 1
        %v3479 = vsel %vm1528, %v3476, %v3478
        %v3480 = vrot.slane %v2279, 1
        %v3481 = vsel %vm1528, %v3478, %v3480
        %v3482 = vrot.slane %v2280, 1
        %v3483 = vsel %vm1528, %v3480, %v3482
        %v3484 = vrot.slane %v2281, 1
        %v3485 = vsel %vm1528, %v3482, %v3484
        %v3486 = vrot.slane %v2282, 1
        %v3487 = vsel %vm1528, %v3484, %v3486
        %v3488 = vrot.slane %v2283, 1
        %v3489 = vsel %vm1528, %v3486, %v3488
        %v3490 = vrot.slane %v2284, 1
        %v3491 = vsel %vm1528, %v3488, %v3490
        %v3492 = vrot.slane %v2285, 1
        %v3493 = vsel %vm1528, %v3490, %v3492
        %v3494 = vrot.slane %v2286, 1
        %v3495 = vsel %vm1528, %v3492, %v3494
        %v3496 = vrot.slane %v2287, 1
        %v3497 = vsel %vm1528, %v3494, %v3496
        %v3498 = vrot.slane %v2288, 1
        %v3499 = vsel %vm1528, %v3496, %v3498
        %v3500 = vrot.slane %v2289, 1
        %v3501 = vsel %vm1528, %v3498, %v3500
        %v3502 = vrot.slane %v2290, 1
        %v3503 = vsel %vm1528, %v3500, %v3502
        %v3504 = vrot.slane %v2291, 1
        %v3505 = vsel %vm1528, %v3502, %v3504
        %v3506 = vrot.slane %v2292, 1
        %v3507 = vsel %vm1528, %v3504, %v3506
        %v3508 = vrot.slane %v2293, 1
        %v3509 = vsel %vm1528, %v3506, %v3508
        %v3510 = vrot.slane %v2294, 1
        %v3511 = vsel %vm1528, %v3508, %v3510
        %v3512 = vrot.slane %v2295, 1
        %v3513 = vsel %vm1528, %v3510, %v3512
        %v3546 = vsel %vm1623, %v3512, 0
        %s3548 = scalar_lea.vmem [#allocation6], 320
        %v3549 = vld [vmem:[%s3548] sm:$0xf]
        %v3550 = vld [vmem:[%s3548 + $0x4] sm:$0xf]
        %v3551 = vld [vmem:[%s3548 + $0x8] sm:$0xf]
        %v3552 = vld [vmem:[%s3548 + $0xc] sm:$0xf]
        %v3553 = vld [vmem:[%s3548 + $0x10] sm:$0xf]
        %v3554 = vld [vmem:[%s3548 + $0x14] sm:$0xf]
        %v3555 = vld [vmem:[%s3548 + $0x18] sm:$0xf]
        %v3556 = vld [vmem:[%s3548 + $0x1c] sm:$0xf]
        %v3557 = vld [vmem:[%s3548 + $0x20] sm:$0xf]
        %v3558 = vld [vmem:[%s3548 + $0x24] sm:$0xf]
        %v3559 = vld [vmem:[%s3548 + $0x28] sm:$0xf]
        %v3560 = vld [vmem:[%s3548 + $0x2c] sm:$0xf]
        %v3561 = vld [vmem:[%s3548 + $0x30] sm:$0xf]
        %v3562 = vld [vmem:[%s3548 + $0x34] sm:$0xf]
        %v3563 = vld [vmem:[%s3548 + $0x38] sm:$0xf]
        %v3564 = vld [vmem:[%s3548 + $0x3c] sm:$0xf]
        %v3581 = vunpack.c.l.b16 %v3549
        %v3582 = vunpack.c.l.b16 %v3550
        %v3583 = vunpack.c.l.b16 %v3551
        %v3584 = vunpack.c.l.b16 %v3552
        %v3585 = vunpack.c.l.b16 %v3553
        %v3586 = vunpack.c.l.b16 %v3554
        %v3587 = vunpack.c.l.b16 %v3555
        %v3588 = vunpack.c.l.b16 %v3556
        %v3589 = vunpack.c.l.b16 %v3557
        %v3590 = vunpack.c.l.b16 %v3558
        %v3591 = vunpack.c.l.b16 %v3559
        %v3592 = vunpack.c.l.b16 %v3560
        %v3593 = vunpack.c.l.b16 %v3561
        %v3594 = vunpack.c.l.b16 %v3562
        %v3595 = vunpack.c.l.b16 %v3563
        %v3596 = vunpack.c.l.b16 %v3564
        %v3597 = vpack.c.b16 %v3582, %v3581
        %v3598 = vpack.c.b16 %v3584, %v3583
        %v3599 = vpack.c.b16 %v3586, %v3585
        %v3600 = vpack.c.b16 %v3588, %v3587
        %v3601 = vpack.c.b16 %v3590, %v3589
        %v3602 = vpack.c.b16 %v3592, %v3591
        %v3603 = vpack.c.b16 %v3594, %v3593
        %v3604 = vpack.c.b16 %v3596, %v3595
        %3613 = vmatpush.bf16.msra.mxu0 %v3604
        %3614 = vmatpush.bf16.msra.mxu0 %v3603
        %3615 = vmatpush.bf16.msra.mxu0 %v3602
        %3616 = vmatpush.bf16.msra.mxu0 %v3601
        %3617 = vmatpush.bf16.msra.mxu0 %v3600
        %3618 = vmatpush.bf16.msra.mxu0 %v3599
        %3619 = vmatpush.bf16.msra.mxu0 %v3598
        %3620 = vmatpush.bf16.msra.mxu0 %v3597
        %3621 = vmatmul.bf16.gmra.mxu0 %v3453
        %v3622 = vpop.f32.mrf.mxu0
        %v3623 = vadd.f32 0.0, %v3622
        %v3624 = vpop.f32.mrf.mxu0
        %v3625 = vadd.f32 0.0, %v3624
        %3626 = vmatmul.bf16.gmra.mxu0 %v3455
        %v3627 = vpop.f32.mrf.mxu0
        %v3628 = vadd.f32 0.0, %v3627
        %v3629 = vpop.f32.mrf.mxu0
        %v3630 = vadd.f32 0.0, %v3629
        %3631 = vmatmul.bf16.gmra.mxu0 %v3457
        %v3632 = vpop.f32.mrf.mxu0
        %v3633 = vadd.f32 0.0, %v3632
        %v3634 = vpop.f32.mrf.mxu0
        %v3635 = vadd.f32 0.0, %v3634
        %3636 = vmatmul.bf16.gmra.mxu0 %v3459
        %v3637 = vpop.f32.mrf.mxu0
        %v3638 = vadd.f32 0.0, %v3637
        %v3639 = vpop.f32.mrf.mxu0
        %v3640 = vadd.f32 0.0, %v3639
        %3641 = vmatmul.bf16.gmra.mxu0 %v3461
        %v3642 = vpop.f32.mrf.mxu0
        %v3643 = vadd.f32 0.0, %v3642
        %v3644 = vpop.f32.mrf.mxu0
        %v3645 = vadd.f32 0.0, %v3644
        %3646 = vmatmul.bf16.gmra.mxu0 %v3463
        %v3647 = vpop.f32.mrf.mxu0
        %v3648 = vadd.f32 0.0, %v3647
        %v3649 = vpop.f32.mrf.mxu0
        %v3650 = vadd.f32 0.0, %v3649
        %3651 = vmatmul.bf16.gmra.mxu0 %v3465
        %v3652 = vpop.f32.mrf.mxu0
        %v3653 = vadd.f32 0.0, %v3652
        %v3654 = vpop.f32.mrf.mxu0
        %v3655 = vadd.f32 0.0, %v3654
        %3656 = vmatmul.bf16.gmra.mxu0 %v3467
        %v3657 = vpop.f32.mrf.mxu0
        %v3658 = vadd.f32 0.0, %v3657
        %v3659 = vpop.f32.mrf.mxu0
        %v3660 = vadd.f32 0.0, %v3659
        %3661 = vmatmul.bf16.gmra.mxu0 %v3469
        %v3662 = vpop.f32.mrf.mxu0
        %v3663 = vadd.f32 0.0, %v3662
        %v3664 = vpop.f32.mrf.mxu0
        %v3665 = vadd.f32 0.0, %v3664
        %3666 = vmatmul.bf16.gmra.mxu0 %v3471
        %v3667 = vpop.f32.mrf.mxu0
        %v3668 = vadd.f32 0.0, %v3667
        %v3669 = vpop.f32.mrf.mxu0
        %v3670 = vadd.f32 0.0, %v3669
        %3671 = vmatmul.bf16.gmra.mxu0 %v3473
        %v3672 = vpop.f32.mrf.mxu0
        %v3673 = vadd.f32 0.0, %v3672
        %v3674 = vpop.f32.mrf.mxu0
        %v3675 = vadd.f32 0.0, %v3674
        %3676 = vmatmul.bf16.gmra.mxu0 %v3475
        %v3677 = vpop.f32.mrf.mxu0
        %v3678 = vadd.f32 0.0, %v3677
        %v3679 = vpop.f32.mrf.mxu0
        %v3680 = vadd.f32 0.0, %v3679
        %3681 = vmatmul.bf16.gmra.mxu0 %v3477
        %v3682 = vpop.f32.mrf.mxu0
        %v3683 = vadd.f32 0.0, %v3682
        %v3684 = vpop.f32.mrf.mxu0
        %v3685 = vadd.f32 0.0, %v3684
        %3686 = vmatmul.bf16.gmra.mxu0 %v3479
        %v3687 = vpop.f32.mrf.mxu0
        %v3688 = vadd.f32 0.0, %v3687
        %v3689 = vpop.f32.mrf.mxu0
        %v3690 = vadd.f32 0.0, %v3689
        %3691 = vmatmul.bf16.gmra.mxu0 %v3481
        %v3692 = vpop.f32.mrf.mxu0
        %v3693 = vadd.f32 0.0, %v3692
        %v3694 = vpop.f32.mrf.mxu0
        %v3695 = vadd.f32 0.0, %v3694
        %3696 = vmatmul.bf16.gmra.mxu0 %v3483
        %v3697 = vpop.f32.mrf.mxu0
        %v3698 = vadd.f32 0.0, %v3697
        %v3699 = vpop.f32.mrf.mxu0
        %v3700 = vadd.f32 0.0, %v3699
        %3701 = vmatmul.bf16.gmra.mxu0 %v3485
        %v3702 = vpop.f32.mrf.mxu0
        %v3703 = vadd.f32 0.0, %v3702
        %v3704 = vpop.f32.mrf.mxu0
        %v3705 = vadd.f32 0.0, %v3704
        %3706 = vmatmul.bf16.gmra.mxu0 %v3487
        %v3707 = vpop.f32.mrf.mxu0
        %v3708 = vadd.f32 0.0, %v3707
        %v3709 = vpop.f32.mrf.mxu0
        %v3710 = vadd.f32 0.0, %v3709
        %3711 = vmatmul.bf16.gmra.mxu0 %v3489
        %v3712 = vpop.f32.mrf.mxu0
        %v3713 = vadd.f32 0.0, %v3712
        %v3714 = vpop.f32.mrf.mxu0
        %v3715 = vadd.f32 0.0, %v3714
        %3716 = vmatmul.bf16.gmra.mxu0 %v3491
        %v3717 = vpop.f32.mrf.mxu0
        %v3718 = vadd.f32 0.0, %v3717
        %v3719 = vpop.f32.mrf.mxu0
        %v3720 = vadd.f32 0.0, %v3719
        %3721 = vmatmul.bf16.gmra.mxu0 %v3493
        %v3722 = vpop.f32.mrf.mxu0
        %v3723 = vadd.f32 0.0, %v3722
        %v3724 = vpop.f32.mrf.mxu0
        %v3725 = vadd.f32 0.0, %v3724
        %3726 = vmatmul.bf16.gmra.mxu0 %v3495
        %v3727 = vpop.f32.mrf.mxu0
        %v3728 = vadd.f32 0.0, %v3727
        %v3729 = vpop.f32.mrf.mxu0
        %v3730 = vadd.f32 0.0, %v3729
        %3731 = vmatmul.bf16.gmra.mxu0 %v3497
        %v3732 = vpop.f32.mrf.mxu0
        %v3733 = vadd.f32 0.0, %v3732
        %v3734 = vpop.f32.mrf.mxu0
        %v3735 = vadd.f32 0.0, %v3734
        %3736 = vmatmul.bf16.gmra.mxu0 %v3499
        %v3737 = vpop.f32.mrf.mxu0
        %v3738 = vadd.f32 0.0, %v3737
        %v3739 = vpop.f32.mrf.mxu0
        %v3740 = vadd.f32 0.0, %v3739
        %3741 = vmatmul.bf16.gmra.mxu0 %v3501
        %v3742 = vpop.f32.mrf.mxu0
        %v3743 = vadd.f32 0.0, %v3742
        %v3744 = vpop.f32.mrf.mxu0
        %v3745 = vadd.f32 0.0, %v3744
        %3746 = vmatmul.bf16.gmra.mxu0 %v3503
        %v3747 = vpop.f32.mrf.mxu0
        %v3748 = vadd.f32 0.0, %v3747
        %v3749 = vpop.f32.mrf.mxu0
        %v3750 = vadd.f32 0.0, %v3749
        %3751 = vmatmul.bf16.gmra.mxu0 %v3505
        %v3752 = vpop.f32.mrf.mxu0
        %v3753 = vadd.f32 0.0, %v3752
        %v3754 = vpop.f32.mrf.mxu0
        %v3755 = vadd.f32 0.0, %v3754
        %3756 = vmatmul.bf16.gmra.mxu0 %v3507
        %v3757 = vpop.f32.mrf.mxu0
        %v3758 = vadd.f32 0.0, %v3757
        %v3759 = vpop.f32.mrf.mxu0
        %v3760 = vadd.f32 0.0, %v3759
        %3761 = vmatmul.bf16.gmra.mxu0 %v3509
        %v3762 = vpop.f32.mrf.mxu0
        %v3763 = vadd.f32 0.0, %v3762
        %v3764 = vpop.f32.mrf.mxu0
        %v3765 = vadd.f32 0.0, %v3764
        %3766 = vmatmul.bf16.gmra.mxu0 %v3511
        %v3767 = vpop.f32.mrf.mxu0
        %v3768 = vadd.f32 0.0, %v3767
        %v3769 = vpop.f32.mrf.mxu0
        %v3770 = vadd.f32 0.0, %v3769
        %3771 = vmatmul.bf16.gmra.mxu0 %v3513
        %v3772 = vpop.f32.mrf.mxu0
        %v3773 = vadd.f32 0.0, %v3772
        %v3774 = vpop.f32.mrf.mxu0
        %v3775 = vadd.f32 0.0, %v3774
        %3776 = vmatmul.bf16.gmra.mxu0 %v3546
        %v3777 = vpop.f32.mrf.mxu0
        %v3778 = vadd.f32 0.0, %v3777
        %v3779 = vpop.f32.mrf.mxu0
        %v3780 = vadd.f32 0.0, %v3779
        %3781 = vdwg.mxu0
        %v3782 = vld [vmem:[#allocation2] sm:$0xff]
        %v3783 = vld [vmem:[#allocation2 + $0x8] sm:$0xff]
        %v3784 = vld [vmem:[#allocation2 + $0x10] sm:$0xff]
        %v3785 = vld [vmem:[#allocation2 + $0x18] sm:$0xff]
        %v3786 = vld [vmem:[#allocation2 + $0x20] sm:$0xff]
        %v3787 = vld [vmem:[#allocation2 + $0x28] sm:$0xff]
        %v3788 = vld [vmem:[#allocation2 + $0x30] sm:$0xff]
        %v3789 = vld [vmem:[#allocation2 + $0x38] sm:$0xff]
        %v3790 = vld [vmem:[#allocation2 + $0x40] sm:$0xff]
        %v3791 = vld [vmem:[#allocation2 + $0x48] sm:$0xff]
        %v3792 = vld [vmem:[#allocation2 + $0x50] sm:$0xff]
        %v3793 = vld [vmem:[#allocation2 + $0x58] sm:$0xff]
        %v3794 = vld [vmem:[#allocation2 + $0x60] sm:$0xff]
        %v3795 = vld [vmem:[#allocation2 + $0x68] sm:$0xff]
        %v3796 = vld [vmem:[#allocation2 + $0x70] sm:$0xff]
        %v3797 = vld [vmem:[#allocation2 + $0x78] sm:$0xff]
        %v3798 = vld [vmem:[#allocation2 + $0x80] sm:$0xff]
        %v3799 = vld [vmem:[#allocation2 + $0x88] sm:$0xff]
        %v3800 = vld [vmem:[#allocation2 + $0x90] sm:$0xff]
        %v3801 = vld [vmem:[#allocation2 + $0x98] sm:$0xff]
        %v3802 = vld [vmem:[#allocation2 + $0xa0] sm:$0xff]
        %v3803 = vld [vmem:[#allocation2 + $0xa8] sm:$0xff]
        %v3804 = vld [vmem:[#allocation2 + $0xb0] sm:$0xff]
        %v3805 = vld [vmem:[#allocation2 + $0xb8] sm:$0xff]
        %v3806 = vld [vmem:[#allocation2 + $0xc0] sm:$0xff]
        %v3807 = vld [vmem:[#allocation2 + $0xc8] sm:$0xff]
        %v3808 = vld [vmem:[#allocation2 + $0xd0] sm:$0xff]
        %v3809 = vld [vmem:[#allocation2 + $0xd8] sm:$0xff]
        %v3810 = vld [vmem:[#allocation2 + $0xe0] sm:$0xff]
        %v3811 = vld [vmem:[#allocation2 + $0xe8] sm:$0xff]
        %v3812 = vld [vmem:[#allocation2 + $0xf0] sm:$0xff]
        %v3813 = vld [vmem:[#allocation2 + $0xf8] sm:$0xff]
        %v3814 = vld [vmem:[#allocation2 + $0x100] sm:$0xff]
        %v3815 = vld [vmem:[#allocation2 + $0x108] sm:$0xff]
        %v3816 = vld [vmem:[#allocation2 + $0x110] sm:$0xff]
        %v3817 = vld [vmem:[#allocation2 + $0x118] sm:$0xff]
        %v3818 = vld [vmem:[#allocation2 + $0x120] sm:$0xff]
        %v3819 = vld [vmem:[#allocation2 + $0x128] sm:$0xff]
        %v3820 = vld [vmem:[#allocation2 + $0x130] sm:$0xff]
        %v3821 = vld [vmem:[#allocation2 + $0x138] sm:$0xff]
        %v3822 = vld [vmem:[#allocation2 + $0x140] sm:$0xff]
        %v3823 = vld [vmem:[#allocation2 + $0x148] sm:$0xff]
        %v3824 = vld [vmem:[#allocation2 + $0x150] sm:$0xff]
        %v3825 = vld [vmem:[#allocation2 + $0x158] sm:$0xff]
        %v3826 = vld [vmem:[#allocation2 + $0x160] sm:$0xff]
        %v3827 = vld [vmem:[#allocation2 + $0x168] sm:$0xff]
        %v3828 = vld [vmem:[#allocation2 + $0x170] sm:$0xff]
        %v3829 = vld [vmem:[#allocation2 + $0x178] sm:$0xff]
        %v3830 = vld [vmem:[#allocation2 + $0x180] sm:$0xff]
        %v3831 = vld [vmem:[#allocation2 + $0x188] sm:$0xff]
        %v3832 = vld [vmem:[#allocation2 + $0x190] sm:$0xff]
        %v3833 = vld [vmem:[#allocation2 + $0x198] sm:$0xff]
        %v3834 = vld [vmem:[#allocation2 + $0x1a0] sm:$0xff]
        %v3835 = vld [vmem:[#allocation2 + $0x1a8] sm:$0xff]
        %v3836 = vld [vmem:[#allocation2 + $0x1b0] sm:$0xff]
        %v3837 = vld [vmem:[#allocation2 + $0x1b8] sm:$0xff]
        %v3838 = vld [vmem:[#allocation2 + $0x1c0] sm:$0xff]
        %v3839 = vld [vmem:[#allocation2 + $0x1c8] sm:$0xff]
        %v3840 = vld [vmem:[#allocation2 + $0x1d0] sm:$0xff]
        %v3841 = vld [vmem:[#allocation2 + $0x1d8] sm:$0xff]
        %v3842 = vld [vmem:[#allocation2 + $0x1e0] sm:$0xff]
        %v3843 = vld [vmem:[#allocation2 + $0x1e8] sm:$0xff]
        %v3844 = vld [vmem:[#allocation2 + $0x1f0] sm:$0xff]
        %v3845 = vld [vmem:[#allocation2 + $0x1f8] sm:$0xff]
        %v3846 = vadd.f32 %v3782, %v3623
        %v3847 = vadd.f32 %v3783, %v3625
        %v3848 = vadd.f32 %v3784, %v3628
        %v3849 = vadd.f32 %v3785, %v3630
        %v3850 = vadd.f32 %v3786, %v3633
        %v3851 = vadd.f32 %v3787, %v3635
        %v3852 = vadd.f32 %v3788, %v3638
        %v3853 = vadd.f32 %v3789, %v3640
        %v3854 = vadd.f32 %v3790, %v3643
        %v3855 = vadd.f32 %v3791, %v3645
        %v3856 = vadd.f32 %v3792, %v3648
        %v3857 = vadd.f32 %v3793, %v3650
        %v3858 = vadd.f32 %v3794, %v3653
        %v3859 = vadd.f32 %v3795, %v3655
        %v3860 = vadd.f32 %v3796, %v3658
        %v3861 = vadd.f32 %v3797, %v3660
        %v3862 = vadd.f32 %v3798, %v3663
        %v3863 = vadd.f32 %v3799, %v3665
        %v3864 = vadd.f32 %v3800, %v3668
        %v3865 = vadd.f32 %v3801, %v3670
        %v3866 = vadd.f32 %v3802, %v3673
        %v3867 = vadd.f32 %v3803, %v3675
        %v3868 = vadd.f32 %v3804, %v3678
        %v3869 = vadd.f32 %v3805, %v3680
        %v3870 = vadd.f32 %v3806, %v3683
        %v3871 = vadd.f32 %v3807, %v3685
        %v3872 = vadd.f32 %v3808, %v3688
        %v3873 = vadd.f32 %v3809, %v3690
        %v3874 = vadd.f32 %v3810, %v3693
        %v3875 = vadd.f32 %v3811, %v3695
        %v3876 = vadd.f32 %v3812, %v3698
        %v3877 = vadd.f32 %v3813, %v3700
        %v3878 = vadd.f32 %v3814, %v3703
        %v3879 = vadd.f32 %v3815, %v3705
        %v3880 = vadd.f32 %v3816, %v3708
        %v3881 = vadd.f32 %v3817, %v3710
        %v3882 = vadd.f32 %v3818, %v3713
        %v3883 = vadd.f32 %v3819, %v3715
        %v3884 = vadd.f32 %v3820, %v3718
        %v3885 = vadd.f32 %v3821, %v3720
        %v3886 = vadd.f32 %v3822, %v3723
        %v3887 = vadd.f32 %v3823, %v3725
        %v3888 = vadd.f32 %v3824, %v3728
        %v3889 = vadd.f32 %v3825, %v3730
        %v3890 = vadd.f32 %v3826, %v3733
        %v3891 = vadd.f32 %v3827, %v3735
        %v3892 = vadd.f32 %v3828, %v3738
        %v3893 = vadd.f32 %v3829, %v3740
        %v3894 = vadd.f32 %v3830, %v3743
        %v3895 = vadd.f32 %v3831, %v3745
        %v3896 = vadd.f32 %v3832, %v3748
        %v3897 = vadd.f32 %v3833, %v3750
        %v3898 = vadd.f32 %v3834, %v3753
        %v3899 = vadd.f32 %v3835, %v3755
        %v3900 = vadd.f32 %v3836, %v3758
        %v3901 = vadd.f32 %v3837, %v3760
        %v3902 = vadd.f32 %v3838, %v3763
        %v3903 = vadd.f32 %v3839, %v3765
        %v3904 = vadd.f32 %v3840, %v3768
        %v3905 = vadd.f32 %v3841, %v3770
        %v3906 = vadd.f32 %v3842, %v3773
        %v3907 = vadd.f32 %v3843, %v3775
        %v3908 = vadd.f32 %v3844, %v3778
        %v3909 = vadd.f32 %v3845, %v3780
        %3910 = vst [vmem:[#allocation2] sm:$0xff] %v3846
        %3911 = vst [vmem:[#allocation2 + $0x8] sm:$0xff] %v3847
        %3912 = vst [vmem:[#allocation2 + $0x10] sm:$0xff] %v3848
        %3913 = vst [vmem:[#allocation2 + $0x18] sm:$0xff] %v3849
        %3914 = vst [vmem:[#allocation2 + $0x20] sm:$0xff] %v3850
        %3915 = vst [vmem:[#allocation2 + $0x28] sm:$0xff] %v3851
        %3916 = vst [vmem:[#allocation2 + $0x30] sm:$0xff] %v3852
        %3917 = vst [vmem:[#allocation2 + $0x38] sm:$0xff] %v3853
        %3918 = vst [vmem:[#allocation2 + $0x40] sm:$0xff] %v3854
        %3919 = vst [vmem:[#allocation2 + $0x48] sm:$0xff] %v3855
        %3920 = vst [vmem:[#allocation2 + $0x50] sm:$0xff] %v3856
        %3921 = vst [vmem:[#allocation2 + $0x58] sm:$0xff] %v3857
        %3922 = vst [vmem:[#allocation2 + $0x60] sm:$0xff] %v3858
        %3923 = vst [vmem:[#allocation2 + $0x68] sm:$0xff] %v3859
        %3924 = vst [vmem:[#allocation2 + $0x70] sm:$0xff] %v3860
        %3925 = vst [vmem:[#allocation2 + $0x78] sm:$0xff] %v3861
        %3926 = vst [vmem:[#allocation2 + $0x80] sm:$0xff] %v3862
        %3927 = vst [vmem:[#allocation2 + $0x88] sm:$0xff] %v3863
        %3928 = vst [vmem:[#allocation2 + $0x90] sm:$0xff] %v3864
        %3929 = vst [vmem:[#allocation2 + $0x98] sm:$0xff] %v3865
        %3930 = vst [vmem:[#allocation2 + $0xa0] sm:$0xff] %v3866
        %3931 = vst [vmem:[#allocation2 + $0xa8] sm:$0xff] %v3867
        %3932 = vst [vmem:[#allocation2 + $0xb0] sm:$0xff] %v3868
        %3933 = vst [vmem:[#allocation2 + $0xb8] sm:$0xff] %v3869
        %3934 = vst [vmem:[#allocation2 + $0xc0] sm:$0xff] %v3870
        %3935 = vst [vmem:[#allocation2 + $0xc8] sm:$0xff] %v3871
        %3936 = vst [vmem:[#allocation2 + $0xd0] sm:$0xff] %v3872
        %3937 = vst [vmem:[#allocation2 + $0xd8] sm:$0xff] %v3873
        %3938 = vst [vmem:[#allocation2 + $0xe0] sm:$0xff] %v3874
        %3939 = vst [vmem:[#allocation2 + $0xe8] sm:$0xff] %v3875
        %3940 = vst [vmem:[#allocation2 + $0xf0] sm:$0xff] %v3876
        %3941 = vst [vmem:[#allocation2 + $0xf8] sm:$0xff] %v3877
        %3942 = vst [vmem:[#allocation2 + $0x100] sm:$0xff] %v3878
        %3943 = vst [vmem:[#allocation2 + $0x108] sm:$0xff] %v3879
        %3944 = vst [vmem:[#allocation2 + $0x110] sm:$0xff] %v3880
        %3945 = vst [vmem:[#allocation2 + $0x118] sm:$0xff] %v3881
        %3946 = vst [vmem:[#allocation2 + $0x120] sm:$0xff] %v3882
        %3947 = vst [vmem:[#allocation2 + $0x128] sm:$0xff] %v3883
        %3948 = vst [vmem:[#allocation2 + $0x130] sm:$0xff] %v3884
        %3949 = vst [vmem:[#allocation2 + $0x138] sm:$0xff] %v3885
        %3950 = vst [vmem:[#allocation2 + $0x140] sm:$0xff] %v3886
        %3951 = vst [vmem:[#allocation2 + $0x148] sm:$0xff] %v3887
        %3952 = vst [vmem:[#allocation2 + $0x150] sm:$0xff] %v3888
        %3953 = vst [vmem:[#allocation2 + $0x158] sm:$0xff] %v3889
        %3954 = vst [vmem:[#allocation2 + $0x160] sm:$0xff] %v3890
        %3955 = vst [vmem:[#allocation2 + $0x168] sm:$0xff] %v3891
        %3956 = vst [vmem:[#allocation2 + $0x170] sm:$0xff] %v3892
        %3957 = vst [vmem:[#allocation2 + $0x178] sm:$0xff] %v3893
        %3958 = vst [vmem:[#allocation2 + $0x180] sm:$0xff] %v3894
        %3959 = vst [vmem:[#allocation2 + $0x188] sm:$0xff] %v3895
        %3960 = vst [vmem:[#allocation2 + $0x190] sm:$0xff] %v3896
        %3961 = vst [vmem:[#allocation2 + $0x198] sm:$0xff] %v3897
        %3962 = vst [vmem:[#allocation2 + $0x1a0] sm:$0xff] %v3898
        %3963 = vst [vmem:[#allocation2 + $0x1a8] sm:$0xff] %v3899
        %3964 = vst [vmem:[#allocation2 + $0x1b0] sm:$0xff] %v3900
        %3965 = vst [vmem:[#allocation2 + $0x1b8] sm:$0xff] %v3901
        %3966 = vst [vmem:[#allocation2 + $0x1c0] sm:$0xff] %v3902
        %3967 = vst [vmem:[#allocation2 + $0x1c8] sm:$0xff] %v3903
        %3968 = vst [vmem:[#allocation2 + $0x1d0] sm:$0xff] %v3904
        %3969 = vst [vmem:[#allocation2 + $0x1d8] sm:$0xff] %v3905
        %3970 = vst [vmem:[#allocation2 + $0x1e0] sm:$0xff] %v3906
        %3971 = vst [vmem:[#allocation2 + $0x1e8] sm:$0xff] %v3907
        %3972 = vst [vmem:[#allocation2 + $0x1f0] sm:$0xff] %v3908
        %3973 = vst [vmem:[#allocation2 + $0x1f8] sm:$0xff] %v3909
        %s3974 = scalar_lea.vmem %s220, 32 [#allocation3]
        %v3975 = vld [vmem:[%s3974] sm:$0xf]
        %v3976 = vld [vmem:[%s3974 + $0x4] sm:$0xf]
        %v3977 = vld [vmem:[%s3974 + $0x8] sm:$0xf]
        %v3978 = vld [vmem:[%s3974 + $0xc] sm:$0xf]
        %v3979 = vld [vmem:[%s3974 + $0x10] sm:$0xf]
        %v3980 = vld [vmem:[%s3974 + $0x14] sm:$0xf]
        %v3981 = vld [vmem:[%s3974 + $0x18] sm:$0xf]
        %v3982 = vld [vmem:[%s3974 + $0x1c] sm:$0xf]
        %v3983 = vld [vmem:[%s3974 + $0x20] sm:$0xf]
        %v3984 = vld [vmem:[%s3974 + $0x24] sm:$0xf]
        %v3985 = vld [vmem:[%s3974 + $0x28] sm:$0xf]
        %v3986 = vld [vmem:[%s3974 + $0x2c] sm:$0xf]
        %v3987 = vld [vmem:[%s3974 + $0x30] sm:$0xf]
        %v3988 = vld [vmem:[%s3974 + $0x34] sm:$0xf]
        %v3989 = vld [vmem:[%s3974 + $0x38] sm:$0xf]
        %v3990 = vld [vmem:[%s3974 + $0x3c] sm:$0xf]
        %v3991 = vld [vmem:[%s3974 + $0x40] sm:$0xf]
        %v3992 = vld [vmem:[%s3974 + $0x44] sm:$0xf]
        %v3993 = vld [vmem:[%s3974 + $0x48] sm:$0xf]
        %v3994 = vld [vmem:[%s3974 + $0x4c] sm:$0xf]
        %v3995 = vld [vmem:[%s3974 + $0x50] sm:$0xf]
        %v3996 = vld [vmem:[%s3974 + $0x54] sm:$0xf]
        %v3997 = vld [vmem:[%s3974 + $0x58] sm:$0xf]
        %v3998 = vld [vmem:[%s3974 + $0x5c] sm:$0xf]
        %v3999 = vld [vmem:[%s3974 + $0x60] sm:$0xf]
        %v4000 = vld [vmem:[%s3974 + $0x64] sm:$0xf]
        %v4001 = vld [vmem:[%s3974 + $0x68] sm:$0xf]
        %v4002 = vld [vmem:[%s3974 + $0x6c] sm:$0xf]
        %v4003 = vld [vmem:[%s3974 + $0x70] sm:$0xf]
        %v4004 = vld [vmem:[%s3974 + $0x74] sm:$0xf]
        %v4005 = vld [vmem:[%s3974 + $0x78] sm:$0xf]
        %v4006 = vld [vmem:[%s3974 + $0x7c] sm:$0xf]
        %v4007 = vld [vmem:[%s3974 + $0x80] sm:$0xf]
        %v4008 = vld [vmem:[%s3974 + $0x84] sm:$0xf]
        %v4009 = vld [vmem:[%s3974 + $0x88] sm:$0xf]
        %v4010 = vld [vmem:[%s3974 + $0x8c] sm:$0xf]
        %v4011 = vld [vmem:[%s3974 + $0x90] sm:$0xf]
        %v4012 = vld [vmem:[%s3974 + $0x94] sm:$0xf]
        %v4013 = vld [vmem:[%s3974 + $0x98] sm:$0xf]
        %v4014 = vld [vmem:[%s3974 + $0x9c] sm:$0xf]
        %v4015 = vld [vmem:[%s3974 + $0xa0] sm:$0xf]
        %v4016 = vld [vmem:[%s3974 + $0xa4] sm:$0xf]
        %v4017 = vld [vmem:[%s3974 + $0xa8] sm:$0xf]
        %v4018 = vld [vmem:[%s3974 + $0xac] sm:$0xf]
        %v4019 = vld [vmem:[%s3974 + $0xb0] sm:$0xf]
        %v4020 = vld [vmem:[%s3974 + $0xb4] sm:$0xf]
        %v4021 = vld [vmem:[%s3974 + $0xb8] sm:$0xf]
        %v4022 = vld [vmem:[%s3974 + $0xbc] sm:$0xf]
        %v4023 = vld [vmem:[%s3974 + $0xc0] sm:$0xf]
        %v4024 = vld [vmem:[%s3974 + $0xc4] sm:$0xf]
        %v4025 = vld [vmem:[%s3974 + $0xc8] sm:$0xf]
        %v4026 = vld [vmem:[%s3974 + $0xcc] sm:$0xf]
        %v4027 = vld [vmem:[%s3974 + $0xd0] sm:$0xf]
        %v4028 = vld [vmem:[%s3974 + $0xd4] sm:$0xf]
        %v4029 = vld [vmem:[%s3974 + $0xd8] sm:$0xf]
        %v4030 = vld [vmem:[%s3974 + $0xdc] sm:$0xf]
        %v4031 = vld [vmem:[%s3974 + $0xe0] sm:$0xf]
        %v4032 = vld [vmem:[%s3974 + $0xe4] sm:$0xf]
        %v4033 = vld [vmem:[%s3974 + $0xe8] sm:$0xf]
        %v4034 = vld [vmem:[%s3974 + $0xec] sm:$0xf]
        %v4035 = vld [vmem:[%s3974 + $0xf0] sm:$0xf]
        %v4036 = vld [vmem:[%s3974 + $0xf4] sm:$0xf]
        %v4037 = vld [vmem:[%s3974 + $0xf8] sm:$0xf]
        %v4038 = vld [vmem:[%s3974 + $0xfc] sm:$0xf]
        %s4039 = scalar_lea.vmem [#allocation6], 384
        %v4040 = vld [vmem:[%s4039] sm:$0xf]
        %v4041 = vld [vmem:[%s4039 + $0x4] sm:$0xf]
        %v4042 = vld [vmem:[%s4039 + $0x8] sm:$0xf]
        %v4043 = vld [vmem:[%s4039 + $0xc] sm:$0xf]
        %v4044 = vld [vmem:[%s4039 + $0x10] sm:$0xf]
        %v4045 = vld [vmem:[%s4039 + $0x14] sm:$0xf]
        %v4046 = vld [vmem:[%s4039 + $0x18] sm:$0xf]
        %v4047 = vld [vmem:[%s4039 + $0x1c] sm:$0xf]
        %v4048 = vld [vmem:[%s4039 + $0x20] sm:$0xf]
        %v4049 = vld [vmem:[%s4039 + $0x24] sm:$0xf]
        %v4050 = vld [vmem:[%s4039 + $0x28] sm:$0xf]
        %v4051 = vld [vmem:[%s4039 + $0x2c] sm:$0xf]
        %v4052 = vld [vmem:[%s4039 + $0x30] sm:$0xf]
        %v4053 = vld [vmem:[%s4039 + $0x34] sm:$0xf]
        %v4054 = vld [vmem:[%s4039 + $0x38] sm:$0xf]
        %v4055 = vld [vmem:[%s4039 + $0x3c] sm:$0xf]
        %v4120 = vunpack.c.l.b16 %v3975
        %v4121 = vunpack.c.l.b16 %v3976
        %v4122 = vunpack.c.l.b16 %v3977
        %v4123 = vunpack.c.l.b16 %v3978
        %v4124 = vunpack.c.l.b16 %v3979
        %v4125 = vunpack.c.l.b16 %v3980
        %v4126 = vunpack.c.l.b16 %v3981
        %v4127 = vunpack.c.l.b16 %v3982
        %v4128 = vunpack.c.l.b16 %v3983
        %v4129 = vunpack.c.l.b16 %v3984
        %v4130 = vunpack.c.l.b16 %v3985
        %v4131 = vunpack.c.l.b16 %v3986
        %v4132 = vunpack.c.l.b16 %v3987
        %v4133 = vunpack.c.l.b16 %v3988
        %v4134 = vunpack.c.l.b16 %v3989
        %v4135 = vunpack.c.l.b16 %v3990
        %v4136 = vunpack.c.l.b16 %v3991
        %v4137 = vunpack.c.l.b16 %v3992
        %v4138 = vunpack.c.l.b16 %v3993
        %v4139 = vunpack.c.l.b16 %v3994
        %v4140 = vunpack.c.l.b16 %v3995
        %v4141 = vunpack.c.l.b16 %v3996
        %v4142 = vunpack.c.l.b16 %v3997
        %v4143 = vunpack.c.l.b16 %v3998
        %v4144 = vunpack.c.l.b16 %v3999
        %v4145 = vunpack.c.l.b16 %v4000
        %v4146 = vunpack.c.l.b16 %v4001
        %v4147 = vunpack.c.l.b16 %v4002
        %v4148 = vunpack.c.l.b16 %v4003
        %v4149 = vunpack.c.l.b16 %v4004
        %v4150 = vunpack.c.l.b16 %v4005
        %v4151 = vunpack.c.l.b16 %v4006
        %v4152 = vunpack.c.l.b16 %v4007
        %v4153 = vunpack.c.l.b16 %v4008
        %v4154 = vunpack.c.l.b16 %v4009
        %v4155 = vunpack.c.l.b16 %v4010
        %v4156 = vunpack.c.l.b16 %v4011
        %v4157 = vunpack.c.l.b16 %v4012
        %v4158 = vunpack.c.l.b16 %v4013
        %v4159 = vunpack.c.l.b16 %v4014
        %v4160 = vunpack.c.l.b16 %v4015
        %v4161 = vunpack.c.l.b16 %v4016
        %v4162 = vunpack.c.l.b16 %v4017
        %v4163 = vunpack.c.l.b16 %v4018
        %v4164 = vunpack.c.l.b16 %v4019
        %v4165 = vunpack.c.l.b16 %v4020
        %v4166 = vunpack.c.l.b16 %v4021
        %v4167 = vunpack.c.l.b16 %v4022
        %v4168 = vunpack.c.l.b16 %v4023
        %v4169 = vunpack.c.l.b16 %v4024
        %v4170 = vunpack.c.l.b16 %v4025
        %v4171 = vunpack.c.l.b16 %v4026
        %v4172 = vunpack.c.l.b16 %v4027
        %v4173 = vunpack.c.l.b16 %v4028
        %v4174 = vunpack.c.l.b16 %v4029
        %v4175 = vunpack.c.l.b16 %v4030
        %v4176 = vunpack.c.l.b16 %v4031
        %v4177 = vunpack.c.l.b16 %v4032
        %v4178 = vunpack.c.l.b16 %v4033
        %v4179 = vunpack.c.l.b16 %v4034
        %v4180 = vunpack.c.l.b16 %v4035
        %v4181 = vunpack.c.l.b16 %v4036
        %v4182 = vunpack.c.l.b16 %v4037
        %v4183 = vunpack.c.l.b16 %v4038
        %v4184 = vpack.c.b16 %v4121, %v4120
        %v4185 = vpack.c.b16 %v4123, %v4122
        %v4186 = vpack.c.b16 %v4125, %v4124
        %v4187 = vpack.c.b16 %v4127, %v4126
        %v4188 = vpack.c.b16 %v4129, %v4128
        %v4189 = vpack.c.b16 %v4131, %v4130
        %v4190 = vpack.c.b16 %v4133, %v4132
        %v4191 = vpack.c.b16 %v4135, %v4134
        %v4192 = vpack.c.b16 %v4137, %v4136
        %v4193 = vpack.c.b16 %v4139, %v4138
        %v4194 = vpack.c.b16 %v4141, %v4140
        %v4195 = vpack.c.b16 %v4143, %v4142
        %v4196 = vpack.c.b16 %v4145, %v4144
        %v4197 = vpack.c.b16 %v4147, %v4146
        %v4198 = vpack.c.b16 %v4149, %v4148
        %v4199 = vpack.c.b16 %v4151, %v4150
        %v4200 = vpack.c.b16 %v4153, %v4152
        %v4201 = vpack.c.b16 %v4155, %v4154
        %v4202 = vpack.c.b16 %v4157, %v4156
        %v4203 = vpack.c.b16 %v4159, %v4158
        %v4204 = vpack.c.b16 %v4161, %v4160
        %v4205 = vpack.c.b16 %v4163, %v4162
        %v4206 = vpack.c.b16 %v4165, %v4164
        %v4207 = vpack.c.b16 %v4167, %v4166
        %v4208 = vpack.c.b16 %v4169, %v4168
        %v4209 = vpack.c.b16 %v4171, %v4170
        %v4210 = vpack.c.b16 %v4173, %v4172
        %v4211 = vpack.c.b16 %v4175, %v4174
        %v4212 = vpack.c.b16 %v4177, %v4176
        %v4213 = vpack.c.b16 %v4179, %v4178
        %v4214 = vpack.c.b16 %v4181, %v4180
        %v4215 = vpack.c.b16 %v4183, %v4182
        %v4264 = vunpack.c.l.b16 %v4040
        %v4265 = vunpack.c.l.b16 %v4041
        %v4266 = vunpack.c.l.b16 %v4042
        %v4267 = vunpack.c.l.b16 %v4043
        %v4268 = vunpack.c.l.b16 %v4044
        %v4269 = vunpack.c.l.b16 %v4045
        %v4270 = vunpack.c.l.b16 %v4046
        %v4271 = vunpack.c.l.b16 %v4047
        %v4272 = vunpack.c.l.b16 %v4048
        %v4273 = vunpack.c.l.b16 %v4049
        %v4274 = vunpack.c.l.b16 %v4050
        %v4275 = vunpack.c.l.b16 %v4051
        %v4276 = vunpack.c.l.b16 %v4052
        %v4277 = vunpack.c.l.b16 %v4053
        %v4278 = vunpack.c.l.b16 %v4054
        %v4279 = vunpack.c.l.b16 %v4055
        %v4280 = vpack.c.b16 %v4265, %v4264
        %v4281 = vpack.c.b16 %v4267, %v4266
        %v4282 = vpack.c.b16 %v4269, %v4268
        %v4283 = vpack.c.b16 %v4271, %v4270
        %v4284 = vpack.c.b16 %v4273, %v4272
        %v4285 = vpack.c.b16 %v4275, %v4274
        %v4286 = vpack.c.b16 %v4277, %v4276
        %v4287 = vpack.c.b16 %v4279, %v4278
        %4296 = vmatpush.bf16.msra.mxu0 %v4287
        %4297 = vmatpush.bf16.msra.mxu0 %v4286
        %4298 = vmatpush.bf16.msra.mxu0 %v4285
        %4299 = vmatpush.bf16.msra.mxu0 %v4284
        %4300 = vmatpush.bf16.msra.mxu0 %v4283
        %4301 = vmatpush.bf16.msra.mxu0 %v4282
        %4302 = vmatpush.bf16.msra.mxu0 %v4281
        %4303 = vmatpush.bf16.msra.mxu0 %v4280
        %4304 = vmatmul.bf16.gmra.mxu0 %v4184
        %v4305 = vpop.f32.mrf.mxu0
        %v4306 = vadd.f32 0.0, %v4305
        %v4307 = vpop.f32.mrf.mxu0
        %v4308 = vadd.f32 0.0, %v4307
        %4309 = vmatmul.bf16.gmra.mxu0 %v4185
        %v4310 = vpop.f32.mrf.mxu0
        %v4311 = vadd.f32 0.0, %v4310
        %v4312 = vpop.f32.mrf.mxu0
        %v4313 = vadd.f32 0.0, %v4312
        %4314 = vmatmul.bf16.gmra.mxu0 %v4186
        %v4315 = vpop.f32.mrf.mxu0
        %v4316 = vadd.f32 0.0, %v4315
        %v4317 = vpop.f32.mrf.mxu0
        %v4318 = vadd.f32 0.0, %v4317
        %4319 = vmatmul.bf16.gmra.mxu0 %v4187
        %v4320 = vpop.f32.mrf.mxu0
        %v4321 = vadd.f32 0.0, %v4320
        %v4322 = vpop.f32.mrf.mxu0
        %v4323 = vadd.f32 0.0, %v4322
        %4324 = vmatmul.bf16.gmra.mxu0 %v4188
        %v4325 = vpop.f32.mrf.mxu0
        %v4326 = vadd.f32 0.0, %v4325
        %v4327 = vpop.f32.mrf.mxu0
        %v4328 = vadd.f32 0.0, %v4327
        %4329 = vmatmul.bf16.gmra.mxu0 %v4189
        %v4330 = vpop.f32.mrf.mxu0
        %v4331 = vadd.f32 0.0, %v4330
        %v4332 = vpop.f32.mrf.mxu0
        %v4333 = vadd.f32 0.0, %v4332
        %4334 = vmatmul.bf16.gmra.mxu0 %v4190
        %v4335 = vpop.f32.mrf.mxu0
        %v4336 = vadd.f32 0.0, %v4335
        %v4337 = vpop.f32.mrf.mxu0
        %v4338 = vadd.f32 0.0, %v4337
        %4339 = vmatmul.bf16.gmra.mxu0 %v4191
        %v4340 = vpop.f32.mrf.mxu0
        %v4341 = vadd.f32 0.0, %v4340
        %v4342 = vpop.f32.mrf.mxu0
        %v4343 = vadd.f32 0.0, %v4342
        %4344 = vmatmul.bf16.gmra.mxu0 %v4192
        %v4345 = vpop.f32.mrf.mxu0
        %v4346 = vadd.f32 0.0, %v4345
        %v4347 = vpop.f32.mrf.mxu0
        %v4348 = vadd.f32 0.0, %v4347
        %4349 = vmatmul.bf16.gmra.mxu0 %v4193
        %v4350 = vpop.f32.mrf.mxu0
        %v4351 = vadd.f32 0.0, %v4350
        %v4352 = vpop.f32.mrf.mxu0
        %v4353 = vadd.f32 0.0, %v4352
        %4354 = vmatmul.bf16.gmra.mxu0 %v4194
        %v4355 = vpop.f32.mrf.mxu0
        %v4356 = vadd.f32 0.0, %v4355
        %v4357 = vpop.f32.mrf.mxu0
        %v4358 = vadd.f32 0.0, %v4357
        %4359 = vmatmul.bf16.gmra.mxu0 %v4195
        %v4360 = vpop.f32.mrf.mxu0
        %v4361 = vadd.f32 0.0, %v4360
        %v4362 = vpop.f32.mrf.mxu0
        %v4363 = vadd.f32 0.0, %v4362
        %4364 = vmatmul.bf16.gmra.mxu0 %v4196
        %v4365 = vpop.f32.mrf.mxu0
        %v4366 = vadd.f32 0.0, %v4365
        %v4367 = vpop.f32.mrf.mxu0
        %v4368 = vadd.f32 0.0, %v4367
        %4369 = vmatmul.bf16.gmra.mxu0 %v4197
        %v4370 = vpop.f32.mrf.mxu0
        %v4371 = vadd.f32 0.0, %v4370
        %v4372 = vpop.f32.mrf.mxu0
        %v4373 = vadd.f32 0.0, %v4372
        %4374 = vmatmul.bf16.gmra.mxu0 %v4198
        %v4375 = vpop.f32.mrf.mxu0
        %v4376 = vadd.f32 0.0, %v4375
        %v4377 = vpop.f32.mrf.mxu0
        %v4378 = vadd.f32 0.0, %v4377
        %4379 = vmatmul.bf16.gmra.mxu0 %v4199
        %v4380 = vpop.f32.mrf.mxu0
        %v4381 = vadd.f32 0.0, %v4380
        %v4382 = vpop.f32.mrf.mxu0
        %v4383 = vadd.f32 0.0, %v4382
        %4384 = vmatmul.bf16.gmra.mxu0 %v4200
        %v4385 = vpop.f32.mrf.mxu0
        %v4386 = vadd.f32 0.0, %v4385
        %v4387 = vpop.f32.mrf.mxu0
        %v4388 = vadd.f32 0.0, %v4387
        %4389 = vmatmul.bf16.gmra.mxu0 %v4201
        %v4390 = vpop.f32.mrf.mxu0
        %v4391 = vadd.f32 0.0, %v4390
        %v4392 = vpop.f32.mrf.mxu0
        %v4393 = vadd.f32 0.0, %v4392
        %4394 = vmatmul.bf16.gmra.mxu0 %v4202
        %v4395 = vpop.f32.mrf.mxu0
        %v4396 = vadd.f32 0.0, %v4395
        %v4397 = vpop.f32.mrf.mxu0
        %v4398 = vadd.f32 0.0, %v4397
        %4399 = vmatmul.bf16.gmra.mxu0 %v4203
        %v4400 = vpop.f32.mrf.mxu0
        %v4401 = vadd.f32 0.0, %v4400
        %v4402 = vpop.f32.mrf.mxu0
        %v4403 = vadd.f32 0.0, %v4402
        %4404 = vmatmul.bf16.gmra.mxu0 %v4204
        %v4405 = vpop.f32.mrf.mxu0
        %v4406 = vadd.f32 0.0, %v4405
        %v4407 = vpop.f32.mrf.mxu0
        %v4408 = vadd.f32 0.0, %v4407
        %4409 = vmatmul.bf16.gmra.mxu0 %v4205
        %v4410 = vpop.f32.mrf.mxu0
        %v4411 = vadd.f32 0.0, %v4410
        %v4412 = vpop.f32.mrf.mxu0
        %v4413 = vadd.f32 0.0, %v4412
        %4414 = vmatmul.bf16.gmra.mxu0 %v4206
        %v4415 = vpop.f32.mrf.mxu0
        %v4416 = vadd.f32 0.0, %v4415
        %v4417 = vpop.f32.mrf.mxu0
        %v4418 = vadd.f32 0.0, %v4417
        %4419 = vmatmul.bf16.gmra.mxu0 %v4207
        %v4420 = vpop.f32.mrf.mxu0
        %v4421 = vadd.f32 0.0, %v4420
        %v4422 = vpop.f32.mrf.mxu0
        %v4423 = vadd.f32 0.0, %v4422
        %4424 = vmatmul.bf16.gmra.mxu0 %v4208
        %v4425 = vpop.f32.mrf.mxu0
        %v4426 = vadd.f32 0.0, %v4425
        %v4427 = vpop.f32.mrf.mxu0
        %v4428 = vadd.f32 0.0, %v4427
        %4429 = vmatmul.bf16.gmra.mxu0 %v4209
        %v4430 = vpop.f32.mrf.mxu0
        %v4431 = vadd.f32 0.0, %v4430
        %v4432 = vpop.f32.mrf.mxu0
        %v4433 = vadd.f32 0.0, %v4432
        %4434 = vmatmul.bf16.gmra.mxu0 %v4210
        %v4435 = vpop.f32.mrf.mxu0
        %v4436 = vadd.f32 0.0, %v4435
        %v4437 = vpop.f32.mrf.mxu0
        %v4438 = vadd.f32 0.0, %v4437
        %4439 = vmatmul.bf16.gmra.mxu0 %v4211
        %v4440 = vpop.f32.mrf.mxu0
        %v4441 = vadd.f32 0.0, %v4440
        %v4442 = vpop.f32.mrf.mxu0
        %v4443 = vadd.f32 0.0, %v4442
        %4444 = vmatmul.bf16.gmra.mxu0 %v4212
        %v4445 = vpop.f32.mrf.mxu0
        %v4446 = vadd.f32 0.0, %v4445
        %v4447 = vpop.f32.mrf.mxu0
        %v4448 = vadd.f32 0.0, %v4447
        %4449 = vmatmul.bf16.gmra.mxu0 %v4213
        %v4450 = vpop.f32.mrf.mxu0
        %v4451 = vadd.f32 0.0, %v4450
        %v4452 = vpop.f32.mrf.mxu0
        %v4453 = vadd.f32 0.0, %v4452
        %4454 = vmatmul.bf16.gmra.mxu0 %v4214
        %v4455 = vpop.f32.mrf.mxu0
        %v4456 = vadd.f32 0.0, %v4455
        %v4457 = vpop.f32.mrf.mxu0
        %v4458 = vadd.f32 0.0, %v4457
        %4459 = vmatmul.bf16.gmra.mxu0 %v4215
        %v4460 = vpop.f32.mrf.mxu0
        %v4461 = vadd.f32 0.0, %v4460
        %v4462 = vpop.f32.mrf.mxu0
        %v4463 = vadd.f32 0.0, %v4462
        %4464 = vdwg.mxu0
        %v4465 = vld [vmem:[#allocation2] sm:$0xff]
        %v4466 = vld [vmem:[#allocation2 + $0x8] sm:$0xff]
        %v4467 = vld [vmem:[#allocation2 + $0x10] sm:$0xff]
        %v4468 = vld [vmem:[#allocation2 + $0x18] sm:$0xff]
        %v4469 = vld [vmem:[#allocation2 + $0x20] sm:$0xff]
        %v4470 = vld [vmem:[#allocation2 + $0x28] sm:$0xff]
        %v4471 = vld [vmem:[#allocation2 + $0x30] sm:$0xff]
        %v4472 = vld [vmem:[#allocation2 + $0x38] sm:$0xff]
        %v4473 = vld [vmem:[#allocation2 + $0x40] sm:$0xff]
        %v4474 = vld [vmem:[#allocation2 + $0x48] sm:$0xff]
        %v4475 = vld [vmem:[#allocation2 + $0x50] sm:$0xff]
        %v4476 = vld [vmem:[#allocation2 + $0x58] sm:$0xff]
        %v4477 = vld [vmem:[#allocation2 + $0x60] sm:$0xff]
        %v4478 = vld [vmem:[#allocation2 + $0x68] sm:$0xff]
        %v4479 = vld [vmem:[#allocation2 + $0x70] sm:$0xff]
        %v4480 = vld [vmem:[#allocation2 + $0x78] sm:$0xff]
        %v4481 = vld [vmem:[#allocation2 + $0x80] sm:$0xff]
        %v4482 = vld [vmem:[#allocation2 + $0x88] sm:$0xff]
        %v4483 = vld [vmem:[#allocation2 + $0x90] sm:$0xff]
        %v4484 = vld [vmem:[#allocation2 + $0x98] sm:$0xff]
        %v4485 = vld [vmem:[#allocation2 + $0xa0] sm:$0xff]
        %v4486 = vld [vmem:[#allocation2 + $0xa8] sm:$0xff]
        %v4487 = vld [vmem:[#allocation2 + $0xb0] sm:$0xff]
        %v4488 = vld [vmem:[#allocation2 + $0xb8] sm:$0xff]
        %v4489 = vld [vmem:[#allocation2 + $0xc0] sm:$0xff]
        %v4490 = vld [vmem:[#allocation2 + $0xc8] sm:$0xff]
        %v4491 = vld [vmem:[#allocation2 + $0xd0] sm:$0xff]
        %v4492 = vld [vmem:[#allocation2 + $0xd8] sm:$0xff]
        %v4493 = vld [vmem:[#allocation2 + $0xe0] sm:$0xff]
        %v4494 = vld [vmem:[#allocation2 + $0xe8] sm:$0xff]
        %v4495 = vld [vmem:[#allocation2 + $0xf0] sm:$0xff]
        %v4496 = vld [vmem:[#allocation2 + $0xf8] sm:$0xff]
        %v4497 = vld [vmem:[#allocation2 + $0x100] sm:$0xff]
        %v4498 = vld [vmem:[#allocation2 + $0x108] sm:$0xff]
        %v4499 = vld [vmem:[#allocation2 + $0x110] sm:$0xff]
        %v4500 = vld [vmem:[#allocation2 + $0x118] sm:$0xff]
        %v4501 = vld [vmem:[#allocation2 + $0x120] sm:$0xff]
        %v4502 = vld [vmem:[#allocation2 + $0x128] sm:$0xff]
        %v4503 = vld [vmem:[#allocation2 + $0x130] sm:$0xff]
        %v4504 = vld [vmem:[#allocation2 + $0x138] sm:$0xff]
        %v4505 = vld [vmem:[#allocation2 + $0x140] sm:$0xff]
        %v4506 = vld [vmem:[#allocation2 + $0x148] sm:$0xff]
        %v4507 = vld [vmem:[#allocation2 + $0x150] sm:$0xff]
        %v4508 = vld [vmem:[#allocation2 + $0x158] sm:$0xff]
        %v4509 = vld [vmem:[#allocation2 + $0x160] sm:$0xff]
        %v4510 = vld [vmem:[#allocation2 + $0x168] sm:$0xff]
        %v4511 = vld [vmem:[#allocation2 + $0x170] sm:$0xff]
        %v4512 = vld [vmem:[#allocation2 + $0x178] sm:$0xff]
        %v4513 = vld [vmem:[#allocation2 + $0x180] sm:$0xff]
        %v4514 = vld [vmem:[#allocation2 + $0x188] sm:$0xff]
        %v4515 = vld [vmem:[#allocation2 + $0x190] sm:$0xff]
        %v4516 = vld [vmem:[#allocation2 + $0x198] sm:$0xff]
        %v4517 = vld [vmem:[#allocation2 + $0x1a0] sm:$0xff]
        %v4518 = vld [vmem:[#allocation2 + $0x1a8] sm:$0xff]
        %v4519 = vld [vmem:[#allocation2 + $0x1b0] sm:$0xff]
        %v4520 = vld [vmem:[#allocation2 + $0x1b8] sm:$0xff]
        %v4521 = vld [vmem:[#allocation2 + $0x1c0] sm:$0xff]
        %v4522 = vld [vmem:[#allocation2 + $0x1c8] sm:$0xff]
        %v4523 = vld [vmem:[#allocation2 + $0x1d0] sm:$0xff]
        %v4524 = vld [vmem:[#allocation2 + $0x1d8] sm:$0xff]
        %v4525 = vld [vmem:[#allocation2 + $0x1e0] sm:$0xff]
        %v4526 = vld [vmem:[#allocation2 + $0x1e8] sm:$0xff]
        %v4527 = vld [vmem:[#allocation2 + $0x1f0] sm:$0xff]
        %v4528 = vld [vmem:[#allocation2 + $0x1f8] sm:$0xff]
        %v4529 = vadd.f32 %v4465, %v4306
        %v4530 = vadd.f32 %v4466, %v4308
        %v4531 = vadd.f32 %v4467, %v4311
        %v4532 = vadd.f32 %v4468, %v4313
        %v4533 = vadd.f32 %v4469, %v4316
        %v4534 = vadd.f32 %v4470, %v4318
        %v4535 = vadd.f32 %v4471, %v4321
        %v4536 = vadd.f32 %v4472, %v4323
        %v4537 = vadd.f32 %v4473, %v4326
        %v4538 = vadd.f32 %v4474, %v4328
        %v4539 = vadd.f32 %v4475, %v4331
        %v4540 = vadd.f32 %v4476, %v4333
        %v4541 = vadd.f32 %v4477, %v4336
        %v4542 = vadd.f32 %v4478, %v4338
        %v4543 = vadd.f32 %v4479, %v4341
        %v4544 = vadd.f32 %v4480, %v4343
        %v4545 = vadd.f32 %v4481, %v4346
        %v4546 = vadd.f32 %v4482, %v4348
        %v4547 = vadd.f32 %v4483, %v4351
        %v4548 = vadd.f32 %v4484, %v4353
        %v4549 = vadd.f32 %v4485, %v4356
        %v4550 = vadd.f32 %v4486, %v4358
        %v4551 = vadd.f32 %v4487, %v4361
        %v4552 = vadd.f32 %v4488, %v4363
        %v4553 = vadd.f32 %v4489, %v4366
        %v4554 = vadd.f32 %v4490, %v4368
        %v4555 = vadd.f32 %v4491, %v4371
        %v4556 = vadd.f32 %v4492, %v4373
        %v4557 = vadd.f32 %v4493, %v4376
        %v4558 = vadd.f32 %v4494, %v4378
        %v4559 = vadd.f32 %v4495, %v4381
        %v4560 = vadd.f32 %v4496, %v4383
        %v4561 = vadd.f32 %v4497, %v4386
        %v4562 = vadd.f32 %v4498, %v4388
        %v4563 = vadd.f32 %v4499, %v4391
        %v4564 = vadd.f32 %v4500, %v4393
        %v4565 = vadd.f32 %v4501, %v4396
        %v4566 = vadd.f32 %v4502, %v4398
        %v4567 = vadd.f32 %v4503, %v4401
        %v4568 = vadd.f32 %v4504, %v4403
        %v4569 = vadd.f32 %v4505, %v4406
        %v4570 = vadd.f32 %v4506, %v4408
        %v4571 = vadd.f32 %v4507, %v4411
        %v4572 = vadd.f32 %v4508, %v4413
        %v4573 = vadd.f32 %v4509, %v4416
        %v4574 = vadd.f32 %v4510, %v4418
        %v4575 = vadd.f32 %v4511, %v4421
        %v4576 = vadd.f32 %v4512, %v4423
        %v4577 = vadd.f32 %v4513, %v4426
        %v4578 = vadd.f32 %v4514, %v4428
        %v4579 = vadd.f32 %v4515, %v4431
        %v4580 = vadd.f32 %v4516, %v4433
        %v4581 = vadd.f32 %v4517, %v4436
        %v4582 = vadd.f32 %v4518, %v4438
        %v4583 = vadd.f32 %v4519, %v4441
        %v4584 = vadd.f32 %v4520, %v4443
        %v4585 = vadd.f32 %v4521, %v4446
        %v4586 = vadd.f32 %v4522, %v4448
        %v4587 = vadd.f32 %v4523, %v4451
        %v4588 = vadd.f32 %v4524, %v4453
        %v4589 = vadd.f32 %v4525, %v4456
        %v4590 = vadd.f32 %v4526, %v4458
        %v4591 = vadd.f32 %v4527, %v4461
        %v4592 = vadd.f32 %v4528, %v4463
        %4593 = vst [vmem:[#allocation2] sm:$0xff] %v4529
        %4594 = vst [vmem:[#allocation2 + $0x8] sm:$0xff] %v4530
        %4595 = vst [vmem:[#allocation2 + $0x10] sm:$0xff] %v4531
        %4596 = vst [vmem:[#allocation2 + $0x18] sm:$0xff] %v4532
        %4597 = vst [vmem:[#allocation2 + $0x20] sm:$0xff] %v4533
        %4598 = vst [vmem:[#allocation2 + $0x28] sm:$0xff] %v4534
        %4599 = vst [vmem:[#allocation2 + $0x30] sm:$0xff] %v4535
        %4600 = vst [vmem:[#allocation2 + $0x38] sm:$0xff] %v4536
        %4601 = vst [vmem:[#allocation2 + $0x40] sm:$0xff] %v4537
        %4602 = vst [vmem:[#allocation2 + $0x48] sm:$0xff] %v4538
        %4603 = vst [vmem:[#allocation2 + $0x50] sm:$0xff] %v4539
        %4604 = vst [vmem:[#allocation2 + $0x58] sm:$0xff] %v4540
        %4605 = vst [vmem:[#allocation2 + $0x60] sm:$0xff] %v4541
        %4606 = vst [vmem:[#allocation2 + $0x68] sm:$0xff] %v4542
        %4607 = vst [vmem:[#allocation2 + $0x70] sm:$0xff] %v4543
        %4608 = vst [vmem:[#allocation2 + $0x78] sm:$0xff] %v4544
        %4609 = vst [vmem:[#allocation2 + $0x80] sm:$0xff] %v4545
        %4610 = vst [vmem:[#allocation2 + $0x88] sm:$0xff] %v4546
        %4611 = vst [vmem:[#allocation2 + $0x90] sm:$0xff] %v4547
        %4612 = vst [vmem:[#allocation2 + $0x98] sm:$0xff] %v4548
        %4613 = vst [vmem:[#allocation2 + $0xa0] sm:$0xff] %v4549
        %4614 = vst [vmem:[#allocation2 + $0xa8] sm:$0xff] %v4550
        %4615 = vst [vmem:[#allocation2 + $0xb0] sm:$0xff] %v4551
        %4616 = vst [vmem:[#allocation2 + $0xb8] sm:$0xff] %v4552
        %4617 = vst [vmem:[#allocation2 + $0xc0] sm:$0xff] %v4553
        %4618 = vst [vmem:[#allocation2 + $0xc8] sm:$0xff] %v4554
        %4619 = vst [vmem:[#allocation2 + $0xd0] sm:$0xff] %v4555
        %4620 = vst [vmem:[#allocation2 + $0xd8] sm:$0xff] %v4556
        %4621 = vst [vmem:[#allocation2 + $0xe0] sm:$0xff] %v4557
        %4622 = vst [vmem:[#allocation2 + $0xe8] sm:$0xff] %v4558
        %4623 = vst [vmem:[#allocation2 + $0xf0] sm:$0xff] %v4559
        %4624 = vst [vmem:[#allocation2 + $0xf8] sm:$0xff] %v4560
        %4625 = vst [vmem:[#allocation2 + $0x100] sm:$0xff] %v4561
        %4626 = vst [vmem:[#allocation2 + $0x108] sm:$0xff] %v4562
        %4627 = vst [vmem:[#allocation2 + $0x110] sm:$0xff] %v4563
        %4628 = vst [vmem:[#allocation2 + $0x118] sm:$0xff] %v4564
        %4629 = vst [vmem:[#allocation2 + $0x120] sm:$0xff] %v4565
        %4630 = vst [vmem:[#allocation2 + $0x128] sm:$0xff] %v4566
        %4631 = vst [vmem:[#allocation2 + $0x130] sm:$0xff] %v4567
        %4632 = vst [vmem:[#allocation2 + $0x138] sm:$0xff] %v4568
        %4633 = vst [vmem:[#allocation2 + $0x140] sm:$0xff] %v4569
        %4634 = vst [vmem:[#allocation2 + $0x148] sm:$0xff] %v4570
        %4635 = vst [vmem:[#allocation2 + $0x150] sm:$0xff] %v4571
        %4636 = vst [vmem:[#allocation2 + $0x158] sm:$0xff] %v4572
        %4637 = vst [vmem:[#allocation2 + $0x160] sm:$0xff] %v4573
        %4638 = vst [vmem:[#allocation2 + $0x168] sm:$0xff] %v4574
        %4639 = vst [vmem:[#allocation2 + $0x170] sm:$0xff] %v4575
        %4640 = vst [vmem:[#allocation2 + $0x178] sm:$0xff] %v4576
        %4641 = vst [vmem:[#allocation2 + $0x180] sm:$0xff] %v4577
        %4642 = vst [vmem:[#allocation2 + $0x188] sm:$0xff] %v4578
        %4643 = vst [vmem:[#allocation2 + $0x190] sm:$0xff] %v4579
        %4644 = vst [vmem:[#allocation2 + $0x198] sm:$0xff] %v4580
        %4645 = vst [vmem:[#allocation2 + $0x1a0] sm:$0xff] %v4581
        %4646 = vst [vmem:[#allocation2 + $0x1a8] sm:$0xff] %v4582
        %4647 = vst [vmem:[#allocation2 + $0x1b0] sm:$0xff] %v4583
        %4648 = vst [vmem:[#allocation2 + $0x1b8] sm:$0xff] %v4584
        %4649 = vst [vmem:[#allocation2 + $0x1c0] sm:$0xff] %v4585
        %4650 = vst [vmem:[#allocation2 + $0x1c8] sm:$0xff] %v4586
        %4651 = vst [vmem:[#allocation2 + $0x1d0] sm:$0xff] %v4587
        %4652 = vst [vmem:[#allocation2 + $0x1d8] sm:$0xff] %v4588
        %4653 = vst [vmem:[#allocation2 + $0x1e0] sm:$0xff] %v4589
        %4654 = vst [vmem:[#allocation2 + $0x1e8] sm:$0xff] %v4590
        %4655 = vst [vmem:[#allocation2 + $0x1f0] sm:$0xff] %v4591
        %4656 = vst [vmem:[#allocation2 + $0x1f8] sm:$0xff] %v4592
        %v4658 = vshrl.u32 %v4184, 16
        %v4660 = vshll.u32 %v4184, 16
        %v4662 = vrot.slane %v4660, 1
        %v4663 = vor.u32 %v4658, %v4662
        %v4665 = vshll.u32 %v4185, 16
        %v4667 = vrot.slane %v4665, 1
        %v4668 = vsel %vm811, %v4663, %v4667
        %v4669 = vshrl.u32 %v4185, 16
        %v4671 = vor.u32 %v4669, %v4667
        %v4673 = vshll.u32 %v4186, 16
        %v4675 = vrot.slane %v4673, 1
        %v4676 = vsel %vm811, %v4671, %v4675
        %v4677 = vshrl.u32 %v4186, 16
        %v4679 = vor.u32 %v4677, %v4675
        %v4681 = vshll.u32 %v4187, 16
        %v4683 = vrot.slane %v4681, 1
        %v4684 = vsel %vm811, %v4679, %v4683
        %v4685 = vshrl.u32 %v4187, 16
        %v4687 = vor.u32 %v4685, %v4683
        %v4689 = vshll.u32 %v4188, 16
        %v4691 = vrot.slane %v4689, 1
        %v4692 = vsel %vm811, %v4687, %v4691
        %v4693 = vshrl.u32 %v4188, 16
        %v4695 = vor.u32 %v4693, %v4691
        %v4697 = vshll.u32 %v4189, 16
        %v4699 = vrot.slane %v4697, 1
        %v4700 = vsel %vm811, %v4695, %v4699
        %v4701 = vshrl.u32 %v4189, 16
        %v4703 = vor.u32 %v4701, %v4699
        %v4705 = vshll.u32 %v4190, 16
        %v4707 = vrot.slane %v4705, 1
        %v4708 = vsel %vm811, %v4703, %v4707
        %v4709 = vshrl.u32 %v4190, 16
        %v4711 = vor.u32 %v4709, %v4707
        %v4713 = vshll.u32 %v4191, 16
        %v4715 = vrot.slane %v4713, 1
        %v4716 = vsel %vm811, %v4711, %v4715
        %v4717 = vshrl.u32 %v4191, 16
        %v4719 = vor.u32 %v4717, %v4715
        %v4721 = vshll.u32 %v4192, 16
        %v4723 = vrot.slane %v4721, 1
        %v4724 = vsel %vm811, %v4719, %v4723
        %v4725 = vshrl.u32 %v4192, 16
        %v4727 = vor.u32 %v4725, %v4723
        %v4729 = vshll.u32 %v4193, 16
        %v4731 = vrot.slane %v4729, 1
        %v4732 = vsel %vm811, %v4727, %v4731
        %v4733 = vshrl.u32 %v4193, 16
        %v4735 = vor.u32 %v4733, %v4731
        %v4737 = vshll.u32 %v4194, 16
        %v4739 = vrot.slane %v4737, 1
        %v4740 = vsel %vm811, %v4735, %v4739
        %v4741 = vshrl.u32 %v4194, 16
        %v4743 = vor.u32 %v4741, %v4739
        %v4745 = vshll.u32 %v4195, 16
        %v4747 = vrot.slane %v4745, 1
        %v4748 = vsel %vm811, %v4743, %v4747
        %v4749 = vshrl.u32 %v4195, 16
        %v4751 = vor.u32 %v4749, %v4747
        %v4753 = vshll.u32 %v4196, 16
        %v4755 = vrot.slane %v4753, 1
        %v4756 = vsel %vm811, %v4751, %v4755
        %v4757 = vshrl.u32 %v4196, 16
        %v4759 = vor.u32 %v4757, %v4755
        %v4761 = vshll.u32 %v4197, 16
        %v4763 = vrot.slane %v4761, 1
        %v4764 = vsel %vm811, %v4759, %v4763
        %v4765 = vshrl.u32 %v4197, 16
        %v4767 = vor.u32 %v4765, %v4763
        %v4769 = vshll.u32 %v4198, 16
        %v4771 = vrot.slane %v4769, 1
        %v4772 = vsel %vm811, %v4767, %v4771
        %v4773 = vshrl.u32 %v4198, 16
        %v4775 = vor.u32 %v4773, %v4771
        %v4777 = vshll.u32 %v4199, 16
        %v4779 = vrot.slane %v4777, 1
        %v4780 = vsel %vm811, %v4775, %v4779
        %v4781 = vshrl.u32 %v4199, 16
        %v4783 = vor.u32 %v4781, %v4779
        %v4785 = vshll.u32 %v4200, 16
        %v4787 = vrot.slane %v4785, 1
        %v4788 = vsel %vm811, %v4783, %v4787
        %v4789 = vshrl.u32 %v4200, 16
        %v4791 = vor.u32 %v4789, %v4787
        %v4793 = vshll.u32 %v4201, 16
        %v4795 = vrot.slane %v4793, 1
        %v4796 = vsel %vm811, %v4791, %v4795
        %v4797 = vshrl.u32 %v4201, 16
        %v4799 = vor.u32 %v4797, %v4795
        %v4801 = vshll.u32 %v4202, 16
        %v4803 = vrot.slane %v4801, 1
        %v4804 = vsel %vm811, %v4799, %v4803
        %v4805 = vshrl.u32 %v4202, 16
        %v4807 = vor.u32 %v4805, %v4803
        %v4809 = vshll.u32 %v4203, 16
        %v4811 = vrot.slane %v4809, 1
        %v4812 = vsel %vm811, %v4807, %v4811
        %v4813 = vshrl.u32 %v4203, 16
        %v4815 = vor.u32 %v4813, %v4811
        %v4817 = vshll.u32 %v4204, 16
        %v4819 = vrot.slane %v4817, 1
        %v4820 = vsel %vm811, %v4815, %v4819
        %v4821 = vshrl.u32 %v4204, 16
        %v4823 = vor.u32 %v4821, %v4819
        %v4825 = vshll.u32 %v4205, 16
        %v4827 = vrot.slane %v4825, 1
        %v4828 = vsel %vm811, %v4823, %v4827
        %v4829 = vshrl.u32 %v4205, 16
        %v4831 = vor.u32 %v4829, %v4827
        %v4833 = vshll.u32 %v4206, 16
        %v4835 = vrot.slane %v4833, 1
        %v4836 = vsel %vm811, %v4831, %v4835
        %v4837 = vshrl.u32 %v4206, 16
        %v4839 = vor.u32 %v4837, %v4835
        %v4841 = vshll.u32 %v4207, 16
        %v4843 = vrot.slane %v4841, 1
        %v4844 = vsel %vm811, %v4839, %v4843
        %v4845 = vshrl.u32 %v4207, 16
        %v4847 = vor.u32 %v4845, %v4843
        %v4849 = vshll.u32 %v4208, 16
        %v4851 = vrot.slane %v4849, 1
        %v4852 = vsel %vm811, %v4847, %v4851
        %v4853 = vshrl.u32 %v4208, 16
        %v4855 = vor.u32 %v4853, %v4851
        %v4857 = vshll.u32 %v4209, 16
        %v4859 = vrot.slane %v4857, 1
        %v4860 = vsel %vm811, %v4855, %v4859
        %v4861 = vshrl.u32 %v4209, 16
        %v4863 = vor.u32 %v4861, %v4859
        %v4865 = vshll.u32 %v4210, 16
        %v4867 = vrot.slane %v4865, 1
        %v4868 = vsel %vm811, %v4863, %v4867
        %v4869 = vshrl.u32 %v4210, 16
        %v4871 = vor.u32 %v4869, %v4867
        %v4873 = vshll.u32 %v4211, 16
        %v4875 = vrot.slane %v4873, 1
        %v4876 = vsel %vm811, %v4871, %v4875
        %v4877 = vshrl.u32 %v4211, 16
        %v4879 = vor.u32 %v4877, %v4875
        %v4881 = vshll.u32 %v4212, 16
        %v4883 = vrot.slane %v4881, 1
        %v4884 = vsel %vm811, %v4879, %v4883
        %v4885 = vshrl.u32 %v4212, 16
        %v4887 = vor.u32 %v4885, %v4883
        %v4889 = vshll.u32 %v4213, 16
        %v4891 = vrot.slane %v4889, 1
        %v4892 = vsel %vm811, %v4887, %v4891
        %v4893 = vshrl.u32 %v4213, 16
        %v4895 = vor.u32 %v4893, %v4891
        %v4897 = vshll.u32 %v4214, 16
        %v4899 = vrot.slane %v4897, 1
        %v4900 = vsel %vm811, %v4895, %v4899
        %v4901 = vshrl.u32 %v4214, 16
        %v4903 = vor.u32 %v4901, %v4899
        %v4905 = vshll.u32 %v4215, 16
        %v4907 = vrot.slane %v4905, 1
        %v4908 = vsel %vm811, %v4903, %v4907
        %v4909 = vshrl.u32 %v4215, 16
        %v4911 = vor.u32 %v4909, %v4907
        %v4944 = vsel %vm1100, %v4911, 0
        %s4945 = scalar_lea.vmem [#allocation6], 448
        %v4946 = vld [vmem:[%s4945] sm:$0xf]
        %v4947 = vld [vmem:[%s4945 + $0x4] sm:$0xf]
        %v4948 = vld [vmem:[%s4945 + $0x8] sm:$0xf]
        %v4949 = vld [vmem:[%s4945 + $0xc] sm:$0xf]
        %v4950 = vld [vmem:[%s4945 + $0x10] sm:$0xf]
        %v4951 = vld [vmem:[%s4945 + $0x14] sm:$0xf]
        %v4952 = vld [vmem:[%s4945 + $0x18] sm:$0xf]
        %v4953 = vld [vmem:[%s4945 + $0x1c] sm:$0xf]
        %v4954 = vld [vmem:[%s4945 + $0x20] sm:$0xf]
        %v4955 = vld [vmem:[%s4945 + $0x24] sm:$0xf]
        %v4956 = vld [vmem:[%s4945 + $0x28] sm:$0xf]
        %v4957 = vld [vmem:[%s4945 + $0x2c] sm:$0xf]
        %v4958 = vld [vmem:[%s4945 + $0x30] sm:$0xf]
        %v4959 = vld [vmem:[%s4945 + $0x34] sm:$0xf]
        %v4960 = vld [vmem:[%s4945 + $0x38] sm:$0xf]
        %v4961 = vld [vmem:[%s4945 + $0x3c] sm:$0xf]
        %v4978 = vunpack.c.l.b16 %v4946
        %v4979 = vunpack.c.l.b16 %v4947
        %v4980 = vunpack.c.l.b16 %v4948
        %v4981 = vunpack.c.l.b16 %v4949
        %v4982 = vunpack.c.l.b16 %v4950
        %v4983 = vunpack.c.l.b16 %v4951
        %v4984 = vunpack.c.l.b16 %v4952
        %v4985 = vunpack.c.l.b16 %v4953
        %v4986 = vunpack.c.l.b16 %v4954
        %v4987 = vunpack.c.l.b16 %v4955
        %v4988 = vunpack.c.l.b16 %v4956
        %v4989 = vunpack.c.l.b16 %v4957
        %v4990 = vunpack.c.l.b16 %v4958
        %v4991 = vunpack.c.l.b16 %v4959
        %v4992 = vunpack.c.l.b16 %v4960
        %v4993 = vunpack.c.l.b16 %v4961
        %v4994 = vpack.c.b16 %v4979, %v4978
        %v4995 = vpack.c.b16 %v4981, %v4980
        %v4996 = vpack.c.b16 %v4983, %v4982
        %v4997 = vpack.c.b16 %v4985, %v4984
        %v4998 = vpack.c.b16 %v4987, %v4986
        %v4999 = vpack.c.b16 %v4989, %v4988
        %v5000 = vpack.c.b16 %v4991, %v4990
        %v5001 = vpack.c.b16 %v4993, %v4992
        %5010 = vmatpush.bf16.msra.mxu0 %v5001
        %5011 = vmatpush.bf16.msra.mxu0 %v5000
        %5012 = vmatpush.bf16.msra.mxu0 %v4999
        %5013 = vmatpush.bf16.msra.mxu0 %v4998
        %5014 = vmatpush.bf16.msra.mxu0 %v4997
        %5015 = vmatpush.bf16.msra.mxu0 %v4996
        %5016 = vmatpush.bf16.msra.mxu0 %v4995
        %5017 = vmatpush.bf16.msra.mxu0 %v4994
        %5018 = vmatmul.bf16.gmra.mxu0 %v4668
        %v5019 = vpop.f32.mrf.mxu0
        %v5020 = vadd.f32 0.0, %v5019
        %v5021 = vpop.f32.mrf.mxu0
        %v5022 = vadd.f32 0.0, %v5021
        %5023 = vmatmul.bf16.gmra.mxu0 %v4676
        %v5024 = vpop.f32.mrf.mxu0
        %v5025 = vadd.f32 0.0, %v5024
        %v5026 = vpop.f32.mrf.mxu0
        %v5027 = vadd.f32 0.0, %v5026
        %5028 = vmatmul.bf16.gmra.mxu0 %v4684
        %v5029 = vpop.f32.mrf.mxu0
        %v5030 = vadd.f32 0.0, %v5029
        %v5031 = vpop.f32.mrf.mxu0
        %v5032 = vadd.f32 0.0, %v5031
        %5033 = vmatmul.bf16.gmra.mxu0 %v4692
        %v5034 = vpop.f32.mrf.mxu0
        %v5035 = vadd.f32 0.0, %v5034
        %v5036 = vpop.f32.mrf.mxu0
        %v5037 = vadd.f32 0.0, %v5036
        %5038 = vmatmul.bf16.gmra.mxu0 %v4700
        %v5039 = vpop.f32.mrf.mxu0
        %v5040 = vadd.f32 0.0, %v5039
        %v5041 = vpop.f32.mrf.mxu0
        %v5042 = vadd.f32 0.0, %v5041
        %5043 = vmatmul.bf16.gmra.mxu0 %v4708
        %v5044 = vpop.f32.mrf.mxu0
        %v5045 = vadd.f32 0.0, %v5044
        %v5046 = vpop.f32.mrf.mxu0
        %v5047 = vadd.f32 0.0, %v5046
        %5048 = vmatmul.bf16.gmra.mxu0 %v4716
        %v5049 = vpop.f32.mrf.mxu0
        %v5050 = vadd.f32 0.0, %v5049
        %v5051 = vpop.f32.mrf.mxu0
        %v5052 = vadd.f32 0.0, %v5051
        %5053 = vmatmul.bf16.gmra.mxu0 %v4724
        %v5054 = vpop.f32.mrf.mxu0
        %v5055 = vadd.f32 0.0, %v5054
        %v5056 = vpop.f32.mrf.mxu0
        %v5057 = vadd.f32 0.0, %v5056
        %5058 = vmatmul.bf16.gmra.mxu0 %v4732
        %v5059 = vpop.f32.mrf.mxu0
        %v5060 = vadd.f32 0.0, %v5059
        %v5061 = vpop.f32.mrf.mxu0
        %v5062 = vadd.f32 0.0, %v5061
        %5063 = vmatmul.bf16.gmra.mxu0 %v4740
        %v5064 = vpop.f32.mrf.mxu0
        %v5065 = vadd.f32 0.0, %v5064
        %v5066 = vpop.f32.mrf.mxu0
        %v5067 = vadd.f32 0.0, %v5066
        %5068 = vmatmul.bf16.gmra.mxu0 %v4748
        %v5069 = vpop.f32.mrf.mxu0
        %v5070 = vadd.f32 0.0, %v5069
        %v5071 = vpop.f32.mrf.mxu0
        %v5072 = vadd.f32 0.0, %v5071
        %5073 = vmatmul.bf16.gmra.mxu0 %v4756
        %v5074 = vpop.f32.mrf.mxu0
        %v5075 = vadd.f32 0.0, %v5074
        %v5076 = vpop.f32.mrf.mxu0
        %v5077 = vadd.f32 0.0, %v5076
        %5078 = vmatmul.bf16.gmra.mxu0 %v4764
        %v5079 = vpop.f32.mrf.mxu0
        %v5080 = vadd.f32 0.0, %v5079
        %v5081 = vpop.f32.mrf.mxu0
        %v5082 = vadd.f32 0.0, %v5081
        %5083 = vmatmul.bf16.gmra.mxu0 %v4772
        %v5084 = vpop.f32.mrf.mxu0
        %v5085 = vadd.f32 0.0, %v5084
        %v5086 = vpop.f32.mrf.mxu0
        %v5087 = vadd.f32 0.0, %v5086
        %5088 = vmatmul.bf16.gmra.mxu0 %v4780
        %v5089 = vpop.f32.mrf.mxu0
        %v5090 = vadd.f32 0.0, %v5089
        %v5091 = vpop.f32.mrf.mxu0
        %v5092 = vadd.f32 0.0, %v5091
        %5093 = vmatmul.bf16.gmra.mxu0 %v4788
        %v5094 = vpop.f32.mrf.mxu0
        %v5095 = vadd.f32 0.0, %v5094
        %v5096 = vpop.f32.mrf.mxu0
        %v5097 = vadd.f32 0.0, %v5096
        %5098 = vmatmul.bf16.gmra.mxu0 %v4796
        %v5099 = vpop.f32.mrf.mxu0
        %v5100 = vadd.f32 0.0, %v5099
        %v5101 = vpop.f32.mrf.mxu0
        %v5102 = vadd.f32 0.0, %v5101
        %5103 = vmatmul.bf16.gmra.mxu0 %v4804
        %v5104 = vpop.f32.mrf.mxu0
        %v5105 = vadd.f32 0.0, %v5104
        %v5106 = vpop.f32.mrf.mxu0
        %v5107 = vadd.f32 0.0, %v5106
        %5108 = vmatmul.bf16.gmra.mxu0 %v4812
        %v5109 = vpop.f32.mrf.mxu0
        %v5110 = vadd.f32 0.0, %v5109
        %v5111 = vpop.f32.mrf.mxu0
        %v5112 = vadd.f32 0.0, %v5111
        %5113 = vmatmul.bf16.gmra.mxu0 %v4820
        %v5114 = vpop.f32.mrf.mxu0
        %v5115 = vadd.f32 0.0, %v5114
        %v5116 = vpop.f32.mrf.mxu0
        %v5117 = vadd.f32 0.0, %v5116
        %5118 = vmatmul.bf16.gmra.mxu0 %v4828
        %v5119 = vpop.f32.mrf.mxu0
        %v5120 = vadd.f32 0.0, %v5119
        %v5121 = vpop.f32.mrf.mxu0
        %v5122 = vadd.f32 0.0, %v5121
        %5123 = vmatmul.bf16.gmra.mxu0 %v4836
        %v5124 = vpop.f32.mrf.mxu0
        %v5125 = vadd.f32 0.0, %v5124
        %v5126 = vpop.f32.mrf.mxu0
        %v5127 = vadd.f32 0.0, %v5126
        %5128 = vmatmul.bf16.gmra.mxu0 %v4844
        %v5129 = vpop.f32.mrf.mxu0
        %v5130 = vadd.f32 0.0, %v5129
        %v5131 = vpop.f32.mrf.mxu0
        %v5132 = vadd.f32 0.0, %v5131
        %5133 = vmatmul.bf16.gmra.mxu0 %v4852
        %v5134 = vpop.f32.mrf.mxu0
        %v5135 = vadd.f32 0.0, %v5134
        %v5136 = vpop.f32.mrf.mxu0
        %v5137 = vadd.f32 0.0, %v5136
        %5138 = vmatmul.bf16.gmra.mxu0 %v4860
        %v5139 = vpop.f32.mrf.mxu0
        %v5140 = vadd.f32 0.0, %v5139
        %v5141 = vpop.f32.mrf.mxu0
        %v5142 = vadd.f32 0.0, %v5141
        %5143 = vmatmul.bf16.gmra.mxu0 %v4868
        %v5144 = vpop.f32.mrf.mxu0
        %v5145 = vadd.f32 0.0, %v5144
        %v5146 = vpop.f32.mrf.mxu0
        %v5147 = vadd.f32 0.0, %v5146
        %5148 = vmatmul.bf16.gmra.mxu0 %v4876
        %v5149 = vpop.f32.mrf.mxu0
        %v5150 = vadd.f32 0.0, %v5149
        %v5151 = vpop.f32.mrf.mxu0
        %v5152 = vadd.f32 0.0, %v5151
        %5153 = vmatmul.bf16.gmra.mxu0 %v4884
        %v5154 = vpop.f32.mrf.mxu0
        %v5155 = vadd.f32 0.0, %v5154
        %v5156 = vpop.f32.mrf.mxu0
        %v5157 = vadd.f32 0.0, %v5156
        %5158 = vmatmul.bf16.gmra.mxu0 %v4892
        %v5159 = vpop.f32.mrf.mxu0
        %v5160 = vadd.f32 0.0, %v5159
        %v5161 = vpop.f32.mrf.mxu0
        %v5162 = vadd.f32 0.0, %v5161
        %5163 = vmatmul.bf16.gmra.mxu0 %v4900
        %v5164 = vpop.f32.mrf.mxu0
        %v5165 = vadd.f32 0.0, %v5164
        %v5166 = vpop.f32.mrf.mxu0
        %v5167 = vadd.f32 0.0, %v5166
        %5168 = vmatmul.bf16.gmra.mxu0 %v4908
        %v5169 = vpop.f32.mrf.mxu0
        %v5170 = vadd.f32 0.0, %v5169
        %v5171 = vpop.f32.mrf.mxu0
        %v5172 = vadd.f32 0.0, %v5171
        %5173 = vmatmul.bf16.gmra.mxu0 %v4944
        %v5174 = vpop.f32.mrf.mxu0
        %v5175 = vadd.f32 0.0, %v5174
        %v5176 = vpop.f32.mrf.mxu0
        %v5177 = vadd.f32 0.0, %v5176
        %5178 = vdwg.mxu0
        %v5179 = vld [vmem:[#allocation2] sm:$0xff]
        %v5180 = vld [vmem:[#allocation2 + $0x8] sm:$0xff]
        %v5181 = vld [vmem:[#allocation2 + $0x10] sm:$0xff]
        %v5182 = vld [vmem:[#allocation2 + $0x18] sm:$0xff]
        %v5183 = vld [vmem:[#allocation2 + $0x20] sm:$0xff]
        %v5184 = vld [vmem:[#allocation2 + $0x28] sm:$0xff]
        %v5185 = vld [vmem:[#allocation2 + $0x30] sm:$0xff]
        %v5186 = vld [vmem:[#allocation2 + $0x38] sm:$0xff]
        %v5187 = vld [vmem:[#allocation2 + $0x40] sm:$0xff]
        %v5188 = vld [vmem:[#allocation2 + $0x48] sm:$0xff]
        %v5189 = vld [vmem:[#allocation2 + $0x50] sm:$0xff]
        %v5190 = vld [vmem:[#allocation2 + $0x58] sm:$0xff]
        %v5191 = vld [vmem:[#allocation2 + $0x60] sm:$0xff]
        %v5192 = vld [vmem:[#allocation2 + $0x68] sm:$0xff]
        %v5193 = vld [vmem:[#allocation2 + $0x70] sm:$0xff]
        %v5194 = vld [vmem:[#allocation2 + $0x78] sm:$0xff]
        %v5195 = vld [vmem:[#allocation2 + $0x80] sm:$0xff]
        %v5196 = vld [vmem:[#allocation2 + $0x88] sm:$0xff]
        %v5197 = vld [vmem:[#allocation2 + $0x90] sm:$0xff]
        %v5198 = vld [vmem:[#allocation2 + $0x98] sm:$0xff]
        %v5199 = vld [vmem:[#allocation2 + $0xa0] sm:$0xff]
        %v5200 = vld [vmem:[#allocation2 + $0xa8] sm:$0xff]
        %v5201 = vld [vmem:[#allocation2 + $0xb0] sm:$0xff]
        %v5202 = vld [vmem:[#allocation2 + $0xb8] sm:$0xff]
        %v5203 = vld [vmem:[#allocation2 + $0xc0] sm:$0xff]
        %v5204 = vld [vmem:[#allocation2 + $0xc8] sm:$0xff]
        %v5205 = vld [vmem:[#allocation2 + $0xd0] sm:$0xff]
        %v5206 = vld [vmem:[#allocation2 + $0xd8] sm:$0xff]
        %v5207 = vld [vmem:[#allocation2 + $0xe0] sm:$0xff]
        %v5208 = vld [vmem:[#allocation2 + $0xe8] sm:$0xff]
        %v5209 = vld [vmem:[#allocation2 + $0xf0] sm:$0xff]
        %v5210 = vld [vmem:[#allocation2 + $0xf8] sm:$0xff]
        %v5211 = vld [vmem:[#allocation2 + $0x100] sm:$0xff]
        %v5212 = vld [vmem:[#allocation2 + $0x108] sm:$0xff]
        %v5213 = vld [vmem:[#allocation2 + $0x110] sm:$0xff]
        %v5214 = vld [vmem:[#allocation2 + $0x118] sm:$0xff]
        %v5215 = vld [vmem:[#allocation2 + $0x120] sm:$0xff]
        %v5216 = vld [vmem:[#allocation2 + $0x128] sm:$0xff]
        %v5217 = vld [vmem:[#allocation2 + $0x130] sm:$0xff]
        %v5218 = vld [vmem:[#allocation2 + $0x138] sm:$0xff]
        %v5219 = vld [vmem:[#allocation2 + $0x140] sm:$0xff]
        %v5220 = vld [vmem:[#allocation2 + $0x148] sm:$0xff]
        %v5221 = vld [vmem:[#allocation2 + $0x150] sm:$0xff]
        %v5222 = vld [vmem:[#allocation2 + $0x158] sm:$0xff]
        %v5223 = vld [vmem:[#allocation2 + $0x160] sm:$0xff]
        %v5224 = vld [vmem:[#allocation2 + $0x168] sm:$0xff]
        %v5225 = vld [vmem:[#allocation2 + $0x170] sm:$0xff]
        %v5226 = vld [vmem:[#allocation2 + $0x178] sm:$0xff]
        %v5227 = vld [vmem:[#allocation2 + $0x180] sm:$0xff]
        %v5228 = vld [vmem:[#allocation2 + $0x188] sm:$0xff]
        %v5229 = vld [vmem:[#allocation2 + $0x190] sm:$0xff]
        %v5230 = vld [vmem:[#allocation2 + $0x198] sm:$0xff]
        %v5231 = vld [vmem:[#allocation2 + $0x1a0] sm:$0xff]
        %v5232 = vld [vmem:[#allocation2 + $0x1a8] sm:$0xff]
        %v5233 = vld [vmem:[#allocation2 + $0x1b0] sm:$0xff]
        %v5234 = vld [vmem:[#allocation2 + $0x1b8] sm:$0xff]
        %v5235 = vld [vmem:[#allocation2 + $0x1c0] sm:$0xff]
        %v5236 = vld [vmem:[#allocation2 + $0x1c8] sm:$0xff]
        %v5237 = vld [vmem:[#allocation2 + $0x1d0] sm:$0xff]
        %v5238 = vld [vmem:[#allocation2 + $0x1d8] sm:$0xff]
        %v5239 = vld [vmem:[#allocation2 + $0x1e0] sm:$0xff]
        %v5240 = vld [vmem:[#allocation2 + $0x1e8] sm:$0xff]
        %v5241 = vld [vmem:[#allocation2 + $0x1f0] sm:$0xff]
        %v5242 = vld [vmem:[#allocation2 + $0x1f8] sm:$0xff]
        %v5243 = vadd.f32 %v5179, %v5020
        %v5244 = vadd.f32 %v5180, %v5022
        %v5245 = vadd.f32 %v5181, %v5025
        %v5246 = vadd.f32 %v5182, %v5027
        %v5247 = vadd.f32 %v5183, %v5030
        %v5248 = vadd.f32 %v5184, %v5032
        %v5249 = vadd.f32 %v5185, %v5035
        %v5250 = vadd.f32 %v5186, %v5037
        %v5251 = vadd.f32 %v5187, %v5040
        %v5252 = vadd.f32 %v5188, %v5042
        %v5253 = vadd.f32 %v5189, %v5045
        %v5254 = vadd.f32 %v5190, %v5047
        %v5255 = vadd.f32 %v5191, %v5050
        %v5256 = vadd.f32 %v5192, %v5052
        %v5257 = vadd.f32 %v5193, %v5055
        %v5258 = vadd.f32 %v5194, %v5057
        %v5259 = vadd.f32 %v5195, %v5060
        %v5260 = vadd.f32 %v5196, %v5062
        %v5261 = vadd.f32 %v5197, %v5065
        %v5262 = vadd.f32 %v5198, %v5067
        %v5263 = vadd.f32 %v5199, %v5070
        %v5264 = vadd.f32 %v5200, %v5072
        %v5265 = vadd.f32 %v5201, %v5075
        %v5266 = vadd.f32 %v5202, %v5077
        %v5267 = vadd.f32 %v5203, %v5080
        %v5268 = vadd.f32 %v5204, %v5082
        %v5269 = vadd.f32 %v5205, %v5085
        %v5270 = vadd.f32 %v5206, %v5087
        %v5271 = vadd.f32 %v5207, %v5090
        %v5272 = vadd.f32 %v5208, %v5092
        %v5273 = vadd.f32 %v5209, %v5095
        %v5274 = vadd.f32 %v5210, %v5097
        %v5275 = vadd.f32 %v5211, %v5100
        %v5276 = vadd.f32 %v5212, %v5102
        %v5277 = vadd.f32 %v5213, %v5105
        %v5278 = vadd.f32 %v5214, %v5107
        %v5279 = vadd.f32 %v5215, %v5110
        %v5280 = vadd.f32 %v5216, %v5112
        %v5281 = vadd.f32 %v5217, %v5115
        %v5282 = vadd.f32 %v5218, %v5117
        %v5283 = vadd.f32 %v5219, %v5120
        %v5284 = vadd.f32 %v5220, %v5122
        %v5285 = vadd.f32 %v5221, %v5125
        %v5286 = vadd.f32 %v5222, %v5127
        %v5287 = vadd.f32 %v5223, %v5130
        %v5288 = vadd.f32 %v5224, %v5132
        %v5289 = vadd.f32 %v5225, %v5135
        %v5290 = vadd.f32 %v5226, %v5137
        %v5291 = vadd.f32 %v5227, %v5140
        %v5292 = vadd.f32 %v5228, %v5142
        %v5293 = vadd.f32 %v5229, %v5145
        %v5294 = vadd.f32 %v5230, %v5147
        %v5295 = vadd.f32 %v5231, %v5150
        %v5296 = vadd.f32 %v5232, %v5152
        %v5297 = vadd.f32 %v5233, %v5155
        %v5298 = vadd.f32 %v5234, %v5157
        %v5299 = vadd.f32 %v5235, %v5160
        %v5300 = vadd.f32 %v5236, %v5162
        %v5301 = vadd.f32 %v5237, %v5165
        %v5302 = vadd.f32 %v5238, %v5167
        %v5303 = vadd.f32 %v5239, %v5170
        %v5304 = vadd.f32 %v5240, %v5172
        %v5305 = vadd.f32 %v5241, %v5175
        %v5306 = vadd.f32 %v5242, %v5177
        %5307 = vst [vmem:[#allocation2] sm:$0xff] %v5243
        %5308 = vst [vmem:[#allocation2 + $0x8] sm:$0xff] %v5244
        %5309 = vst [vmem:[#allocation2 + $0x10] sm:$0xff] %v5245
        %5310 = vst [vmem:[#allocation2 + $0x18] sm:$0xff] %v5246
        %5311 = vst [vmem:[#allocation2 + $0x20] sm:$0xff] %v5247
        %5312 = vst [vmem:[#allocation2 + $0x28] sm:$0xff] %v5248
        %5313 = vst [vmem:[#allocation2 + $0x30] sm:$0xff] %v5249
        %5314 = vst [vmem:[#allocation2 + $0x38] sm:$0xff] %v5250
        %5315 = vst [vmem:[#allocation2 + $0x40] sm:$0xff] %v5251
        %5316 = vst [vmem:[#allocation2 + $0x48] sm:$0xff] %v5252
        %5317 = vst [vmem:[#allocation2 + $0x50] sm:$0xff] %v5253
        %5318 = vst [vmem:[#allocation2 + $0x58] sm:$0xff] %v5254
        %5319 = vst [vmem:[#allocation2 + $0x60] sm:$0xff] %v5255
        %5320 = vst [vmem:[#allocation2 + $0x68] sm:$0xff] %v5256
        %5321 = vst [vmem:[#allocation2 + $0x70] sm:$0xff] %v5257
        %5322 = vst [vmem:[#allocation2 + $0x78] sm:$0xff] %v5258
        %5323 = vst [vmem:[#allocation2 + $0x80] sm:$0xff] %v5259
        %5324 = vst [vmem:[#allocation2 + $0x88] sm:$0xff] %v5260
        %5325 = vst [vmem:[#allocation2 + $0x90] sm:$0xff] %v5261
        %5326 = vst [vmem:[#allocation2 + $0x98] sm:$0xff] %v5262
        %5327 = vst [vmem:[#allocation2 + $0xa0] sm:$0xff] %v5263
        %5328 = vst [vmem:[#allocation2 + $0xa8] sm:$0xff] %v5264
        %5329 = vst [vmem:[#allocation2 + $0xb0] sm:$0xff] %v5265
        %5330 = vst [vmem:[#allocation2 + $0xb8] sm:$0xff] %v5266
        %5331 = vst [vmem:[#allocation2 + $0xc0] sm:$0xff] %v5267
        %5332 = vst [vmem:[#allocation2 + $0xc8] sm:$0xff] %v5268
        %5333 = vst [vmem:[#allocation2 + $0xd0] sm:$0xff] %v5269
        %5334 = vst [vmem:[#allocation2 + $0xd8] sm:$0xff] %v5270
        %5335 = vst [vmem:[#allocation2 + $0xe0] sm:$0xff] %v5271
        %5336 = vst [vmem:[#allocation2 + $0xe8] sm:$0xff] %v5272
        %5337 = vst [vmem:[#allocation2 + $0xf0] sm:$0xff] %v5273
        %5338 = vst [vmem:[#allocation2 + $0xf8] sm:$0xff] %v5274
        %5339 = vst [vmem:[#allocation2 + $0x100] sm:$0xff] %v5275
        %5340 = vst [vmem:[#allocation2 + $0x108] sm:$0xff] %v5276
        %5341 = vst [vmem:[#allocation2 + $0x110] sm:$0xff] %v5277
        %5342 = vst [vmem:[#allocation2 + $0x118] sm:$0xff] %v5278
        %5343 = vst [vmem:[#allocation2 + $0x120] sm:$0xff] %v5279
        %5344 = vst [vmem:[#allocation2 + $0x128] sm:$0xff] %v5280
        %5345 = vst [vmem:[#allocation2 + $0x130] sm:$0xff] %v5281
        %5346 = vst [vmem:[#allocation2 + $0x138] sm:$0xff] %v5282
        %5347 = vst [vmem:[#allocation2 + $0x140] sm:$0xff] %v5283
        %5348 = vst [vmem:[#allocation2 + $0x148] sm:$0xff] %v5284
        %5349 = vst [vmem:[#allocation2 + $0x150] sm:$0xff] %v5285
        %5350 = vst [vmem:[#allocation2 + $0x158] sm:$0xff] %v5286
        %5351 = vst [vmem:[#allocation2 + $0x160] sm:$0xff] %v5287
        %5352 = vst [vmem:[#allocation2 + $0x168] sm:$0xff] %v5288
        %5353 = vst [vmem:[#allocation2 + $0x170] sm:$0xff] %v5289
        %5354 = vst [vmem:[#allocation2 + $0x178] sm:$0xff] %v5290
        %5355 = vst [vmem:[#allocation2 + $0x180] sm:$0xff] %v5291
        %5356 = vst [vmem:[#allocation2 + $0x188] sm:$0xff] %v5292
        %5357 = vst [vmem:[#allocation2 + $0x190] sm:$0xff] %v5293
        %5358 = vst [vmem:[#allocation2 + $0x198] sm:$0xff] %v5294
        %5359 = vst [vmem:[#allocation2 + $0x1a0] sm:$0xff] %v5295
        %5360 = vst [vmem:[#allocation2 + $0x1a8] sm:$0xff] %v5296
        %5361 = vst [vmem:[#allocation2 + $0x1b0] sm:$0xff] %v5297
        %5362 = vst [vmem:[#allocation2 + $0x1b8] sm:$0xff] %v5298
        %5363 = vst [vmem:[#allocation2 + $0x1c0] sm:$0xff] %v5299
        %5364 = vst [vmem:[#allocation2 + $0x1c8] sm:$0xff] %v5300
        %5365 = vst [vmem:[#allocation2 + $0x1d0] sm:$0xff] %v5301
        %5366 = vst [vmem:[#allocation2 + $0x1d8] sm:$0xff] %v5302
        %5367 = vst [vmem:[#allocation2 + $0x1e0] sm:$0xff] %v5303
        %5368 = vst [vmem:[#allocation2 + $0x1e8] sm:$0xff] %v5304
        %5369 = vst [vmem:[#allocation2 + $0x1f0] sm:$0xff] %v5305
        %5370 = vst [vmem:[#allocation2 + $0x1f8] sm:$0xff] %v5306
        %v5371 = vrot.slane %v4184, 1
        %v5372 = vrot.slane %v4185, 1
        %v5373 = vsel %vm1528, %v5371, %v5372
        %v5374 = vrot.slane %v4186, 1
        %v5375 = vsel %vm1528, %v5372, %v5374
        %v5376 = vrot.slane %v4187, 1
        %v5377 = vsel %vm1528, %v5374, %v5376
        %v5378 = vrot.slane %v4188, 1
        %v5379 = vsel %vm1528, %v5376, %v5378
        %v5380 = vrot.slane %v4189, 1
        %v5381 = vsel %vm1528, %v5378, %v5380
        %v5382 = vrot.slane %v4190, 1
        %v5383 = vsel %vm1528, %v5380, %v5382
        %v5384 = vrot.slane %v4191, 1
        %v5385 = vsel %vm1528, %v5382, %v5384
        %v5386 = vrot.slane %v4192, 1
        %v5387 = vsel %vm1528, %v5384, %v5386
        %v5388 = vrot.slane %v4193, 1
        %v5389 = vsel %vm1528, %v5386, %v5388
        %v5390 = vrot.slane %v4194, 1
        %v5391 = vsel %vm1528, %v5388, %v5390
        %v5392 = vrot.slane %v4195, 1
        %v5393 = vsel %vm1528, %v5390, %v5392
        %v5394 = vrot.slane %v4196, 1
        %v5395 = vsel %vm1528, %v5392, %v5394
        %v5396 = vrot.slane %v4197, 1
        %v5397 = vsel %vm1528, %v5394, %v5396
        %v5398 = vrot.slane %v4198, 1
        %v5399 = vsel %vm1528, %v5396, %v5398
        %v5400 = vrot.slane %v4199, 1
        %v5401 = vsel %vm1528, %v5398, %v5400
        %v5402 = vrot.slane %v4200, 1
        %v5403 = vsel %vm1528, %v5400, %v5402
        %v5404 = vrot.slane %v4201, 1
        %v5405 = vsel %vm1528, %v5402, %v5404
        %v5406 = vrot.slane %v4202, 1
        %v5407 = vsel %vm1528, %v5404, %v5406
        %v5408 = vrot.slane %v4203, 1
        %v5409 = vsel %vm1528, %v5406, %v5408
        %v5410 = vrot.slane %v4204, 1
        %v5411 = vsel %vm1528, %v5408, %v5410
        %v5412 = vrot.slane %v4205, 1
        %v5413 = vsel %vm1528, %v5410, %v5412
        %v5414 = vrot.slane %v4206, 1
        %v5415 = vsel %vm1528, %v5412, %v5414
        %v5416 = vrot.slane %v4207, 1
        %v5417 = vsel %vm1528, %v5414, %v5416
        %v5418 = vrot.slane %v4208, 1
        %v5419 = vsel %vm1528, %v5416, %v5418
        %v5420 = vrot.slane %v4209, 1
        %v5421 = vsel %vm1528, %v5418, %v5420
        %v5422 = vrot.slane %v4210, 1
        %v5423 = vsel %vm1528, %v5420, %v5422
        %v5424 = vrot.slane %v4211, 1
        %v5425 = vsel %vm1528, %v5422, %v5424
        %v5426 = vrot.slane %v4212, 1
        %v5427 = vsel %vm1528, %v5424, %v5426
        %v5428 = vrot.slane %v4213, 1
        %v5429 = vsel %vm1528, %v5426, %v5428
        %v5430 = vrot.slane %v4214, 1
        %v5431 = vsel %vm1528, %v5428, %v5430
        %v5432 = vrot.slane %v4215, 1
        %v5433 = vsel %vm1528, %v5430, %v5432
        %v5466 = vsel %vm1623, %v5432, 0
        %s5468 = scalar_lea.vmem [#allocation6], 512
        %v5469 = vld [vmem:[%s5468] sm:$0xf]
        %v5470 = vld [vmem:[%s5468 + $0x4] sm:$0xf]
        %v5471 = vld [vmem:[%s5468 + $0x8] sm:$0xf]
        %v5472 = vld [vmem:[%s5468 + $0xc] sm:$0xf]
        %v5473 = vld [vmem:[%s5468 + $0x10] sm:$0xf]
        %v5474 = vld [vmem:[%s5468 + $0x14] sm:$0xf]
        %v5475 = vld [vmem:[%s5468 + $0x18] sm:$0xf]
        %v5476 = vld [vmem:[%s5468 + $0x1c] sm:$0xf]
        %v5477 = vld [vmem:[%s5468 + $0x20] sm:$0xf]
        %v5478 = vld [vmem:[%s5468 + $0x24] sm:$0xf]
        %v5479 = vld [vmem:[%s5468 + $0x28] sm:$0xf]
        %v5480 = vld [vmem:[%s5468 + $0x2c] sm:$0xf]
        %v5481 = vld [vmem:[%s5468 + $0x30] sm:$0xf]
        %v5482 = vld [vmem:[%s5468 + $0x34] sm:$0xf]
        %v5483 = vld [vmem:[%s5468 + $0x38] sm:$0xf]
        %v5484 = vld [vmem:[%s5468 + $0x3c] sm:$0xf]
        %v5501 = vunpack.c.l.b16 %v5469
        %v5502 = vunpack.c.l.b16 %v5470
        %v5503 = vunpack.c.l.b16 %v5471
        %v5504 = vunpack.c.l.b16 %v5472
        %v5505 = vunpack.c.l.b16 %v5473
        %v5506 = vunpack.c.l.b16 %v5474
        %v5507 = vunpack.c.l.b16 %v5475
        %v5508 = vunpack.c.l.b16 %v5476
        %v5509 = vunpack.c.l.b16 %v5477
        %v5510 = vunpack.c.l.b16 %v5478
        %v5511 = vunpack.c.l.b16 %v5479
        %v5512 = vunpack.c.l.b16 %v5480
        %v5513 = vunpack.c.l.b16 %v5481
        %v5514 = vunpack.c.l.b16 %v5482
        %v5515 = vunpack.c.l.b16 %v5483
        %v5516 = vunpack.c.l.b16 %v5484
        %v5517 = vpack.c.b16 %v5502, %v5501
        %v5518 = vpack.c.b16 %v5504, %v5503
        %v5519 = vpack.c.b16 %v5506, %v5505
        %v5520 = vpack.c.b16 %v5508, %v5507
        %v5521 = vpack.c.b16 %v5510, %v5509
        %v5522 = vpack.c.b16 %v5512, %v5511
        %v5523 = vpack.c.b16 %v5514, %v5513
        %v5524 = vpack.c.b16 %v5516, %v5515
        %5533 = vmatpush.bf16.msra.mxu0 %v5524
        %5534 = vmatpush.bf16.msra.mxu0 %v5523
        %5535 = vmatpush.bf16.msra.mxu0 %v5522
        %5536 = vmatpush.bf16.msra.mxu0 %v5521
        %5537 = vmatpush.bf16.msra.mxu0 %v5520
        %5538 = vmatpush.bf16.msra.mxu0 %v5519
        %5539 = vmatpush.bf16.msra.mxu0 %v5518
        %5540 = vmatpush.bf16.msra.mxu0 %v5517
        %5541 = vmatmul.bf16.gmra.mxu0 %v5373
        %v5542 = vpop.f32.mrf.mxu0
        %v5543 = vadd.f32 0.0, %v5542
        %v5544 = vpop.f32.mrf.mxu0
        %v5545 = vadd.f32 0.0, %v5544
        %5546 = vmatmul.bf16.gmra.mxu0 %v5375
        %v5547 = vpop.f32.mrf.mxu0
        %v5548 = vadd.f32 0.0, %v5547
        %v5549 = vpop.f32.mrf.mxu0
        %v5550 = vadd.f32 0.0, %v5549
        %5551 = vmatmul.bf16.gmra.mxu0 %v5377
        %v5552 = vpop.f32.mrf.mxu0
        %v5553 = vadd.f32 0.0, %v5552
        %v5554 = vpop.f32.mrf.mxu0
        %v5555 = vadd.f32 0.0, %v5554
        %5556 = vmatmul.bf16.gmra.mxu0 %v5379
        %v5557 = vpop.f32.mrf.mxu0
        %v5558 = vadd.f32 0.0, %v5557
        %v5559 = vpop.f32.mrf.mxu0
        %v5560 = vadd.f32 0.0, %v5559
        %5561 = vmatmul.bf16.gmra.mxu0 %v5381
        %v5562 = vpop.f32.mrf.mxu0
        %v5563 = vadd.f32 0.0, %v5562
        %v5564 = vpop.f32.mrf.mxu0
        %v5565 = vadd.f32 0.0, %v5564
        %5566 = vmatmul.bf16.gmra.mxu0 %v5383
        %v5567 = vpop.f32.mrf.mxu0
        %v5568 = vadd.f32 0.0, %v5567
        %v5569 = vpop.f32.mrf.mxu0
        %v5570 = vadd.f32 0.0, %v5569
        %5571 = vmatmul.bf16.gmra.mxu0 %v5385
        %v5572 = vpop.f32.mrf.mxu0
        %v5573 = vadd.f32 0.0, %v5572
        %v5574 = vpop.f32.mrf.mxu0
        %v5575 = vadd.f32 0.0, %v5574
        %5576 = vmatmul.bf16.gmra.mxu0 %v5387
        %v5577 = vpop.f32.mrf.mxu0
        %v5578 = vadd.f32 0.0, %v5577
        %v5579 = vpop.f32.mrf.mxu0
        %v5580 = vadd.f32 0.0, %v5579
        %5581 = vmatmul.bf16.gmra.mxu0 %v5389
        %v5582 = vpop.f32.mrf.mxu0
        %v5583 = vadd.f32 0.0, %v5582
        %v5584 = vpop.f32.mrf.mxu0
        %v5585 = vadd.f32 0.0, %v5584
        %5586 = vmatmul.bf16.gmra.mxu0 %v5391
        %v5587 = vpop.f32.mrf.mxu0
        %v5588 = vadd.f32 0.0, %v5587
        %v5589 = vpop.f32.mrf.mxu0
        %v5590 = vadd.f32 0.0, %v5589
        %5591 = vmatmul.bf16.gmra.mxu0 %v5393
        %v5592 = vpop.f32.mrf.mxu0
        %v5593 = vadd.f32 0.0, %v5592
        %v5594 = vpop.f32.mrf.mxu0
        %v5595 = vadd.f32 0.0, %v5594
        %5596 = vmatmul.bf16.gmra.mxu0 %v5395
        %v5597 = vpop.f32.mrf.mxu0
        %v5598 = vadd.f32 0.0, %v5597
        %v5599 = vpop.f32.mrf.mxu0
        %v5600 = vadd.f32 0.0, %v5599
        %5601 = vmatmul.bf16.gmra.mxu0 %v5397
        %v5602 = vpop.f32.mrf.mxu0
        %v5603 = vadd.f32 0.0, %v5602
        %v5604 = vpop.f32.mrf.mxu0
        %v5605 = vadd.f32 0.0, %v5604
        %5606 = vmatmul.bf16.gmra.mxu0 %v5399
        %v5607 = vpop.f32.mrf.mxu0
        %v5608 = vadd.f32 0.0, %v5607
        %v5609 = vpop.f32.mrf.mxu0
        %v5610 = vadd.f32 0.0, %v5609
        %5611 = vmatmul.bf16.gmra.mxu0 %v5401
        %v5612 = vpop.f32.mrf.mxu0
        %v5613 = vadd.f32 0.0, %v5612
        %v5614 = vpop.f32.mrf.mxu0
        %v5615 = vadd.f32 0.0, %v5614
        %5616 = vmatmul.bf16.gmra.mxu0 %v5403
        %v5617 = vpop.f32.mrf.mxu0
        %v5618 = vadd.f32 0.0, %v5617
        %v5619 = vpop.f32.mrf.mxu0
        %v5620 = vadd.f32 0.0, %v5619
        %5621 = vmatmul.bf16.gmra.mxu0 %v5405
        %v5622 = vpop.f32.mrf.mxu0
        %v5623 = vadd.f32 0.0, %v5622
        %v5624 = vpop.f32.mrf.mxu0
        %v5625 = vadd.f32 0.0, %v5624
        %5626 = vmatmul.bf16.gmra.mxu0 %v5407
        %v5627 = vpop.f32.mrf.mxu0
        %v5628 = vadd.f32 0.0, %v5627
        %v5629 = vpop.f32.mrf.mxu0
        %v5630 = vadd.f32 0.0, %v5629
        %5631 = vmatmul.bf16.gmra.mxu0 %v5409
        %v5632 = vpop.f32.mrf.mxu0
        %v5633 = vadd.f32 0.0, %v5632
        %v5634 = vpop.f32.mrf.mxu0
        %v5635 = vadd.f32 0.0, %v5634
        %5636 = vmatmul.bf16.gmra.mxu0 %v5411
        %v5637 = vpop.f32.mrf.mxu0
        %v5638 = vadd.f32 0.0, %v5637
        %v5639 = vpop.f32.mrf.mxu0
        %v5640 = vadd.f32 0.0, %v5639
        %5641 = vmatmul.bf16.gmra.mxu0 %v5413
        %v5642 = vpop.f32.mrf.mxu0
        %v5643 = vadd.f32 0.0, %v5642
        %v5644 = vpop.f32.mrf.mxu0
        %v5645 = vadd.f32 0.0, %v5644
        %5646 = vmatmul.bf16.gmra.mxu0 %v5415
        %v5647 = vpop.f32.mrf.mxu0
        %v5648 = vadd.f32 0.0, %v5647
        %v5649 = vpop.f32.mrf.mxu0
        %v5650 = vadd.f32 0.0, %v5649
        %5651 = vmatmul.bf16.gmra.mxu0 %v5417
        %v5652 = vpop.f32.mrf.mxu0
        %v5653 = vadd.f32 0.0, %v5652
        %v5654 = vpop.f32.mrf.mxu0
        %v5655 = vadd.f32 0.0, %v5654
        %5656 = vmatmul.bf16.gmra.mxu0 %v5419
        %v5657 = vpop.f32.mrf.mxu0
        %v5658 = vadd.f32 0.0, %v5657
        %v5659 = vpop.f32.mrf.mxu0
        %v5660 = vadd.f32 0.0, %v5659
        %5661 = vmatmul.bf16.gmra.mxu0 %v5421
        %v5662 = vpop.f32.mrf.mxu0
        %v5663 = vadd.f32 0.0, %v5662
        %v5664 = vpop.f32.mrf.mxu0
        %v5665 = vadd.f32 0.0, %v5664
        %5666 = vmatmul.bf16.gmra.mxu0 %v5423
        %v5667 = vpop.f32.mrf.mxu0
        %v5668 = vadd.f32 0.0, %v5667
        %v5669 = vpop.f32.mrf.mxu0
        %v5670 = vadd.f32 0.0, %v5669
        %5671 = vmatmul.bf16.gmra.mxu0 %v5425
        %v5672 = vpop.f32.mrf.mxu0
        %v5673 = vadd.f32 0.0, %v5672
        %v5674 = vpop.f32.mrf.mxu0
        %v5675 = vadd.f32 0.0, %v5674
        %5676 = vmatmul.bf16.gmra.mxu0 %v5427
        %v5677 = vpop.f32.mrf.mxu0
        %v5678 = vadd.f32 0.0, %v5677
        %v5679 = vpop.f32.mrf.mxu0
        %v5680 = vadd.f32 0.0, %v5679
        %5681 = vmatmul.bf16.gmra.mxu0 %v5429
        %v5682 = vpop.f32.mrf.mxu0
        %v5683 = vadd.f32 0.0, %v5682
        %v5684 = vpop.f32.mrf.mxu0
        %v5685 = vadd.f32 0.0, %v5684
        %5686 = vmatmul.bf16.gmra.mxu0 %v5431
        %v5687 = vpop.f32.mrf.mxu0
        %v5688 = vadd.f32 0.0, %v5687
        %v5689 = vpop.f32.mrf.mxu0
        %v5690 = vadd.f32 0.0, %v5689
        %5691 = vmatmul.bf16.gmra.mxu0 %v5433
        %v5692 = vpop.f32.mrf.mxu0
        %v5693 = vadd.f32 0.0, %v5692
        %v5694 = vpop.f32.mrf.mxu0
        %v5695 = vadd.f32 0.0, %v5694
        %5696 = vmatmul.bf16.gmra.mxu0 %v5466
        %v5697 = vpop.f32.mrf.mxu0
        %v5698 = vadd.f32 0.0, %v5697
        %v5699 = vpop.f32.mrf.mxu0
        %v5700 = vadd.f32 0.0, %v5699
        %5701 = vdwg.mxu0
        %v5702 = vld [vmem:[#allocation2] sm:$0xff]
        %v5703 = vld [vmem:[#allocation2 + $0x8] sm:$0xff]
        %v5704 = vld [vmem:[#allocation2 + $0x10] sm:$0xff]
        %v5705 = vld [vmem:[#allocation2 + $0x18] sm:$0xff]
        %v5706 = vld [vmem:[#allocation2 + $0x20] sm:$0xff]
        %v5707 = vld [vmem:[#allocation2 + $0x28] sm:$0xff]
        %v5708 = vld [vmem:[#allocation2 + $0x30] sm:$0xff]
        %v5709 = vld [vmem:[#allocation2 + $0x38] sm:$0xff]
        %v5710 = vld [vmem:[#allocation2 + $0x40] sm:$0xff]
        %v5711 = vld [vmem:[#allocation2 + $0x48] sm:$0xff]
        %v5712 = vld [vmem:[#allocation2 + $0x50] sm:$0xff]
        %v5713 = vld [vmem:[#allocation2 + $0x58] sm:$0xff]
        %v5714 = vld [vmem:[#allocation2 + $0x60] sm:$0xff]
        %v5715 = vld [vmem:[#allocation2 + $0x68] sm:$0xff]
        %v5716 = vld [vmem:[#allocation2 + $0x70] sm:$0xff]
        %v5717 = vld [vmem:[#allocation2 + $0x78] sm:$0xff]
        %v5718 = vld [vmem:[#allocation2 + $0x80] sm:$0xff]
        %v5719 = vld [vmem:[#allocation2 + $0x88] sm:$0xff]
        %v5720 = vld [vmem:[#allocation2 + $0x90] sm:$0xff]
        %v5721 = vld [vmem:[#allocation2 + $0x98] sm:$0xff]
        %v5722 = vld [vmem:[#allocation2 + $0xa0] sm:$0xff]
        %v5723 = vld [vmem:[#allocation2 + $0xa8] sm:$0xff]
        %v5724 = vld [vmem:[#allocation2 + $0xb0] sm:$0xff]
        %v5725 = vld [vmem:[#allocation2 + $0xb8] sm:$0xff]
        %v5726 = vld [vmem:[#allocation2 + $0xc0] sm:$0xff]
        %v5727 = vld [vmem:[#allocation2 + $0xc8] sm:$0xff]
        %v5728 = vld [vmem:[#allocation2 + $0xd0] sm:$0xff]
        %v5729 = vld [vmem:[#allocation2 + $0xd8] sm:$0xff]
        %v5730 = vld [vmem:[#allocation2 + $0xe0] sm:$0xff]
        %v5731 = vld [vmem:[#allocation2 + $0xe8] sm:$0xff]
        %v5732 = vld [vmem:[#allocation2 + $0xf0] sm:$0xff]
        %v5733 = vld [vmem:[#allocation2 + $0xf8] sm:$0xff]
        %v5734 = vld [vmem:[#allocation2 + $0x100] sm:$0xff]
        %v5735 = vld [vmem:[#allocation2 + $0x108] sm:$0xff]
        %v5736 = vld [vmem:[#allocation2 + $0x110] sm:$0xff]
        %v5737 = vld [vmem:[#allocation2 + $0x118] sm:$0xff]
        %v5738 = vld [vmem:[#allocation2 + $0x120] sm:$0xff]
        %v5739 = vld [vmem:[#allocation2 + $0x128] sm:$0xff]
        %v5740 = vld [vmem:[#allocation2 + $0x130] sm:$0xff]
        %v5741 = vld [vmem:[#allocation2 + $0x138] sm:$0xff]
        %v5742 = vld [vmem:[#allocation2 + $0x140] sm:$0xff]
        %v5743 = vld [vmem:[#allocation2 + $0x148] sm:$0xff]
        %v5744 = vld [vmem:[#allocation2 + $0x150] sm:$0xff]
        %v5745 = vld [vmem:[#allocation2 + $0x158] sm:$0xff]
        %v5746 = vld [vmem:[#allocation2 + $0x160] sm:$0xff]
        %v5747 = vld [vmem:[#allocation2 + $0x168] sm:$0xff]
        %v5748 = vld [vmem:[#allocation2 + $0x170] sm:$0xff]
        %v5749 = vld [vmem:[#allocation2 + $0x178] sm:$0xff]
        %v5750 = vld [vmem:[#allocation2 + $0x180] sm:$0xff]
        %v5751 = vld [vmem:[#allocation2 + $0x188] sm:$0xff]
        %v5752 = vld [vmem:[#allocation2 + $0x190] sm:$0xff]
        %v5753 = vld [vmem:[#allocation2 + $0x198] sm:$0xff]
        %v5754 = vld [vmem:[#allocation2 + $0x1a0] sm:$0xff]
        %v5755 = vld [vmem:[#allocation2 + $0x1a8] sm:$0xff]
        %v5756 = vld [vmem:[#allocation2 + $0x1b0] sm:$0xff]
        %v5757 = vld [vmem:[#allocation2 + $0x1b8] sm:$0xff]
        %v5758 = vld [vmem:[#allocation2 + $0x1c0] sm:$0xff]
        %v5759 = vld [vmem:[#allocation2 + $0x1c8] sm:$0xff]
        %v5760 = vld [vmem:[#allocation2 + $0x1d0] sm:$0xff]
        %v5761 = vld [vmem:[#allocation2 + $0x1d8] sm:$0xff]
        %v5762 = vld [vmem:[#allocation2 + $0x1e0] sm:$0xff]
        %v5763 = vld [vmem:[#allocation2 + $0x1e8] sm:$0xff]
        %v5764 = vld [vmem:[#allocation2 + $0x1f0] sm:$0xff]
        %v5765 = vld [vmem:[#allocation2 + $0x1f8] sm:$0xff]
        %v5766 = vadd.f32 %v5702, %v5543
        %v5767 = vadd.f32 %v5703, %v5545
        %v5768 = vadd.f32 %v5704, %v5548
        %v5769 = vadd.f32 %v5705, %v5550
        %v5770 = vadd.f32 %v5706, %v5553
        %v5771 = vadd.f32 %v5707, %v5555
        %v5772 = vadd.f32 %v5708, %v5558
        %v5773 = vadd.f32 %v5709, %v5560
        %v5774 = vadd.f32 %v5710, %v5563
        %v5775 = vadd.f32 %v5711, %v5565
        %v5776 = vadd.f32 %v5712, %v5568
        %v5777 = vadd.f32 %v5713, %v5570
        %v5778 = vadd.f32 %v5714, %v5573
        %v5779 = vadd.f32 %v5715, %v5575
        %v5780 = vadd.f32 %v5716, %v5578
        %v5781 = vadd.f32 %v5717, %v5580
        %v5782 = vadd.f32 %v5718, %v5583
        %v5783 = vadd.f32 %v5719, %v5585
        %v5784 = vadd.f32 %v5720, %v5588
        %v5785 = vadd.f32 %v5721, %v5590
        %v5786 = vadd.f32 %v5722, %v5593
        %v5787 = vadd.f32 %v5723, %v5595
        %v5788 = vadd.f32 %v5724, %v5598
        %v5789 = vadd.f32 %v5725, %v5600
        %v5790 = vadd.f32 %v5726, %v5603
        %v5791 = vadd.f32 %v5727, %v5605
        %v5792 = vadd.f32 %v5728, %v5608
        %v5793 = vadd.f32 %v5729, %v5610
        %v5794 = vadd.f32 %v5730, %v5613
        %v5795 = vadd.f32 %v5731, %v5615
        %v5796 = vadd.f32 %v5732, %v5618
        %v5797 = vadd.f32 %v5733, %v5620
        %v5798 = vadd.f32 %v5734, %v5623
        %v5799 = vadd.f32 %v5735, %v5625
        %v5800 = vadd.f32 %v5736, %v5628
        %v5801 = vadd.f32 %v5737, %v5630
        %v5802 = vadd.f32 %v5738, %v5633
        %v5803 = vadd.f32 %v5739, %v5635
        %v5804 = vadd.f32 %v5740, %v5638
        %v5805 = vadd.f32 %v5741, %v5640
        %v5806 = vadd.f32 %v5742, %v5643
        %v5807 = vadd.f32 %v5743, %v5645
        %v5808 = vadd.f32 %v5744, %v5648
        %v5809 = vadd.f32 %v5745, %v5650
        %v5810 = vadd.f32 %v5746, %v5653
        %v5811 = vadd.f32 %v5747, %v5655
        %v5812 = vadd.f32 %v5748, %v5658
        %v5813 = vadd.f32 %v5749, %v5660
        %v5814 = vadd.f32 %v5750, %v5663
        %v5815 = vadd.f32 %v5751, %v5665
        %v5816 = vadd.f32 %v5752, %v5668
        %v5817 = vadd.f32 %v5753, %v5670
        %v5818 = vadd.f32 %v5754, %v5673
        %v5819 = vadd.f32 %v5755, %v5675
        %v5820 = vadd.f32 %v5756, %v5678
        %v5821 = vadd.f32 %v5757, %v5680
        %v5822 = vadd.f32 %v5758, %v5683
        %v5823 = vadd.f32 %v5759, %v5685
        %v5824 = vadd.f32 %v5760, %v5688
        %v5825 = vadd.f32 %v5761, %v5690
        %v5826 = vadd.f32 %v5762, %v5693
        %v5827 = vadd.f32 %v5763, %v5695
        %v5828 = vadd.f32 %v5764, %v5698
        %v5829 = vadd.f32 %v5765, %v5700
        %5830 = vst [vmem:[#allocation2] sm:$0xff] %v5766
        %5831 = vst [vmem:[#allocation2 + $0x8] sm:$0xff] %v5767
        %5832 = vst [vmem:[#allocation2 + $0x10] sm:$0xff] %v5768
        %5833 = vst [vmem:[#allocation2 + $0x18] sm:$0xff] %v5769
        %5834 = vst [vmem:[#allocation2 + $0x20] sm:$0xff] %v5770
        %5835 = vst [vmem:[#allocation2 + $0x28] sm:$0xff] %v5771
        %5836 = vst [vmem:[#allocation2 + $0x30] sm:$0xff] %v5772
        %5837 = vst [vmem:[#allocation2 + $0x38] sm:$0xff] %v5773
        %5838 = vst [vmem:[#allocation2 + $0x40] sm:$0xff] %v5774
        %5839 = vst [vmem:[#allocation2 + $0x48] sm:$0xff] %v5775
        %5840 = vst [vmem:[#allocation2 + $0x50] sm:$0xff] %v5776
        %5841 = vst [vmem:[#allocation2 + $0x58] sm:$0xff] %v5777
        %5842 = vst [vmem:[#allocation2 + $0x60] sm:$0xff] %v5778
        %5843 = vst [vmem:[#allocation2 + $0x68] sm:$0xff] %v5779
        %5844 = vst [vmem:[#allocation2 + $0x70] sm:$0xff] %v5780
        %5845 = vst [vmem:[#allocation2 + $0x78] sm:$0xff] %v5781
        %5846 = vst [vmem:[#allocation2 + $0x80] sm:$0xff] %v5782
        %5847 = vst [vmem:[#allocation2 + $0x88] sm:$0xff] %v5783
        %5848 = vst [vmem:[#allocation2 + $0x90] sm:$0xff] %v5784
        %5849 = vst [vmem:[#allocation2 + $0x98] sm:$0xff] %v5785
        %5850 = vst [vmem:[#allocation2 + $0xa0] sm:$0xff] %v5786
        %5851 = vst [vmem:[#allocation2 + $0xa8] sm:$0xff] %v5787
        %5852 = vst [vmem:[#allocation2 + $0xb0] sm:$0xff] %v5788
        %5853 = vst [vmem:[#allocation2 + $0xb8] sm:$0xff] %v5789
        %5854 = vst [vmem:[#allocation2 + $0xc0] sm:$0xff] %v5790
        %5855 = vst [vmem:[#allocation2 + $0xc8] sm:$0xff] %v5791
        %5856 = vst [vmem:[#allocation2 + $0xd0] sm:$0xff] %v5792
        %5857 = vst [vmem:[#allocation2 + $0xd8] sm:$0xff] %v5793
        %5858 = vst [vmem:[#allocation2 + $0xe0] sm:$0xff] %v5794
        %5859 = vst [vmem:[#allocation2 + $0xe8] sm:$0xff] %v5795
        %5860 = vst [vmem:[#allocation2 + $0xf0] sm:$0xff] %v5796
        %5861 = vst [vmem:[#allocation2 + $0xf8] sm:$0xff] %v5797
        %5862 = vst [vmem:[#allocation2 + $0x100] sm:$0xff] %v5798
        %5863 = vst [vmem:[#allocation2 + $0x108] sm:$0xff] %v5799
        %5864 = vst [vmem:[#allocation2 + $0x110] sm:$0xff] %v5800
        %5865 = vst [vmem:[#allocation2 + $0x118] sm:$0xff] %v5801
        %5866 = vst [vmem:[#allocation2 + $0x120] sm:$0xff] %v5802
        %5867 = vst [vmem:[#allocation2 + $0x128] sm:$0xff] %v5803
        %5868 = vst [vmem:[#allocation2 + $0x130] sm:$0xff] %v5804
        %5869 = vst [vmem:[#allocation2 + $0x138] sm:$0xff] %v5805
        %5870 = vst [vmem:[#allocation2 + $0x140] sm:$0xff] %v5806
        %5871 = vst [vmem:[#allocation2 + $0x148] sm:$0xff] %v5807
        %5872 = vst [vmem:[#allocation2 + $0x150] sm:$0xff] %v5808
        %5873 = vst [vmem:[#allocation2 + $0x158] sm:$0xff] %v5809
        %5874 = vst [vmem:[#allocation2 + $0x160] sm:$0xff] %v5810
        %5875 = vst [vmem:[#allocation2 + $0x168] sm:$0xff] %v5811
        %5876 = vst [vmem:[#allocation2 + $0x170] sm:$0xff] %v5812
        %5877 = vst [vmem:[#allocation2 + $0x178] sm:$0xff] %v5813
        %5878 = vst [vmem:[#allocation2 + $0x180] sm:$0xff] %v5814
        %5879 = vst [vmem:[#allocation2 + $0x188] sm:$0xff] %v5815
        %5880 = vst [vmem:[#allocation2 + $0x190] sm:$0xff] %v5816
        %5881 = vst [vmem:[#allocation2 + $0x198] sm:$0xff] %v5817
        %5882 = vst [vmem:[#allocation2 + $0x1a0] sm:$0xff] %v5818
        %5883 = vst [vmem:[#allocation2 + $0x1a8] sm:$0xff] %v5819
        %5884 = vst [vmem:[#allocation2 + $0x1b0] sm:$0xff] %v5820
        %5885 = vst [vmem:[#allocation2 + $0x1b8] sm:$0xff] %v5821
        %5886 = vst [vmem:[#allocation2 + $0x1c0] sm:$0xff] %v5822
        %5887 = vst [vmem:[#allocation2 + $0x1c8] sm:$0xff] %v5823
        %5888 = vst [vmem:[#allocation2 + $0x1d0] sm:$0xff] %v5824
        %5889 = vst [vmem:[#allocation2 + $0x1d8] sm:$0xff] %v5825
        %5890 = vst [vmem:[#allocation2 + $0x1e0] sm:$0xff] %v5826
        %5891 = vst [vmem:[#allocation2 + $0x1e8] sm:$0xff] %v5827
        %5892 = vst [vmem:[#allocation2 + $0x1f0] sm:$0xff] %v5828
        %5893 = vst [vmem:[#allocation2 + $0x1f8] sm:$0xff] %v5829
        %v5894 = vld [vmem:[#allocation2] sm:$0xff]
        %v5895 = vld [vmem:[#allocation2 + $0x8] sm:$0xff]
        %v5896 = vld [vmem:[#allocation2 + $0x10] sm:$0xff]
        %v5897 = vld [vmem:[#allocation2 + $0x18] sm:$0xff]
        %v5898 = vld [vmem:[#allocation2 + $0x20] sm:$0xff]
        %v5899 = vld [vmem:[#allocation2 + $0x28] sm:$0xff]
        %v5900 = vld [vmem:[#allocation2 + $0x30] sm:$0xff]
        %v5901 = vld [vmem:[#allocation2 + $0x38] sm:$0xff]
        %v5902 = vld [vmem:[#allocation2 + $0x40] sm:$0xff]
        %v5903 = vld [vmem:[#allocation2 + $0x48] sm:$0xff]
        %v5904 = vld [vmem:[#allocation2 + $0x50] sm:$0xff]
        %v5905 = vld [vmem:[#allocation2 + $0x58] sm:$0xff]
        %v5906 = vld [vmem:[#allocation2 + $0x60] sm:$0xff]
        %v5907 = vld [vmem:[#allocation2 + $0x68] sm:$0xff]
        %v5908 = vld [vmem:[#allocation2 + $0x70] sm:$0xff]
        %v5909 = vld [vmem:[#allocation2 + $0x78] sm:$0xff]
        %v5910 = vld [vmem:[#allocation2 + $0x80] sm:$0xff]
        %v5911 = vld [vmem:[#allocation2 + $0x88] sm:$0xff]
        %v5912 = vld [vmem:[#allocation2 + $0x90] sm:$0xff]
        %v5913 = vld [vmem:[#allocation2 + $0x98] sm:$0xff]
        %v5914 = vld [vmem:[#allocation2 + $0xa0] sm:$0xff]
        %v5915 = vld [vmem:[#allocation2 + $0xa8] sm:$0xff]
        %v5916 = vld [vmem:[#allocation2 + $0xb0] sm:$0xff]
        %v5917 = vld [vmem:[#allocation2 + $0xb8] sm:$0xff]
        %v5918 = vld [vmem:[#allocation2 + $0xc0] sm:$0xff]
        %v5919 = vld [vmem:[#allocation2 + $0xc8] sm:$0xff]
        %v5920 = vld [vmem:[#allocation2 + $0xd0] sm:$0xff]
        %v5921 = vld [vmem:[#allocation2 + $0xd8] sm:$0xff]
        %v5922 = vld [vmem:[#allocation2 + $0xe0] sm:$0xff]
        %v5923 = vld [vmem:[#allocation2 + $0xe8] sm:$0xff]
        %v5924 = vld [vmem:[#allocation2 + $0xf0] sm:$0xff]
        %v5925 = vld [vmem:[#allocation2 + $0xf8] sm:$0xff]
        %v5926 = vld [vmem:[#allocation2 + $0x100] sm:$0xff]
        %v5927 = vld [vmem:[#allocation2 + $0x108] sm:$0xff]
        %v5928 = vld [vmem:[#allocation2 + $0x110] sm:$0xff]
        %v5929 = vld [vmem:[#allocation2 + $0x118] sm:$0xff]
        %v5930 = vld [vmem:[#allocation2 + $0x120] sm:$0xff]
        %v5931 = vld [vmem:[#allocation2 + $0x128] sm:$0xff]
        %v5932 = vld [vmem:[#allocation2 + $0x130] sm:$0xff]
        %v5933 = vld [vmem:[#allocation2 + $0x138] sm:$0xff]
        %v5934 = vld [vmem:[#allocation2 + $0x140] sm:$0xff]
        %v5935 = vld [vmem:[#allocation2 + $0x148] sm:$0xff]
        %v5936 = vld [vmem:[#allocation2 + $0x150] sm:$0xff]
        %v5937 = vld [vmem:[#allocation2 + $0x158] sm:$0xff]
        %v5938 = vld [vmem:[#allocation2 + $0x160] sm:$0xff]
        %v5939 = vld [vmem:[#allocation2 + $0x168] sm:$0xff]
        %v5940 = vld [vmem:[#allocation2 + $0x170] sm:$0xff]
        %v5941 = vld [vmem:[#allocation2 + $0x178] sm:$0xff]
        %v5942 = vld [vmem:[#allocation2 + $0x180] sm:$0xff]
        %v5943 = vld [vmem:[#allocation2 + $0x188] sm:$0xff]
        %v5944 = vld [vmem:[#allocation2 + $0x190] sm:$0xff]
        %v5945 = vld [vmem:[#allocation2 + $0x198] sm:$0xff]
        %v5946 = vld [vmem:[#allocation2 + $0x1a0] sm:$0xff]
        %v5947 = vld [vmem:[#allocation2 + $0x1a8] sm:$0xff]
        %v5948 = vld [vmem:[#allocation2 + $0x1b0] sm:$0xff]
        %v5949 = vld [vmem:[#allocation2 + $0x1b8] sm:$0xff]
        %v5950 = vld [vmem:[#allocation2 + $0x1c0] sm:$0xff]
        %v5951 = vld [vmem:[#allocation2 + $0x1c8] sm:$0xff]
        %v5952 = vld [vmem:[#allocation2 + $0x1d0] sm:$0xff]
        %v5953 = vld [vmem:[#allocation2 + $0x1d8] sm:$0xff]
        %v5954 = vld [vmem:[#allocation2 + $0x1e0] sm:$0xff]
        %v5955 = vld [vmem:[#allocation2 + $0x1e8] sm:$0xff]
        %v5956 = vld [vmem:[#allocation2 + $0x1f0] sm:$0xff]
        %v5957 = vld [vmem:[#allocation2 + $0x1f8] sm:$0xff]
        %v5958 = vld [vmem:[%s255] sm:$0x1]
        %v5960 = vperm.slane %v5958, 0
        %v5962 = vadd.f32 %v5894, %v5960
        %v5963 = vadd.f32 %v5895, %v5960
        %v5964 = vadd.f32 %v5896, %v5960
        %v5965 = vadd.f32 %v5897, %v5960
        %v5966 = vadd.f32 %v5898, %v5960
        %v5967 = vadd.f32 %v5899, %v5960
        %v5968 = vadd.f32 %v5900, %v5960
        %v5969 = vadd.f32 %v5901, %v5960
        %v5970 = vadd.f32 %v5902, %v5960
        %v5971 = vadd.f32 %v5903, %v5960
        %v5972 = vadd.f32 %v5904, %v5960
        %v5973 = vadd.f32 %v5905, %v5960
        %v5974 = vadd.f32 %v5906, %v5960
        %v5975 = vadd.f32 %v5907, %v5960
        %v5976 = vadd.f32 %v5908, %v5960
        %v5977 = vadd.f32 %v5909, %v5960
        %v5978 = vadd.f32 %v5910, %v5960
        %v5979 = vadd.f32 %v5911, %v5960
        %v5980 = vadd.f32 %v5912, %v5960
        %v5981 = vadd.f32 %v5913, %v5960
        %v5982 = vadd.f32 %v5914, %v5960
        %v5983 = vadd.f32 %v5915, %v5960
        %v5984 = vadd.f32 %v5916, %v5960
        %v5985 = vadd.f32 %v5917, %v5960
        %v5986 = vadd.f32 %v5918, %v5960
        %v5987 = vadd.f32 %v5919, %v5960
        %v5988 = vadd.f32 %v5920, %v5960
        %v5989 = vadd.f32 %v5921, %v5960
        %v5990 = vadd.f32 %v5922, %v5960
        %v5991 = vadd.f32 %v5923, %v5960
        %v5992 = vadd.f32 %v5924, %v5960
        %v5993 = vadd.f32 %v5925, %v5960
        %v5994 = vadd.f32 %v5926, %v5960
        %v5995 = vadd.f32 %v5927, %v5960
        %v5996 = vadd.f32 %v5928, %v5960
        %v5997 = vadd.f32 %v5929, %v5960
        %v5998 = vadd.f32 %v5930, %v5960
        %v5999 = vadd.f32 %v5931, %v5960
        %v6000 = vadd.f32 %v5932, %v5960
        %v6001 = vadd.f32 %v5933, %v5960
        %v6002 = vadd.f32 %v5934, %v5960
        %v6003 = vadd.f32 %v5935, %v5960
        %v6004 = vadd.f32 %v5936, %v5960
        %v6005 = vadd.f32 %v5937, %v5960
        %v6006 = vadd.f32 %v5938, %v5960
        %v6007 = vadd.f32 %v5939, %v5960
        %v6008 = vadd.f32 %v5940, %v5960
        %v6009 = vadd.f32 %v5941, %v5960
        %v6010 = vadd.f32 %v5942, %v5960
        %v6011 = vadd.f32 %v5943, %v5960
        %v6012 = vadd.f32 %v5944, %v5960
        %v6013 = vadd.f32 %v5945, %v5960
        %v6014 = vadd.f32 %v5946, %v5960
        %v6015 = vadd.f32 %v5947, %v5960
        %v6016 = vadd.f32 %v5948, %v5960
        %v6017 = vadd.f32 %v5949, %v5960
        %v6018 = vadd.f32 %v5950, %v5960
        %v6019 = vadd.f32 %v5951, %v5960
        %v6020 = vadd.f32 %v5952, %v5960
        %v6021 = vadd.f32 %v5953, %v5960
        %v6022 = vadd.f32 %v5954, %v5960
        %v6023 = vadd.f32 %v5955, %v5960
        %v6024 = vadd.f32 %v5956, %v5960
        %v6025 = vadd.f32 %v5957, %v5960
        %v6026 = vmax.f32 %v5962, 0.0
        %v6027 = vmax.f32 %v5963, 0.0
        %v6028 = vmax.f32 %v5964, 0.0
        %v6029 = vmax.f32 %v5965, 0.0
        %v6030 = vmax.f32 %v5966, 0.0
        %v6031 = vmax.f32 %v5967, 0.0
        %v6032 = vmax.f32 %v5968, 0.0
        %v6033 = vmax.f32 %v5969, 0.0
        %v6034 = vmax.f32 %v5970, 0.0
        %v6035 = vmax.f32 %v5971, 0.0
        %v6036 = vmax.f32 %v5972, 0.0
        %v6037 = vmax.f32 %v5973, 0.0
        %v6038 = vmax.f32 %v5974, 0.0
        %v6039 = vmax.f32 %v5975, 0.0
        %v6040 = vmax.f32 %v5976, 0.0
        %v6041 = vmax.f32 %v5977, 0.0
        %v6042 = vmax.f32 %v5978, 0.0
        %v6043 = vmax.f32 %v5979, 0.0
        %v6044 = vmax.f32 %v5980, 0.0
        %v6045 = vmax.f32 %v5981, 0.0
        %v6046 = vmax.f32 %v5982, 0.0
        %v6047 = vmax.f32 %v5983, 0.0
        %v6048 = vmax.f32 %v5984, 0.0
        %v6049 = vmax.f32 %v5985, 0.0
        %v6050 = vmax.f32 %v5986, 0.0
        %v6051 = vmax.f32 %v5987, 0.0
        %v6052 = vmax.f32 %v5988, 0.0
        %v6053 = vmax.f32 %v5989, 0.0
        %v6054 = vmax.f32 %v5990, 0.0
        %v6055 = vmax.f32 %v5991, 0.0
        %v6056 = vmax.f32 %v5992, 0.0
        %v6057 = vmax.f32 %v5993, 0.0
        %v6058 = vmax.f32 %v5994, 0.0
        %v6059 = vmax.f32 %v5995, 0.0
        %v6060 = vmax.f32 %v5996, 0.0
        %v6061 = vmax.f32 %v5997, 0.0
        %v6062 = vmax.f32 %v5998, 0.0
        %v6063 = vmax.f32 %v5999, 0.0
        %v6064 = vmax.f32 %v6000, 0.0
        %v6065 = vmax.f32 %v6001, 0.0
        %v6066 = vmax.f32 %v6002, 0.0
        %v6067 = vmax.f32 %v6003, 0.0
        %v6068 = vmax.f32 %v6004, 0.0
        %v6069 = vmax.f32 %v6005, 0.0
        %v6070 = vmax.f32 %v6006, 0.0
        %v6071 = vmax.f32 %v6007, 0.0
        %v6072 = vmax.f32 %v6008, 0.0
        %v6073 = vmax.f32 %v6009, 0.0
        %v6074 = vmax.f32 %v6010, 0.0
        %v6075 = vmax.f32 %v6011, 0.0
        %v6076 = vmax.f32 %v6012, 0.0
        %v6077 = vmax.f32 %v6013, 0.0
        %v6078 = vmax.f32 %v6014, 0.0
        %v6079 = vmax.f32 %v6015, 0.0
        %v6080 = vmax.f32 %v6016, 0.0
        %v6081 = vmax.f32 %v6017, 0.0
        %v6082 = vmax.f32 %v6018, 0.0
        %v6083 = vmax.f32 %v6019, 0.0
        %v6084 = vmax.f32 %v6020, 0.0
        %v6085 = vmax.f32 %v6021, 0.0
        %v6086 = vmax.f32 %v6022, 0.0
        %v6087 = vmax.f32 %v6023, 0.0
        %v6088 = vmax.f32 %v6024, 0.0
        %v6089 = vmax.f32 %v6025, 0.0
        %6090 = vst [vmem:[%s251] sm:$0xff] %v6026
        %6091 = vst [vmem:[%s251 + $0x8] sm:$0xff] %v6027
        %6092 = vst [vmem:[%s251 + $0x10] sm:$0xff] %v6028
        %6093 = vst [vmem:[%s251 + $0x18] sm:$0xff] %v6029
        %6094 = vst [vmem:[%s251 + $0x20] sm:$0xff] %v6030
        %6095 = vst [vmem:[%s251 + $0x28] sm:$0xff] %v6031
        %6096 = vst [vmem:[%s251 + $0x30] sm:$0xff] %v6032
        %6097 = vst [vmem:[%s251 + $0x38] sm:$0xff] %v6033
        %6098 = vst [vmem:[%s251 + $0x40] sm:$0xff] %v6034
        %6099 = vst [vmem:[%s251 + $0x48] sm:$0xff] %v6035
        %6100 = vst [vmem:[%s251 + $0x50] sm:$0xff] %v6036
        %6101 = vst [vmem:[%s251 + $0x58] sm:$0xff] %v6037
        %6102 = vst [vmem:[%s251 + $0x60] sm:$0xff] %v6038
        %6103 = vst [vmem:[%s251 + $0x68] sm:$0xff] %v6039
        %6104 = vst [vmem:[%s251 + $0x70] sm:$0xff] %v6040
        %6105 = vst [vmem:[%s251 + $0x78] sm:$0xff] %v6041
        %6106 = vst [vmem:[%s251 + $0x80] sm:$0xff] %v6042
        %6107 = vst [vmem:[%s251 + $0x88] sm:$0xff] %v6043
        %6108 = vst [vmem:[%s251 + $0x90] sm:$0xff] %v6044
        %6109 = vst [vmem:[%s251 + $0x98] sm:$0xff] %v6045
        %6110 = vst [vmem:[%s251 + $0xa0] sm:$0xff] %v6046
        %6111 = vst [vmem:[%s251 + $0xa8] sm:$0xff] %v6047
        %6112 = vst [vmem:[%s251 + $0xb0] sm:$0xff] %v6048
        %6113 = vst [vmem:[%s251 + $0xb8] sm:$0xff] %v6049
        %6114 = vst [vmem:[%s251 + $0xc0] sm:$0xff] %v6050
        %6115 = vst [vmem:[%s251 + $0xc8] sm:$0xff] %v6051
        %6116 = vst [vmem:[%s251 + $0xd0] sm:$0xff] %v6052
        %6117 = vst [vmem:[%s251 + $0xd8] sm:$0xff] %v6053
        %6118 = vst [vmem:[%s251 + $0xe0] sm:$0xff] %v6054
        %6119 = vst [vmem:[%s251 + $0xe8] sm:$0xff] %v6055
        %6120 = vst [vmem:[%s251 + $0xf0] sm:$0xff] %v6056
        %6121 = vst [vmem:[%s251 + $0xf8] sm:$0xff] %v6057
        %6122 = vst [vmem:[%s251 + $0x100] sm:$0xff] %v6058
        %6123 = vst [vmem:[%s251 + $0x108] sm:$0xff] %v6059
        %6124 = vst [vmem:[%s251 + $0x110] sm:$0xff] %v6060
        %6125 = vst [vmem:[%s251 + $0x118] sm:$0xff] %v6061
        %6126 = vst [vmem:[%s251 + $0x120] sm:$0xff] %v6062
        %6127 = vst [vmem:[%s251 + $0x128] sm:$0xff] %v6063
        %6128 = vst [vmem:[%s251 + $0x130] sm:$0xff] %v6064
        %6129 = vst [vmem:[%s251 + $0x138] sm:$0xff] %v6065
        %6130 = vst [vmem:[%s251 + $0x140] sm:$0xff] %v6066
        %6131 = vst [vmem:[%s251 + $0x148] sm:$0xff] %v6067
        %6132 = vst [vmem:[%s251 + $0x150] sm:$0xff] %v6068
        %6133 = vst [vmem:[%s251 + $0x158] sm:$0xff] %v6069
        %6134 = vst [vmem:[%s251 + $0x160] sm:$0xff] %v6070
        %6135 = vst [vmem:[%s251 + $0x168] sm:$0xff] %v6071
        %6136 = vst [vmem:[%s251 + $0x170] sm:$0xff] %v6072
        %6137 = vst [vmem:[%s251 + $0x178] sm:$0xff] %v6073
        %6138 = vst [vmem:[%s251 + $0x180] sm:$0xff] %v6074
        %6139 = vst [vmem:[%s251 + $0x188] sm:$0xff] %v6075
        %6140 = vst [vmem:[%s251 + $0x190] sm:$0xff] %v6076
        %6141 = vst [vmem:[%s251 + $0x198] sm:$0xff] %v6077
        %6142 = vst [vmem:[%s251 + $0x1a0] sm:$0xff] %v6078
        %6143 = vst [vmem:[%s251 + $0x1a8] sm:$0xff] %v6079
        %6144 = vst [vmem:[%s251 + $0x1b0] sm:$0xff] %v6080
        %6145 = vst [vmem:[%s251 + $0x1b8] sm:$0xff] %v6081
        %6146 = vst [vmem:[%s251 + $0x1c0] sm:$0xff] %v6082
        %6147 = vst [vmem:[%s251 + $0x1c8] sm:$0xff] %v6083
        %6148 = vst [vmem:[%s251 + $0x1d0] sm:$0xff] %v6084
        %6149 = vst [vmem:[%s251 + $0x1d8] sm:$0xff] %v6085
        %6150 = vst [vmem:[%s251 + $0x1e0] sm:$0xff] %v6086
        %6151 = vst [vmem:[%s251 + $0x1e8] sm:$0xff] %v6087
        %6152 = vst [vmem:[%s251 + $0x1f0] sm:$0xff] %v6088
        %6153 = vst [vmem:[%s251 + $0x1f8] sm:$0xff] %v6089
        %s6154 = sand.u32 %s132, 1
        %s6155 = scalar_lea.sflag [#allocation5], %s6154
        %s6156 = sand.u32 %s132, 1
        %s6157 = smul.addr %s6156, 512
        %s6158 = scalar_lea.vmem [#allocation8], %s6157
        // Predicated region
        $region41: #{tpu_custom_call.1} parent=31 // pred_check
          %p6159 = pneg %p142
        $region42: #{tpu_custom_call.1} parent=31 // pred_check_branch
          %6161 = sbr.rel (%p6159) target = $region44
        $region43: #{tpu_custom_call.1} parent=31 // pred_region
          %s6162 = smul.u32 16, %s28
          %6164 = vsyncadd %s6155, 0
          %s6165 = smul.addr %s6162, 4
          %s6166 = sadd.s32 %s26, %s6165
          %s6167 = smul.addr %s27, 64
          %s6168 = sadd.s32 %s6166, %s6167
          %s6169 = smul.addr %s6168, 8
          %s6170 = scalar_lea.hbm %s3, %s6169
          %s6171 = sshll.u32 %s6158, 4
          %s6172 = int_to_ptr.vmem [resolvable:$true] %s6171
          %s6173 = sshll.u32 %s6170, 4
          %s6174 = int_to_ptr.hbm [resolvable:$true] %s6173
          %6179 = dma.vmem_to_hbm [thread:$0]  %s6172, 8192, %s6174, %s6155, 128, 128, 8
        $region44: #{tpu_custom_call.1} parent=31 // pred_fallthru
          _
      $region32: #{tpu_custom_call.1} parent=5 // pred_fallthru
        _
      %p6180 = scmp.le.s32.totalorder 2, %s16
      // Predicated region
      $region45: #{tpu_custom_call.1} parent=5 // pred_check
        %p6181 = pneg %p6180
      $region46: #{tpu_custom_call.1} parent=5 // pred_check_branch
        %6183 = sbr.rel (%p6181) target = $region48
      $region47: #{tpu_custom_call.1} parent=5 // pred_region
        %s6184 = ssub.s32 %s16, 2
        // Predicated region
        $region49: #{tpu_custom_call.1} parent=47 // pred_check
          %p6185 = pneg %p148
        $region50: #{tpu_custom_call.1} parent=47 // pred_check_branch
          %6187 = sbr.rel (%p6185) target = $region52
        $region51: #{tpu_custom_call.1} parent=47 // pred_region
          %s6188 = sand.u32 %s133, 1
          %s6189 = scalar_lea.sflag [#allocation5], %s6188
          %s6190 = sand.u32 %s133, 1
          %s6191 = smul.addr %s6190, 512
          %s6192 = scalar_lea.vmem [#allocation8], %s6191
          %6194 = dma.done %s6189, 8192
        $region52: #{tpu_custom_call.1} parent=47 // pred_fallthru
          _
      $region48: #{tpu_custom_call.1} parent=5 // pred_fallthru
        _
    $region6: #{tpu_custom_call.1} parent=1 // loop_footer
      %s20 = sadd.s32 1, %s16
    $region7: #{tpu_custom_call.1} parent=1 // loop_footer_branch
      %15 = sbr.rel target = $region3
    $region8: #{tpu_custom_call.1} parent=1 // loop_exit
      _
    %6195 = vsyncpa [#allocation4], 1
    %s6196 = scalar_lea.sflag [#allocation4], 1
    %6197 = vsyncpa %s6196, 1
    %6198 = vsyncpa [#allocation7], 1
    %6199 = vsyncpa [#allocation5], 1
    %s6200 = scalar_lea.sflag [#allocation5], 1
    %6201 = vsyncpa %s6200, 1

</llo_original>
